<compile_context>
chip_gen: v6e
topology: v6e:2x2x1
jax: 0.10.0
libtpu: 0.0.40
codegen_flags: <defaults>
</compile_context>

<pallas_src>
import functools

import jax
import jax.numpy as jnp
from jax.experimental import pallas as pl
from jax.experimental.pallas import tpu as pltpu

NEG_SLOPE = 0.01   # F.leaky_relu default
EPS = 1e-5         # nn.GroupNorm default


def _conv_lrelu_stats_kernel(x0_ref, x1_ref, x2_ref, w_ref,
                             y_ref, sum_ref, sq_ref, *, H, W, C):
    """One (sample, depth-slice) step: 3x3x3 conv + leaky_relu + GN partial stats.

    x{0,1,2}_ref : (1, 1, H+2, W+2, C) bf16  padded depth slabs d, d+1, d+2
    w_ref        : (27, C, C)          bf16  per-tap (Cin, Cout) weights
    y_ref        : (1, 1, H*W, C)      f32   unnormalized activation (output)
    sum_ref/sq_ref : (1, 1, C)         f32   per-channel sum / sum-of-squares,
                                             accumulated across the depth axis.
    """
    d = pl.program_id(1)
    HW = H * W

    acc = jnp.zeros((HW, C), jnp.float32)
    slabs = (x0_ref[0, 0], x1_ref[0, 0], x2_ref[0, 0])      # (Hp, Wp, C) bf16

    for kd in range(3):
        # Upcast once per slab so the tap slicing/reshape stays on the
        # well-supported f32 layout path; MXU operands are cast back to bf16
        # (exact round-trip) right before the dot.
        slab = slabs[kd].astype(jnp.float32)                 # (Hp, Wp, C)
        for kh in range(3):
            for kw in range(3):
                patch = slab[kh:kh + H, kw:kw + W, :].reshape(HW, C)
                acc = acc + jnp.dot(patch.astype(jnp.bfloat16),
                                    w_ref[kd * 9 + kh * 3 + kw],
                                    preferred_element_type=jnp.float32)

    # leaky_relu (VPU)
    y = jnp.where(acc > 0, acc, NEG_SLOPE * acc)
    y_ref[0, 0] = y.astype(y_ref.dtype)

    # GroupNorm partial statistics, accumulated across the "arbitrary" depth
    # axis into block-resident outputs (reset at the first depth slice).
    @pl.when(d == 0)
    def _():
        sum_ref[...] = jnp.zeros_like(sum_ref)
        sq_ref[...] = jnp.zeros_like(sq_ref)

    sum_ref[...] += jnp.sum(y, axis=0, keepdims=True).reshape(1, 1, C)
    sq_ref[...] += jnp.sum(y * y, axis=0, keepdims=True).reshape(1, 1, C)


def _scale_bias_kernel(y_ref, s_ref, b_ref, o_ref):
    """GroupNorm epilogue folded to a single per-channel scale/bias (2 VPU ops)."""
    o_ref[0, 0] = (y_ref[0, 0] * s_ref[0] + b_ref[0]).astype(o_ref.dtype)


@functools.partial(jax.jit, static_argnames=("groups",))
def residual_inner_forward(x, conv_w, gamma, beta, *, groups):
    """x: (N, C, D, H, W) f32;  conv_w: (C, C, 3, 3, 3);  gamma/beta: (C,) or None."""
    N, C, D, H, W = x.shape
    HW = H * W
    Dp, Hp, Wp = D + 2, H + 2, W + 2

    # ---- glue: channels-last + halo pad (no im2col), bf16 for HBM/MXU -------
    xp = jnp.transpose(x, (0, 2, 3, 4, 1))                      # (N, D, H, W, C)
    xp = jnp.pad(xp, ((0, 0), (1, 1), (1, 1), (1, 1), (0, 0)))
    xp = xp.astype(jnp.bfloat16)                                # (N, Dp, Hp, Wp, C)

    # conv weight (Cout, Cin, kd, kh, kw) -> (27, Cin, Cout), tap-major, bf16
    w = jnp.transpose(conv_w, (2, 3, 4, 1, 0)).reshape(27, C, C).astype(jnp.bfloat16)

    def slab_spec(kd):
        # Three overlapping views of the padded input: depth elements d+kd.
        return pl.BlockSpec((1, 1, Hp, Wp, C),
                            lambda n, d: (n, d + kd, 0, 0, 0))

    kernel = functools.partial(_conv_lrelu_stats_kernel, H=H, W=W, C=C)

    flops = 2 * N * D * HW * 27 * C * C
    bytes_accessed = (3 * xp.size * 2 + w.size * 2               # bf16 reads
                      + N * D * HW * C * 4 + 2 * N * C * 4)      # f32 writes

    y, ch_sum, ch_sq = pl.pallas_call(
        kernel,
        out_shape=(
            jax.ShapeDtypeStruct((N, D, HW, C), jnp.float32),
            jax.ShapeDtypeStruct((N, 1, C), jnp.float32),
            jax.ShapeDtypeStruct((N, 1, C), jnp.float32),
        ),
        grid_spec=pltpu.PrefetchScalarGridSpec(
            num_scalar_prefetch=0,
            grid=(N, D),
            in_specs=[
                slab_spec(0), slab_spec(1), slab_spec(2),
                pl.BlockSpec((27, C, C), lambda n, d: (0, 0, 0)),
            ],
            out_specs=(
                pl.BlockSpec((1, 1, HW, C), lambda n, d: (n, d, 0, 0)),
                pl.BlockSpec((1, 1, C), lambda n, d: (n, 0, 0)),
                pl.BlockSpec((1, 1, C), lambda n, d: (n, 0, 0)),
            ),
        ),
        compiler_params=pltpu.CompilerParams(
            dimension_semantics=("parallel", "arbitrary"),
            vmem_limit_bytes=48 * 1024 * 1024),
        cost_estimate=pl.CostEstimate(
            flops=flops, transcendentals=0, bytes_accessed=bytes_accessed),
    )(xp, xp, xp, w)

    if groups is None:
        out = y
    else:
        # ---- tiny per-(sample, group) reduction + affine fold in plain JAX ----
        G = groups
        cpg = C // G
        n_per_group = float(D * HW * cpg)
        gsum = ch_sum.reshape(N, G, cpg).sum(-1)                 # (N, G)
        gsq = ch_sq.reshape(N, G, cpg).sum(-1)
        mean_g = gsum / n_per_group
        var_g = jnp.maximum(gsq / n_per_group - mean_g * mean_g, 0.0)  # clamp
        inv_g = jax.lax.rsqrt(var_g + EPS)
        inv_c = jnp.repeat(inv_g, cpg, axis=1)                   # (N, C)
        mean_c = jnp.repeat(mean_g, cpg, axis=1)
        scale_c = (inv_c * gamma[None, :]).reshape(N, 1, C).astype(jnp.float32)
        bias_c = (beta[None, :] - mean_c * inv_c * gamma[None, :]
                  ).reshape(N, 1, C).astype(jnp.float32)

        out = pl.pallas_call(
            _scale_bias_kernel,
            out_shape=jax.ShapeDtypeStruct((N, D, HW, C), x.dtype),
            grid_spec=pltpu.PrefetchScalarGridSpec(
                num_scalar_prefetch=0,
                grid=(N, D),
                in_specs=[
                    pl.BlockSpec((1, 1, HW, C), lambda n, d: (n, d, 0, 0)),
                    pl.BlockSpec((1, 1, C), lambda n, d: (n, 0, 0)),
                    pl.BlockSpec((1, 1, C), lambda n, d: (n, 0, 0)),
                ],
                out_specs=pl.BlockSpec((1, 1, HW, C), lambda n, d: (n, d, 0, 0)),
            ),
            compiler_params=pltpu.CompilerParams(
                dimension_semantics=("parallel", "parallel")),
        )(y, scale_c, bias_c)

    return out.reshape(N, D, H, W, C).transpose(0, 4, 1, 2, 3).astype(x.dtype)


if __name__ == "__main__":
    key = jax.random.PRNGKey(0)
    N, C, D, H, W = 2, 8, 8, 8, 8
    groups = 4

    k1, k2, k3, k4 = jax.random.split(key, 4)
    x = jax.random.normal(k1, (N, C, D, H, W), jnp.float32)
    # kaiming-style deterministic init for Conv3d(C, C, 3, padding=1, bias=False)
    fan_in = C * 27
    conv_w = jax.random.normal(k2, (C, C, 3, 3, 3), jnp.float32) * jnp.sqrt(2.0 / fan_in)
    gamma = 1.0 + 0.1 * jax.random.normal(k3, (C,), jnp.float32)
    beta = 0.1 * jax.random.normal(k4, (C,), jnp.float32)

    out = jax.block_until_ready(
        residual_inner_forward(x, conv_w, gamma, beta, groups=groups))
    out_nogn = jax.block_until_ready(
        residual_inner_forward(x, conv_w, None, None, groups=None))

    # ---- pure-JAX f32 reference ----
    conv = jax.lax.conv_general_dilated(
        x, conv_w, window_strides=(1, 1, 1), padding=((1, 1),) * 3,
        dimension_numbers=("NCDHW", "OIDHW", "NCDHW"))
    yr = jnp.where(conv > 0, conv, NEG_SLOPE * conv)
    yg = yr.reshape(N, groups, C // groups, D, H, W)
    mean = yg.mean(axis=(2, 3, 4, 5), keepdims=True)
    var = ((yg - mean) ** 2).mean(axis=(2, 3, 4, 5), keepdims=True)
    yn = ((yg - mean) / jnp.sqrt(var + EPS)).reshape(N, C, D, H, W)
    ref = yn * gamma.reshape(1, C, 1, 1, 1) + beta.reshape(1, C, 1, 1, 1)

    # bf16 MXU operands -> tolerance sized for bf16 rounding of the conv.
    err = float(jnp.max(jnp.abs(out - ref)))
    err_nogn = float(jnp.max(jnp.abs(out_nogn - yr)))
    assert err < 5e-2, f"GN path max abs err {err}"
    assert err_nogn < 5e-2, f"no-GN path max abs err {err_nogn}"
    print("KERNEL_OK")
</pallas_src>

<mosaic_0001>
module attributes {stable_mosaic.version = 11 : i64} {
  func.func @_conv_lrelu_stats_kernel(%arg0: i32, %arg1: i32, %arg2: memref<1x1x10x10x8xbf16, #tpu.memory_space<vmem>>, %arg3: memref<1x1x10x10x8xbf16, #tpu.memory_space<vmem>>, %arg4: memref<1x1x10x10x8xbf16, #tpu.memory_space<vmem>>, %arg5: memref<27x8x8xbf16, #tpu.memory_space<vmem>>, %arg6: memref<1x1x64x8xf32, #tpu.memory_space<vmem>>, %arg7: memref<1x1x8xf32, #tpu.memory_space<vmem>>, %arg8: memref<1x1x8xf32, #tpu.memory_space<vmem>>) attributes {dimension_semantics = [#tpu.dimension_semantics<parallel>, #tpu.dimension_semantics<arbitrary>], iteration_bounds = array<i64: 2, 8>, scalar_prefetch = 0 : i64, scratch_operands = 0 : i64, tpu.core_type = #tpu.core_type<tc>, window_params = [{transform_indices = @transform_0, window_bounds = array<i64: 1, 1, 10, 10, 8>}, {transform_indices = @transform_1, window_bounds = array<i64: 1, 1, 10, 10, 8>}, {transform_indices = @transform_2, window_bounds = array<i64: 1, 1, 10, 10, 8>}, {pipeline_mode = #tpu.pipeline_mode<synchronous>, transform_indices = @transform_3, window_bounds = array<i64: 27, 8, 8>}, {transform_indices = @transform_4, window_bounds = array<i64: 1, 1, 64, 8>}, {transform_indices = @transform_5, window_bounds = array<i64: 1, 1, 8>}, {transform_indices = @transform_6, window_bounds = array<i64: 1, 1, 8>}]} {
    %cst = arith.constant 0.000000e+00 : f32
    %0 = vector.broadcast %cst : f32 to vector<64x8xf32>
    %c0 = arith.constant 0 : index
    %c0_0 = arith.constant 0 : index
    %c0_1 = arith.constant 0 : index
    %c0_2 = arith.constant 0 : index
    %c0_3 = arith.constant 0 : index
    %1 = vector.load %arg2[%c0, %c0_0, %c0_1, %c0_2, %c0_3] : memref<1x1x10x10x8xbf16, #tpu.memory_space<vmem>>, vector<1x1x10x10x8xbf16>
    %2 = vector.shape_cast %1 : vector<1x1x10x10x8xbf16> to vector<10x10x8xbf16>
    %c0_4 = arith.constant 0 : index
    %c0_5 = arith.constant 0 : index
    %c0_6 = arith.constant 0 : index
    %c0_7 = arith.constant 0 : index
    %c0_8 = arith.constant 0 : index
    %3 = vector.load %arg3[%c0_4, %c0_5, %c0_6, %c0_7, %c0_8] : memref<1x1x10x10x8xbf16, #tpu.memory_space<vmem>>, vector<1x1x10x10x8xbf16>
    %4 = vector.shape_cast %3 : vector<1x1x10x10x8xbf16> to vector<10x10x8xbf16>
    %c0_9 = arith.constant 0 : index
    %c0_10 = arith.constant 0 : index
    %c0_11 = arith.constant 0 : index
    %c0_12 = arith.constant 0 : index
    %c0_13 = arith.constant 0 : index
    %5 = vector.load %arg4[%c0_9, %c0_10, %c0_11, %c0_12, %c0_13] : memref<1x1x10x10x8xbf16, #tpu.memory_space<vmem>>, vector<1x1x10x10x8xbf16>
    %6 = vector.shape_cast %5 : vector<1x1x10x10x8xbf16> to vector<10x10x8xbf16>
    %7 = arith.extf %2 : vector<10x10x8xbf16> to vector<10x10x8xf32>
    %8 = vector.extract_strided_slice %7 {offsets = [0, 0, 0], sizes = [8, 8, 8], strides = [1, 1, 1]} : vector<10x10x8xf32> to vector<8x8x8xf32>
    %9 = vector.shape_cast %8 : vector<8x8x8xf32> to vector<64x8xf32>
    %10 = arith.truncf %9 : vector<64x8xf32> to vector<64x8xbf16>
    %c0_14 = arith.constant 0 : index
    %c0_15 = arith.constant 0 : index
    %c0_16 = arith.constant 0 : index
    %11 = vector.load %arg5[%c0_14, %c0_15, %c0_16] : memref<27x8x8xbf16, #tpu.memory_space<vmem>>, vector<1x8x8xbf16>
    %12 = vector.shape_cast %11 : vector<1x8x8xbf16> to vector<8x8xbf16>
    %cst_17 = arith.constant dense<0.000000e+00> : vector<64x8xf32>
    %13 = tpu.matmul %10, %12, %cst_17 {dimension_numbers = #tpu.dot_dimension_numbers<[1], [0], [0], [1], [0, 0, 1, 1], [], []>} : vector<64x8xbf16>, vector<8x8xbf16>, vector<64x8xf32> -> vector<64x8xf32>
    %14 = arith.addf %0, %13 : vector<64x8xf32>
    %15 = vector.extract_strided_slice %7 {offsets = [0, 1, 0], sizes = [8, 8, 8], strides = [1, 1, 1]} : vector<10x10x8xf32> to vector<8x8x8xf32>
    %16 = vector.shape_cast %15 : vector<8x8x8xf32> to vector<64x8xf32>
    %17 = arith.truncf %16 : vector<64x8xf32> to vector<64x8xbf16>
    %c1 = arith.constant 1 : index
    %c0_18 = arith.constant 0 : index
    %c0_19 = arith.constant 0 : index
    %18 = vector.load %arg5[%c1, %c0_18, %c0_19] : memref<27x8x8xbf16, #tpu.memory_space<vmem>>, vector<1x8x8xbf16>
    %19 = vector.shape_cast %18 : vector<1x8x8xbf16> to vector<8x8xbf16>
    %cst_20 = arith.constant dense<0.000000e+00> : vector<64x8xf32>
    %20 = tpu.matmul %17, %19, %cst_20 {dimension_numbers = #tpu.dot_dimension_numbers<[1], [0], [0], [1], [0, 0, 1, 1], [], []>} : vector<64x8xbf16>, vector<8x8xbf16>, vector<64x8xf32> -> vector<64x8xf32>
    %21 = arith.addf %14, %20 : vector<64x8xf32>
    %22 = vector.extract_strided_slice %7 {offsets = [0, 2, 0], sizes = [8, 8, 8], strides = [1, 1, 1]} : vector<10x10x8xf32> to vector<8x8x8xf32>
    %23 = vector.shape_cast %22 : vector<8x8x8xf32> to vector<64x8xf32>
    %24 = arith.truncf %23 : vector<64x8xf32> to vector<64x8xbf16>
    %c2 = arith.constant 2 : index
    %c0_21 = arith.constant 0 : index
    %c0_22 = arith.constant 0 : index
    %25 = vector.load %arg5[%c2, %c0_21, %c0_22] : memref<27x8x8xbf16, #tpu.memory_space<vmem>>, vector<1x8x8xbf16>
    %26 = vector.shape_cast %25 : vector<1x8x8xbf16> to vector<8x8xbf16>
    %cst_23 = arith.constant dense<0.000000e+00> : vector<64x8xf32>
    %27 = tpu.matmul %24, %26, %cst_23 {dimension_numbers = #tpu.dot_dimension_numbers<[1], [0], [0], [1], [0, 0, 1, 1], [], []>} : vector<64x8xbf16>, vector<8x8xbf16>, vector<64x8xf32> -> vector<64x8xf32>
    %28 = arith.addf %21, %27 : vector<64x8xf32>
    %29 = vector.extract_strided_slice %7 {offsets = [1, 0, 0], sizes = [8, 8, 8], strides = [1, 1, 1]} : vector<10x10x8xf32> to vector<8x8x8xf32>
    %30 = vector.shape_cast %29 : vector<8x8x8xf32> to vector<64x8xf32>
    %31 = arith.truncf %30 : vector<64x8xf32> to vector<64x8xbf16>
    %c3 = arith.constant 3 : index
    %c0_24 = arith.constant 0 : index
    %c0_25 = arith.constant 0 : index
    %32 = vector.load %arg5[%c3, %c0_24, %c0_25] : memref<27x8x8xbf16, #tpu.memory_space<vmem>>, vector<1x8x8xbf16>
    %33 = vector.shape_cast %32 : vector<1x8x8xbf16> to vector<8x8xbf16>
    %cst_26 = arith.constant dense<0.000000e+00> : vector<64x8xf32>
    %34 = tpu.matmul %31, %33, %cst_26 {dimension_numbers = #tpu.dot_dimension_numbers<[1], [0], [0], [1], [0, 0, 1, 1], [], []>} : vector<64x8xbf16>, vector<8x8xbf16>, vector<64x8xf32> -> vector<64x8xf32>
    %35 = arith.addf %28, %34 : vector<64x8xf32>
    %36 = vector.extract_strided_slice %7 {offsets = [1, 1, 0], sizes = [8, 8, 8], strides = [1, 1, 1]} : vector<10x10x8xf32> to vector<8x8x8xf32>
    %37 = vector.shape_cast %36 : vector<8x8x8xf32> to vector<64x8xf32>
    %38 = arith.truncf %37 : vector<64x8xf32> to vector<64x8xbf16>
    %c4 = arith.constant 4 : index
    %c0_27 = arith.constant 0 : index
    %c0_28 = arith.constant 0 : index
    %39 = vector.load %arg5[%c4, %c0_27, %c0_28] : memref<27x8x8xbf16, #tpu.memory_space<vmem>>, vector<1x8x8xbf16>
    %40 = vector.shape_cast %39 : vector<1x8x8xbf16> to vector<8x8xbf16>
    %cst_29 = arith.constant dense<0.000000e+00> : vector<64x8xf32>
    %41 = tpu.matmul %38, %40, %cst_29 {dimension_numbers = #tpu.dot_dimension_numbers<[1], [0], [0], [1], [0, 0, 1, 1], [], []>} : vector<64x8xbf16>, vector<8x8xbf16>, vector<64x8xf32> -> vector<64x8xf32>
    %42 = arith.addf %35, %41 : vector<64x8xf32>
    %43 = vector.extract_strided_slice %7 {offsets = [1, 2, 0], sizes = [8, 8, 8], strides = [1, 1, 1]} : vector<10x10x8xf32> to vector<8x8x8xf32>
    %44 = vector.shape_cast %43 : vector<8x8x8xf32> to vector<64x8xf32>
    %45 = arith.truncf %44 : vector<64x8xf32> to vector<64x8xbf16>
    %c5 = arith.constant 5 : index
    %c0_30 = arith.constant 0 : index
    %c0_31 = arith.constant 0 : index
    %46 = vector.load %arg5[%c5, %c0_30, %c0_31] : memref<27x8x8xbf16, #tpu.memory_space<vmem>>, vector<1x8x8xbf16>
    %47 = vector.shape_cast %46 : vector<1x8x8xbf16> to vector<8x8xbf16>
    %cst_32 = arith.constant dense<0.000000e+00> : vector<64x8xf32>
    %48 = tpu.matmul %45, %47, %cst_32 {dimension_numbers = #tpu.dot_dimension_numbers<[1], [0], [0], [1], [0, 0, 1, 1], [], []>} : vector<64x8xbf16>, vector<8x8xbf16>, vector<64x8xf32> -> vector<64x8xf32>
    %49 = arith.addf %42, %48 : vector<64x8xf32>
    %50 = vector.extract_strided_slice %7 {offsets = [2, 0, 0], sizes = [8, 8, 8], strides = [1, 1, 1]} : vector<10x10x8xf32> to vector<8x8x8xf32>
    %51 = vector.shape_cast %50 : vector<8x8x8xf32> to vector<64x8xf32>
    %52 = arith.truncf %51 : vector<64x8xf32> to vector<64x8xbf16>
    %c6 = arith.constant 6 : index
    %c0_33 = arith.constant 0 : index
    %c0_34 = arith.constant 0 : index
    %53 = vector.load %arg5[%c6, %c0_33, %c0_34] : memref<27x8x8xbf16, #tpu.memory_space<vmem>>, vector<1x8x8xbf16>
    %54 = vector.shape_cast %53 : vector<1x8x8xbf16> to vector<8x8xbf16>
    %cst_35 = arith.constant dense<0.000000e+00> : vector<64x8xf32>
    %55 = tpu.matmul %52, %54, %cst_35 {dimension_numbers = #tpu.dot_dimension_numbers<[1], [0], [0], [1], [0, 0, 1, 1], [], []>} : vector<64x8xbf16>, vector<8x8xbf16>, vector<64x8xf32> -> vector<64x8xf32>
    %56 = arith.addf %49, %55 : vector<64x8xf32>
    %57 = vector.extract_strided_slice %7 {offsets = [2, 1, 0], sizes = [8, 8, 8], strides = [1, 1, 1]} : vector<10x10x8xf32> to vector<8x8x8xf32>
    %58 = vector.shape_cast %57 : vector<8x8x8xf32> to vector<64x8xf32>
    %59 = arith.truncf %58 : vector<64x8xf32> to vector<64x8xbf16>
    %c7 = arith.constant 7 : index
    %c0_36 = arith.constant 0 : index
    %c0_37 = arith.constant 0 : index
    %60 = vector.load %arg5[%c7, %c0_36, %c0_37] : memref<27x8x8xbf16, #tpu.memory_space<vmem>>, vector<1x8x8xbf16>
    %61 = vector.shape_cast %60 : vector<1x8x8xbf16> to vector<8x8xbf16>
    %cst_38 = arith.constant dense<0.000000e+00> : vector<64x8xf32>
    %62 = tpu.matmul %59, %61, %cst_38 {dimension_numbers = #tpu.dot_dimension_numbers<[1], [0], [0], [1], [0, 0, 1, 1], [], []>} : vector<64x8xbf16>, vector<8x8xbf16>, vector<64x8xf32> -> vector<64x8xf32>
    %63 = arith.addf %56, %62 : vector<64x8xf32>
    %64 = vector.extract_strided_slice %7 {offsets = [2, 2, 0], sizes = [8, 8, 8], strides = [1, 1, 1]} : vector<10x10x8xf32> to vector<8x8x8xf32>
    %65 = vector.shape_cast %64 : vector<8x8x8xf32> to vector<64x8xf32>
    %66 = arith.truncf %65 : vector<64x8xf32> to vector<64x8xbf16>
    %c8 = arith.constant 8 : index
    %c0_39 = arith.constant 0 : index
    %c0_40 = arith.constant 0 : index
    %67 = vector.load %arg5[%c8, %c0_39, %c0_40] : memref<27x8x8xbf16, #tpu.memory_space<vmem>>, vector<1x8x8xbf16>
    %68 = vector.shape_cast %67 : vector<1x8x8xbf16> to vector<8x8xbf16>
    %cst_41 = arith.constant dense<0.000000e+00> : vector<64x8xf32>
    %69 = tpu.matmul %66, %68, %cst_41 {dimension_numbers = #tpu.dot_dimension_numbers<[1], [0], [0], [1], [0, 0, 1, 1], [], []>} : vector<64x8xbf16>, vector<8x8xbf16>, vector<64x8xf32> -> vector<64x8xf32>
    %70 = arith.addf %63, %69 : vector<64x8xf32>
    %71 = arith.extf %4 : vector<10x10x8xbf16> to vector<10x10x8xf32>
    %72 = vector.extract_strided_slice %71 {offsets = [0, 0, 0], sizes = [8, 8, 8], strides = [1, 1, 1]} : vector<10x10x8xf32> to vector<8x8x8xf32>
    %73 = vector.shape_cast %72 : vector<8x8x8xf32> to vector<64x8xf32>
    %74 = arith.truncf %73 : vector<64x8xf32> to vector<64x8xbf16>
    %c9 = arith.constant 9 : index
    %c0_42 = arith.constant 0 : index
    %c0_43 = arith.constant 0 : index
    %75 = vector.load %arg5[%c9, %c0_42, %c0_43] : memref<27x8x8xbf16, #tpu.memory_space<vmem>>, vector<1x8x8xbf16>
    %76 = vector.shape_cast %75 : vector<1x8x8xbf16> to vector<8x8xbf16>
    %cst_44 = arith.constant dense<0.000000e+00> : vector<64x8xf32>
    %77 = tpu.matmul %74, %76, %cst_44 {dimension_numbers = #tpu.dot_dimension_numbers<[1], [0], [0], [1], [0, 0, 1, 1], [], []>} : vector<64x8xbf16>, vector<8x8xbf16>, vector<64x8xf32> -> vector<64x8xf32>
    %78 = arith.addf %70, %77 : vector<64x8xf32>
    %79 = vector.extract_strided_slice %71 {offsets = [0, 1, 0], sizes = [8, 8, 8], strides = [1, 1, 1]} : vector<10x10x8xf32> to vector<8x8x8xf32>
    %80 = vector.shape_cast %79 : vector<8x8x8xf32> to vector<64x8xf32>
    %81 = arith.truncf %80 : vector<64x8xf32> to vector<64x8xbf16>
    %c10 = arith.constant 10 : index
    %c0_45 = arith.constant 0 : index
    %c0_46 = arith.constant 0 : index
    %82 = vector.load %arg5[%c10, %c0_45, %c0_46] : memref<27x8x8xbf16, #tpu.memory_space<vmem>>, vector<1x8x8xbf16>
    %83 = vector.shape_cast %82 : vector<1x8x8xbf16> to vector<8x8xbf16>
    %cst_47 = arith.constant dense<0.000000e+00> : vector<64x8xf32>
    %84 = tpu.matmul %81, %83, %cst_47 {dimension_numbers = #tpu.dot_dimension_numbers<[1], [0], [0], [1], [0, 0, 1, 1], [], []>} : vector<64x8xbf16>, vector<8x8xbf16>, vector<64x8xf32> -> vector<64x8xf32>
    %85 = arith.addf %78, %84 : vector<64x8xf32>
    %86 = vector.extract_strided_slice %71 {offsets = [0, 2, 0], sizes = [8, 8, 8], strides = [1, 1, 1]} : vector<10x10x8xf32> to vector<8x8x8xf32>
    %87 = vector.shape_cast %86 : vector<8x8x8xf32> to vector<64x8xf32>
    %88 = arith.truncf %87 : vector<64x8xf32> to vector<64x8xbf16>
    %c11 = arith.constant 11 : index
    %c0_48 = arith.constant 0 : index
    %c0_49 = arith.constant 0 : index
    %89 = vector.load %arg5[%c11, %c0_48, %c0_49] : memref<27x8x8xbf16, #tpu.memory_space<vmem>>, vector<1x8x8xbf16>
    %90 = vector.shape_cast %89 : vector<1x8x8xbf16> to vector<8x8xbf16>
    %cst_50 = arith.constant dense<0.000000e+00> : vector<64x8xf32>
    %91 = tpu.matmul %88, %90, %cst_50 {dimension_numbers = #tpu.dot_dimension_numbers<[1], [0], [0], [1], [0, 0, 1, 1], [], []>} : vector<64x8xbf16>, vector<8x8xbf16>, vector<64x8xf32> -> vector<64x8xf32>
    %92 = arith.addf %85, %91 : vector<64x8xf32>
    %93 = vector.extract_strided_slice %71 {offsets = [1, 0, 0], sizes = [8, 8, 8], strides = [1, 1, 1]} : vector<10x10x8xf32> to vector<8x8x8xf32>
    %94 = vector.shape_cast %93 : vector<8x8x8xf32> to vector<64x8xf32>
    %95 = arith.truncf %94 : vector<64x8xf32> to vector<64x8xbf16>
    %c12 = arith.constant 12 : index
    %c0_51 = arith.constant 0 : index
    %c0_52 = arith.constant 0 : index
    %96 = vector.load %arg5[%c12, %c0_51, %c0_52] : memref<27x8x8xbf16, #tpu.memory_space<vmem>>, vector<1x8x8xbf16>
    %97 = vector.shape_cast %96 : vector<1x8x8xbf16> to vector<8x8xbf16>
    %cst_53 = arith.constant dense<0.000000e+00> : vector<64x8xf32>
    %98 = tpu.matmul %95, %97, %cst_53 {dimension_numbers = #tpu.dot_dimension_numbers<[1], [0], [0], [1], [0, 0, 1, 1], [], []>} : vector<64x8xbf16>, vector<8x8xbf16>, vector<64x8xf32> -> vector<64x8xf32>
    %99 = arith.addf %92, %98 : vector<64x8xf32>
    %100 = vector.extract_strided_slice %71 {offsets = [1, 1, 0], sizes = [8, 8, 8], strides = [1, 1, 1]} : vector<10x10x8xf32> to vector<8x8x8xf32>
    %101 = vector.shape_cast %100 : vector<8x8x8xf32> to vector<64x8xf32>
    %102 = arith.truncf %101 : vector<64x8xf32> to vector<64x8xbf16>
    %c13 = arith.constant 13 : index
    %c0_54 = arith.constant 0 : index
    %c0_55 = arith.constant 0 : index
    %103 = vector.load %arg5[%c13, %c0_54, %c0_55] : memref<27x8x8xbf16, #tpu.memory_space<vmem>>, vector<1x8x8xbf16>
    %104 = vector.shape_cast %103 : vector<1x8x8xbf16> to vector<8x8xbf16>
    %cst_56 = arith.constant dense<0.000000e+00> : vector<64x8xf32>
    %105 = tpu.matmul %102, %104, %cst_56 {dimension_numbers = #tpu.dot_dimension_numbers<[1], [0], [0], [1], [0, 0, 1, 1], [], []>} : vector<64x8xbf16>, vector<8x8xbf16>, vector<64x8xf32> -> vector<64x8xf32>
    %106 = arith.addf %99, %105 : vector<64x8xf32>
    %107 = vector.extract_strided_slice %71 {offsets = [1, 2, 0], sizes = [8, 8, 8], strides = [1, 1, 1]} : vector<10x10x8xf32> to vector<8x8x8xf32>
    %108 = vector.shape_cast %107 : vector<8x8x8xf32> to vector<64x8xf32>
    %109 = arith.truncf %108 : vector<64x8xf32> to vector<64x8xbf16>
    %c14 = arith.constant 14 : index
    %c0_57 = arith.constant 0 : index
    %c0_58 = arith.constant 0 : index
    %110 = vector.load %arg5[%c14, %c0_57, %c0_58] : memref<27x8x8xbf16, #tpu.memory_space<vmem>>, vector<1x8x8xbf16>
    %111 = vector.shape_cast %110 : vector<1x8x8xbf16> to vector<8x8xbf16>
    %cst_59 = arith.constant dense<0.000000e+00> : vector<64x8xf32>
    %112 = tpu.matmul %109, %111, %cst_59 {dimension_numbers = #tpu.dot_dimension_numbers<[1], [0], [0], [1], [0, 0, 1, 1], [], []>} : vector<64x8xbf16>, vector<8x8xbf16>, vector<64x8xf32> -> vector<64x8xf32>
    %113 = arith.addf %106, %112 : vector<64x8xf32>
    %114 = vector.extract_strided_slice %71 {offsets = [2, 0, 0], sizes = [8, 8, 8], strides = [1, 1, 1]} : vector<10x10x8xf32> to vector<8x8x8xf32>
    %115 = vector.shape_cast %114 : vector<8x8x8xf32> to vector<64x8xf32>
    %116 = arith.truncf %115 : vector<64x8xf32> to vector<64x8xbf16>
    %c15 = arith.constant 15 : index
    %c0_60 = arith.constant 0 : index
    %c0_61 = arith.constant 0 : index
    %117 = vector.load %arg5[%c15, %c0_60, %c0_61] : memref<27x8x8xbf16, #tpu.memory_space<vmem>>, vector<1x8x8xbf16>
    %118 = vector.shape_cast %117 : vector<1x8x8xbf16> to vector<8x8xbf16>
    %cst_62 = arith.constant dense<0.000000e+00> : vector<64x8xf32>
    %119 = tpu.matmul %116, %118, %cst_62 {dimension_numbers = #tpu.dot_dimension_numbers<[1], [0], [0], [1], [0, 0, 1, 1], [], []>} : vector<64x8xbf16>, vector<8x8xbf16>, vector<64x8xf32> -> vector<64x8xf32>
    %120 = arith.addf %113, %119 : vector<64x8xf32>
    %121 = vector.extract_strided_slice %71 {offsets = [2, 1, 0], sizes = [8, 8, 8], strides = [1, 1, 1]} : vector<10x10x8xf32> to vector<8x8x8xf32>
    %122 = vector.shape_cast %121 : vector<8x8x8xf32> to vector<64x8xf32>
    %123 = arith.truncf %122 : vector<64x8xf32> to vector<64x8xbf16>
    %c16 = arith.constant 16 : index
    %c0_63 = arith.constant 0 : index
    %c0_64 = arith.constant 0 : index
    %124 = vector.load %arg5[%c16, %c0_63, %c0_64] : memref<27x8x8xbf16, #tpu.memory_space<vmem>>, vector<1x8x8xbf16>
    %125 = vector.shape_cast %124 : vector<1x8x8xbf16> to vector<8x8xbf16>
    %cst_65 = arith.constant dense<0.000000e+00> : vector<64x8xf32>
    %126 = tpu.matmul %123, %125, %cst_65 {dimension_numbers = #tpu.dot_dimension_numbers<[1], [0], [0], [1], [0, 0, 1, 1], [], []>} : vector<64x8xbf16>, vector<8x8xbf16>, vector<64x8xf32> -> vector<64x8xf32>
    %127 = arith.addf %120, %126 : vector<64x8xf32>
    %128 = vector.extract_strided_slice %71 {offsets = [2, 2, 0], sizes = [8, 8, 8], strides = [1, 1, 1]} : vector<10x10x8xf32> to vector<8x8x8xf32>
    %129 = vector.shape_cast %128 : vector<8x8x8xf32> to vector<64x8xf32>
    %130 = arith.truncf %129 : vector<64x8xf32> to vector<64x8xbf16>
    %c17 = arith.constant 17 : index
    %c0_66 = arith.constant 0 : index
    %c0_67 = arith.constant 0 : index
    %131 = vector.load %arg5[%c17, %c0_66, %c0_67] : memref<27x8x8xbf16, #tpu.memory_space<vmem>>, vector<1x8x8xbf16>
    %132 = vector.shape_cast %131 : vector<1x8x8xbf16> to vector<8x8xbf16>
    %cst_68 = arith.constant dense<0.000000e+00> : vector<64x8xf32>
    %133 = tpu.matmul %130, %132, %cst_68 {dimension_numbers = #tpu.dot_dimension_numbers<[1], [0], [0], [1], [0, 0, 1, 1], [], []>} : vector<64x8xbf16>, vector<8x8xbf16>, vector<64x8xf32> -> vector<64x8xf32>
    %134 = arith.addf %127, %133 : vector<64x8xf32>
    %135 = arith.extf %6 : vector<10x10x8xbf16> to vector<10x10x8xf32>
    %136 = vector.extract_strided_slice %135 {offsets = [0, 0, 0], sizes = [8, 8, 8], strides = [1, 1, 1]} : vector<10x10x8xf32> to vector<8x8x8xf32>
    %137 = vector.shape_cast %136 : vector<8x8x8xf32> to vector<64x8xf32>
    %138 = arith.truncf %137 : vector<64x8xf32> to vector<64x8xbf16>
    %c18 = arith.constant 18 : index
    %c0_69 = arith.constant 0 : index
    %c0_70 = arith.constant 0 : index
    %139 = vector.load %arg5[%c18, %c0_69, %c0_70] : memref<27x8x8xbf16, #tpu.memory_space<vmem>>, vector<1x8x8xbf16>
    %140 = vector.shape_cast %139 : vector<1x8x8xbf16> to vector<8x8xbf16>
    %cst_71 = arith.constant dense<0.000000e+00> : vector<64x8xf32>
    %141 = tpu.matmul %138, %140, %cst_71 {dimension_numbers = #tpu.dot_dimension_numbers<[1], [0], [0], [1], [0, 0, 1, 1], [], []>} : vector<64x8xbf16>, vector<8x8xbf16>, vector<64x8xf32> -> vector<64x8xf32>
    %142 = arith.addf %134, %141 : vector<64x8xf32>
    %143 = vector.extract_strided_slice %135 {offsets = [0, 1, 0], sizes = [8, 8, 8], strides = [1, 1, 1]} : vector<10x10x8xf32> to vector<8x8x8xf32>
    %144 = vector.shape_cast %143 : vector<8x8x8xf32> to vector<64x8xf32>
    %145 = arith.truncf %144 : vector<64x8xf32> to vector<64x8xbf16>
    %c19 = arith.constant 19 : index
    %c0_72 = arith.constant 0 : index
    %c0_73 = arith.constant 0 : index
    %146 = vector.load %arg5[%c19, %c0_72, %c0_73] : memref<27x8x8xbf16, #tpu.memory_space<vmem>>, vector<1x8x8xbf16>
    %147 = vector.shape_cast %146 : vector<1x8x8xbf16> to vector<8x8xbf16>
    %cst_74 = arith.constant dense<0.000000e+00> : vector<64x8xf32>
    %148 = tpu.matmul %145, %147, %cst_74 {dimension_numbers = #tpu.dot_dimension_numbers<[1], [0], [0], [1], [0, 0, 1, 1], [], []>} : vector<64x8xbf16>, vector<8x8xbf16>, vector<64x8xf32> -> vector<64x8xf32>
    %149 = arith.addf %142, %148 : vector<64x8xf32>
    %150 = vector.extract_strided_slice %135 {offsets = [0, 2, 0], sizes = [8, 8, 8], strides = [1, 1, 1]} : vector<10x10x8xf32> to vector<8x8x8xf32>
    %151 = vector.shape_cast %150 : vector<8x8x8xf32> to vector<64x8xf32>
    %152 = arith.truncf %151 : vector<64x8xf32> to vector<64x8xbf16>
    %c20 = arith.constant 20 : index
    %c0_75 = arith.constant 0 : index
    %c0_76 = arith.constant 0 : index
    %153 = vector.load %arg5[%c20, %c0_75, %c0_76] : memref<27x8x8xbf16, #tpu.memory_space<vmem>>, vector<1x8x8xbf16>
    %154 = vector.shape_cast %153 : vector<1x8x8xbf16> to vector<8x8xbf16>
    %cst_77 = arith.constant dense<0.000000e+00> : vector<64x8xf32>
    %155 = tpu.matmul %152, %154, %cst_77 {dimension_numbers = #tpu.dot_dimension_numbers<[1], [0], [0], [1], [0, 0, 1, 1], [], []>} : vector<64x8xbf16>, vector<8x8xbf16>, vector<64x8xf32> -> vector<64x8xf32>
    %156 = arith.addf %149, %155 : vector<64x8xf32>
    %157 = vector.extract_strided_slice %135 {offsets = [1, 0, 0], sizes = [8, 8, 8], strides = [1, 1, 1]} : vector<10x10x8xf32> to vector<8x8x8xf32>
    %158 = vector.shape_cast %157 : vector<8x8x8xf32> to vector<64x8xf32>
    %159 = arith.truncf %158 : vector<64x8xf32> to vector<64x8xbf16>
    %c21 = arith.constant 21 : index
    %c0_78 = arith.constant 0 : index
    %c0_79 = arith.constant 0 : index
    %160 = vector.load %arg5[%c21, %c0_78, %c0_79] : memref<27x8x8xbf16, #tpu.memory_space<vmem>>, vector<1x8x8xbf16>
    %161 = vector.shape_cast %160 : vector<1x8x8xbf16> to vector<8x8xbf16>
    %cst_80 = arith.constant dense<0.000000e+00> : vector<64x8xf32>
    %162 = tpu.matmul %159, %161, %cst_80 {dimension_numbers = #tpu.dot_dimension_numbers<[1], [0], [0], [1], [0, 0, 1, 1], [], []>} : vector<64x8xbf16>, vector<8x8xbf16>, vector<64x8xf32> -> vector<64x8xf32>
    %163 = arith.addf %156, %162 : vector<64x8xf32>
    %164 = vector.extract_strided_slice %135 {offsets = [1, 1, 0], sizes = [8, 8, 8], strides = [1, 1, 1]} : vector<10x10x8xf32> to vector<8x8x8xf32>
    %165 = vector.shape_cast %164 : vector<8x8x8xf32> to vector<64x8xf32>
    %166 = arith.truncf %165 : vector<64x8xf32> to vector<64x8xbf16>
    %c22 = arith.constant 22 : index
    %c0_81 = arith.constant 0 : index
    %c0_82 = arith.constant 0 : index
    %167 = vector.load %arg5[%c22, %c0_81, %c0_82] : memref<27x8x8xbf16, #tpu.memory_space<vmem>>, vector<1x8x8xbf16>
    %168 = vector.shape_cast %167 : vector<1x8x8xbf16> to vector<8x8xbf16>
    %cst_83 = arith.constant dense<0.000000e+00> : vector<64x8xf32>
    %169 = tpu.matmul %166, %168, %cst_83 {dimension_numbers = #tpu.dot_dimension_numbers<[1], [0], [0], [1], [0, 0, 1, 1], [], []>} : vector<64x8xbf16>, vector<8x8xbf16>, vector<64x8xf32> -> vector<64x8xf32>
    %170 = arith.addf %163, %169 : vector<64x8xf32>
    %171 = vector.extract_strided_slice %135 {offsets = [1, 2, 0], sizes = [8, 8, 8], strides = [1, 1, 1]} : vector<10x10x8xf32> to vector<8x8x8xf32>
    %172 = vector.shape_cast %171 : vector<8x8x8xf32> to vector<64x8xf32>
    %173 = arith.truncf %172 : vector<64x8xf32> to vector<64x8xbf16>
    %c23 = arith.constant 23 : index
    %c0_84 = arith.constant 0 : index
    %c0_85 = arith.constant 0 : index
    %174 = vector.load %arg5[%c23, %c0_84, %c0_85] : memref<27x8x8xbf16, #tpu.memory_space<vmem>>, vector<1x8x8xbf16>
    %175 = vector.shape_cast %174 : vector<1x8x8xbf16> to vector<8x8xbf16>
    %cst_86 = arith.constant dense<0.000000e+00> : vector<64x8xf32>
    %176 = tpu.matmul %173, %175, %cst_86 {dimension_numbers = #tpu.dot_dimension_numbers<[1], [0], [0], [1], [0, 0, 1, 1], [], []>} : vector<64x8xbf16>, vector<8x8xbf16>, vector<64x8xf32> -> vector<64x8xf32>
    %177 = arith.addf %170, %176 : vector<64x8xf32>
    %178 = vector.extract_strided_slice %135 {offsets = [2, 0, 0], sizes = [8, 8, 8], strides = [1, 1, 1]} : vector<10x10x8xf32> to vector<8x8x8xf32>
    %179 = vector.shape_cast %178 : vector<8x8x8xf32> to vector<64x8xf32>
    %180 = arith.truncf %179 : vector<64x8xf32> to vector<64x8xbf16>
    %c24 = arith.constant 24 : index
    %c0_87 = arith.constant 0 : index
    %c0_88 = arith.constant 0 : index
    %181 = vector.load %arg5[%c24, %c0_87, %c0_88] : memref<27x8x8xbf16, #tpu.memory_space<vmem>>, vector<1x8x8xbf16>
    %182 = vector.shape_cast %181 : vector<1x8x8xbf16> to vector<8x8xbf16>
    %cst_89 = arith.constant dense<0.000000e+00> : vector<64x8xf32>
    %183 = tpu.matmul %180, %182, %cst_89 {dimension_numbers = #tpu.dot_dimension_numbers<[1], [0], [0], [1], [0, 0, 1, 1], [], []>} : vector<64x8xbf16>, vector<8x8xbf16>, vector<64x8xf32> -> vector<64x8xf32>
    %184 = arith.addf %177, %183 : vector<64x8xf32>
    %185 = vector.extract_strided_slice %135 {offsets = [2, 1, 0], sizes = [8, 8, 8], strides = [1, 1, 1]} : vector<10x10x8xf32> to vector<8x8x8xf32>
    %186 = vector.shape_cast %185 : vector<8x8x8xf32> to vector<64x8xf32>
    %187 = arith.truncf %186 : vector<64x8xf32> to vector<64x8xbf16>
    %c25 = arith.constant 25 : index
    %c0_90 = arith.constant 0 : index
    %c0_91 = arith.constant 0 : index
    %188 = vector.load %arg5[%c25, %c0_90, %c0_91] : memref<27x8x8xbf16, #tpu.memory_space<vmem>>, vector<1x8x8xbf16>
    %189 = vector.shape_cast %188 : vector<1x8x8xbf16> to vector<8x8xbf16>
    %cst_92 = arith.constant dense<0.000000e+00> : vector<64x8xf32>
    %190 = tpu.matmul %187, %189, %cst_92 {dimension_numbers = #tpu.dot_dimension_numbers<[1], [0], [0], [1], [0, 0, 1, 1], [], []>} : vector<64x8xbf16>, vector<8x8xbf16>, vector<64x8xf32> -> vector<64x8xf32>
    %191 = arith.addf %184, %190 : vector<64x8xf32>
    %192 = vector.extract_strided_slice %135 {offsets = [2, 2, 0], sizes = [8, 8, 8], strides = [1, 1, 1]} : vector<10x10x8xf32> to vector<8x8x8xf32>
    %193 = vector.shape_cast %192 : vector<8x8x8xf32> to vector<64x8xf32>
    %194 = arith.truncf %193 : vector<64x8xf32> to vector<64x8xbf16>
    %c26 = arith.constant 26 : index
    %c0_93 = arith.constant 0 : index
    %c0_94 = arith.constant 0 : index
    %195 = vector.load %arg5[%c26, %c0_93, %c0_94] : memref<27x8x8xbf16, #tpu.memory_space<vmem>>, vector<1x8x8xbf16>
    %196 = vector.shape_cast %195 : vector<1x8x8xbf16> to vector<8x8xbf16>
    %cst_95 = arith.constant dense<0.000000e+00> : vector<64x8xf32>
    %197 = tpu.matmul %194, %196, %cst_95 {dimension_numbers = #tpu.dot_dimension_numbers<[1], [0], [0], [1], [0, 0, 1, 1], [], []>} : vector<64x8xbf16>, vector<8x8xbf16>, vector<64x8xf32> -> vector<64x8xf32>
    %198 = arith.addf %191, %197 : vector<64x8xf32>
    %cst_96 = arith.constant 0.000000e+00 : f32
    %199 = vector.broadcast %cst_96 : f32 to vector<64x8xf32>
    %200 = arith.cmpf ogt, %198, %199 : vector<64x8xf32>
    %cst_97 = arith.constant 0.00999999977 : f32
    %201 = vector.broadcast %cst_97 : f32 to vector<64x8xf32>
    %202 = arith.mulf %201, %198 : vector<64x8xf32>
    %203 = arith.select %200, %198, %202 : vector<64x8xi1>, vector<64x8xf32>
    %c0_98 = arith.constant 0 : index
    %c0_99 = arith.constant 0 : index
    %c0_100 = arith.constant 0 : index
    %c0_101 = arith.constant 0 : index
    %204 = vector.load %arg6[%c0_98, %c0_99, %c0_100, %c0_101] : memref<1x1x64x8xf32, #tpu.memory_space<vmem>>, vector<1x1x64x8xf32>
    %205 = vector.shape_cast %204 : vector<1x1x64x8xf32> to vector<64x8xf32>
    %206 = vector.shape_cast %203 : vector<64x8xf32> to vector<1x1x64x8xf32>
    tpu.vector_store %arg6[%c0_98, %c0_99, %c0_100, %c0_101], %206 {strides = array<i32>} : memref<1x1x64x8xf32, #tpu.memory_space<vmem>>, vector<1x1x64x8xf32>,
    %c0_i32 = arith.constant 0 : i32
    %207 = arith.cmpi eq, %arg1, %c0_i32 : i32
    %208 = arith.extui %207 : i1 to i32
    %c0_i32_102 = arith.constant 0 : i32
    %209 = arith.cmpi ne, %208, %c0_i32_102 : i32
    scf.if %209 {
      %cst_117 = arith.constant 0.000000e+00 : f32
      %223 = vector.broadcast %cst_117 : f32 to vector<1x1x8xf32>
      %c0_118 = arith.constant 0 : index
      %c0_119 = arith.constant 0 : index
      %c0_120 = arith.constant 0 : index
      %224 = vector.load %arg7[%c0_118, %c0_119, %c0_120] : memref<1x1x8xf32, #tpu.memory_space<vmem>>, vector<1x1x8xf32>
      tpu.vector_store %arg7[%c0_118, %c0_119, %c0_120], %223 {strides = array<i32>} : memref<1x1x8xf32, #tpu.memory_space<vmem>>, vector<1x1x8xf32>,
      %cst_121 = arith.constant 0.000000e+00 : f32
      %225 = vector.broadcast %cst_121 : f32 to vector<1x1x8xf32>
      %c0_122 = arith.constant 0 : index
      %c0_123 = arith.constant 0 : index
      %c0_124 = arith.constant 0 : index
      %226 = vector.load %arg8[%c0_122, %c0_123, %c0_124] : memref<1x1x8xf32, #tpu.memory_space<vmem>>, vector<1x1x8xf32>
      tpu.vector_store %arg8[%c0_122, %c0_123, %c0_124], %225 {strides = array<i32>} : memref<1x1x8xf32, #tpu.memory_space<vmem>>, vector<1x1x8xf32>,
    } else {
    }
    %c0_103 = arith.constant 0 : index
    %c0_104 = arith.constant 0 : index
    %c0_105 = arith.constant 0 : index
    %210 = vector.load %arg7[%c0_103, %c0_104, %c0_105] : memref<1x1x8xf32, #tpu.memory_space<vmem>>, vector<1x1x8xf32>
    %cst_106 = arith.constant dense<0.000000e+00> : vector<8xf32>
    %211 = vector.multi_reduction <add>, %203, %cst_106 [0] : vector<64x8xf32> to vector<8xf32>
    %212 = vector.shape_cast %211 : vector<8xf32> to vector<1x8xf32>
    %213 = vector.shape_cast %212 : vector<1x8xf32> to vector<1x1x8xf32>
    %214 = arith.addf %210, %213 : vector<1x1x8xf32>
    %c0_107 = arith.constant 0 : index
    %c0_108 = arith.constant 0 : index
    %c0_109 = arith.constant 0 : index
    %215 = vector.load %arg7[%c0_107, %c0_108, %c0_109] : memref<1x1x8xf32, #tpu.memory_space<vmem>>, vector<1x1x8xf32>
    tpu.vector_store %arg7[%c0_107, %c0_108, %c0_109], %214 {strides = array<i32>} : memref<1x1x8xf32, #tpu.memory_space<vmem>>, vector<1x1x8xf32>,
    %c0_110 = arith.constant 0 : index
    %c0_111 = arith.constant 0 : index
    %c0_112 = arith.constant 0 : index
    %216 = vector.load %arg8[%c0_110, %c0_111, %c0_112] : memref<1x1x8xf32, #tpu.memory_space<vmem>>, vector<1x1x8xf32>
    %217 = arith.mulf %203, %203 : vector<64x8xf32>
    %cst_113 = arith.constant dense<0.000000e+00> : vector<8xf32>
    %218 = vector.multi_reduction <add>, %217, %cst_113 [0] : vector<64x8xf32> to vector<8xf32>
    %219 = vector.shape_cast %218 : vector<8xf32> to vector<1x8xf32>
    %220 = vector.shape_cast %219 : vector<1x8xf32> to vector<1x1x8xf32>
    %221 = arith.addf %216, %220 : vector<1x1x8xf32>
    %c0_114 = arith.constant 0 : index
    %c0_115 = arith.constant 0 : index
    %c0_116 = arith.constant 0 : index
    %222 = vector.load %arg8[%c0_114, %c0_115, %c0_116] : memref<1x1x8xf32, #tpu.memory_space<vmem>>, vector<1x1x8xf32>
    tpu.vector_store %arg8[%c0_114, %c0_115, %c0_116], %221 {strides = array<i32>} : memref<1x1x8xf32, #tpu.memory_space<vmem>>, vector<1x1x8xf32>,
    return
  }
  func.func @transform_0(%arg0: i32, %arg1: i32) -> (i32, i32, i32, i32, i32) {
    %c0_i32 = arith.constant 0 : i32
    %0 = arith.addi %arg1, %c0_i32 : i32
    %c0_i32_0 = arith.constant 0 : i32
    %c0_i32_1 = arith.constant 0 : i32
    %c0_i32_2 = arith.constant 0 : i32
    %c0_i32_3 = arith.constant 0 : i32
    return %arg0, %0, %c0_i32_0, %c0_i32_1, %c0_i32_2 : i32, i32, i32, i32, i32
  }
  func.func @transform_1(%arg0: i32, %arg1: i32) -> (i32, i32, i32, i32, i32) {
    %c1_i32 = arith.constant 1 : i32
    %0 = arith.addi %arg1, %c1_i32 : i32
    %c0_i32 = arith.constant 0 : i32
    %c0_i32_0 = arith.constant 0 : i32
    %c0_i32_1 = arith.constant 0 : i32
    %c0_i32_2 = arith.constant 0 : i32
    return %arg0, %0, %c0_i32, %c0_i32_0, %c0_i32_1 : i32, i32, i32, i32, i32
  }
  func.func @transform_2(%arg0: i32, %arg1: i32) -> (i32, i32, i32, i32, i32) {
    %c2_i32 = arith.constant 2 : i32
    %0 = arith.addi %arg1, %c2_i32 : i32
    %c0_i32 = arith.constant 0 : i32
    %c0_i32_0 = arith.constant 0 : i32
    %c0_i32_1 = arith.constant 0 : i32
    %c0_i32_2 = arith.constant 0 : i32
    return %arg0, %0, %c0_i32, %c0_i32_0, %c0_i32_1 : i32, i32, i32, i32, i32
  }
  func.func @transform_3(%arg0: i32, %arg1: i32) -> (i32, i32, i32) {
    %c0_i32 = arith.constant 0 : i32
    %c0_i32_0 = arith.constant 0 : i32
    %c0_i32_1 = arith.constant 0 : i32
    %c0_i32_2 = arith.constant 0 : i32
    return %c0_i32, %c0_i32_0, %c0_i32_1 : i32, i32, i32
  }
  func.func @transform_4(%arg0: i32, %arg1: i32) -> (i32, i32, i32, i32) {
    %c0_i32 = arith.constant 0 : i32
    %c0_i32_0 = arith.constant 0 : i32
    %c0_i32_1 = arith.constant 0 : i32
    return %arg0, %arg1, %c0_i32, %c0_i32_0 : i32, i32, i32, i32
  }
  func.func @transform_5(%arg0: i32, %arg1: i32) -> (i32, i32, i32) {
    %c0_i32 = arith.constant 0 : i32
    %c0_i32_0 = arith.constant 0 : i32
    %c0_i32_1 = arith.constant 0 : i32
    return %arg0, %c0_i32, %c0_i32_0 : i32, i32, i32
  }
  func.func @transform_6(%arg0: i32, %arg1: i32) -> (i32, i32, i32) {
    %c0_i32 = arith.constant 0 : i32
    %c0_i32_0 = arith.constant 0 : i32
    %c0_i32_1 = arith.constant 0 : i32
    return %arg0, %c0_i32, %c0_i32_0 : i32, i32, i32
  }
}

module attributes {stable_mosaic.version = 11 : i64} {
  func.func @_scale_bias_kernel(%arg0: i32, %arg1: i32, %arg2: memref<1x1x64x8xf32, #tpu.memory_space<vmem>>, %arg3: memref<1x1x8xf32, #tpu.memory_space<vmem>>, %arg4: memref<1x1x8xf32, #tpu.memory_space<vmem>>, %arg5: memref<1x1x64x8xf32, #tpu.memory_space<vmem>>) attributes {dimension_semantics = [#tpu.dimension_semantics<parallel>, #tpu.dimension_semantics<parallel>], iteration_bounds = array<i64: 2, 8>, scalar_prefetch = 0 : i64, scratch_operands = 0 : i64, tpu.core_type = #tpu.core_type<tc>, window_params = [{transform_indices = @transform_0, window_bounds = array<i64: 1, 1, 64, 8>}, {transform_indices = @transform_1, window_bounds = array<i64: 1, 1, 8>}, {transform_indices = @transform_2, window_bounds = array<i64: 1, 1, 8>}, {transform_indices = @transform_3, window_bounds = array<i64: 1, 1, 64, 8>}]} {
    %c0 = arith.constant 0 : index
    %c0_0 = arith.constant 0 : index
    %c0_1 = arith.constant 0 : index
    %c0_2 = arith.constant 0 : index
    %0 = vector.load %arg2[%c0, %c0_0, %c0_1, %c0_2] : memref<1x1x64x8xf32, #tpu.memory_space<vmem>>, vector<1x1x64x8xf32>
    %1 = vector.shape_cast %0 : vector<1x1x64x8xf32> to vector<64x8xf32>
    %c0_3 = arith.constant 0 : index
    %c0_4 = arith.constant 0 : index
    %c0_5 = arith.constant 0 : index
    %2 = vector.load %arg3[%c0_3, %c0_4, %c0_5] : memref<1x1x8xf32, #tpu.memory_space<vmem>>, vector<1x1x8xf32>
    %3 = vector.shape_cast %2 : vector<1x1x8xf32> to vector<1x8xf32>
    %4 = vector.broadcast %3 : vector<1x8xf32> to vector<64x8xf32>
    %5 = arith.mulf %1, %4 : vector<64x8xf32>
    %c0_6 = arith.constant 0 : index
    %c0_7 = arith.constant 0 : index
    %c0_8 = arith.constant 0 : index
    %6 = vector.load %arg4[%c0_6, %c0_7, %c0_8] : memref<1x1x8xf32, #tpu.memory_space<vmem>>, vector<1x1x8xf32>
    %7 = vector.shape_cast %6 : vector<1x1x8xf32> to vector<1x8xf32>
    %8 = vector.broadcast %7 : vector<1x8xf32> to vector<64x8xf32>
    %9 = arith.addf %5, %8 : vector<64x8xf32>
    %c0_9 = arith.constant 0 : index
    %c0_10 = arith.constant 0 : index
    %c0_11 = arith.constant 0 : index
    %c0_12 = arith.constant 0 : index
    %10 = vector.load %arg5[%c0_9, %c0_10, %c0_11, %c0_12] : memref<1x1x64x8xf32, #tpu.memory_space<vmem>>, vector<1x1x64x8xf32>
    %11 = vector.shape_cast %10 : vector<1x1x64x8xf32> to vector<64x8xf32>
    %12 = vector.shape_cast %9 : vector<64x8xf32> to vector<1x1x64x8xf32>
    tpu.vector_store %arg5[%c0_9, %c0_10, %c0_11, %c0_12], %12 {strides = array<i32>} : memref<1x1x64x8xf32, #tpu.memory_space<vmem>>, vector<1x1x64x8xf32>,
    return
  }
  func.func @transform_0(%arg0: i32, %arg1: i32) -> (i32, i32, i32, i32) {
    %c0_i32 = arith.constant 0 : i32
    %c0_i32_0 = arith.constant 0 : i32
    %c0_i32_1 = arith.constant 0 : i32
    return %arg0, %arg1, %c0_i32, %c0_i32_0 : i32, i32, i32, i32
  }
  func.func @transform_1(%arg0: i32, %arg1: i32) -> (i32, i32, i32) {
    %c0_i32 = arith.constant 0 : i32
    %c0_i32_0 = arith.constant 0 : i32
    %c0_i32_1 = arith.constant 0 : i32
    return %arg0, %c0_i32, %c0_i32_0 : i32, i32, i32
  }
  func.func @transform_2(%arg0: i32, %arg1: i32) -> (i32, i32, i32) {
    %c0_i32 = arith.constant 0 : i32
    %c0_i32_0 = arith.constant 0 : i32
    %c0_i32_1 = arith.constant 0 : i32
    return %arg0, %c0_i32, %c0_i32_0 : i32, i32, i32
  }
  func.func @transform_3(%arg0: i32, %arg1: i32) -> (i32, i32, i32, i32) {
    %c0_i32 = arith.constant 0 : i32
    %c0_i32_0 = arith.constant 0 : i32
    %c0_i32_1 = arith.constant 0 : i32
    return %arg0, %arg1, %c0_i32, %c0_i32_0 : i32, i32, i32, i32
  }
}

</mosaic_0001>

<llo_original>
// kernel: residual_inner_forward.3
$region0: #{residual_inner_forward.3}
  #allocation0 [shape = 'u32[]', space=smem, size = 0x4, offset = 0x4, fixed_abs, tag = 'smem constant byte address 0x4 - core index']
  #allocation1 [shape = 'u32[144,128]{1,0:T(1,128)}', space=vmem, size = 0x12000, scoped, tag = 'internal scratch']
  %s0 = inlined_call_operand.vmem [shape: f32[2,8,64,8], index: 0, kind: input, shape index: {}]
  %s1 = inlined_call_operand.vmem [shape: f32[2,1,8], index: 1, kind: input, shape index: {}]
  %s2 = inlined_call_operand.vmem [shape: f32[2,1,8], index: 2, kind: input, shape index: {}]
  %s3 = inlined_call_operand.vmem [shape: f32[2,8,64,8], index: 3, kind: output, shape index: {}]
  %s4 = sld [smem:[#allocation0]]
  $region45: #{residual_inner_forward.3} parent=0
    _
  %s6 = ssub.s32 1, %s4
  %s7 = scalar_select 0, %s6, %s4
  loop: start=0, step=1, limit=18
  $region2: #{residual_inner_forward.3} parent=0 // loop_pre_header
    _
  $region3: #{residual_inner_forward.3} parent=0 // loop_header
    %s9 = sphi 0, %s13
    %p10 = scmp.ge.s32.totalorder %s9, 18
    %s16 = sphi 0, %s28
    %s17 = sphi 0, %s24
    %s18 = sphi 0, %s16
    %s19 = sphi 0, %s17
    %s20 = sphi 0, %s18
    %s21 = sphi 0, %s19
    %s33 = sphi 0, %s35
    %s36 = sphi 0, %s33
    %s37 = sphi 0, %s36
    %s53 = sphi 0, %s37
    %s59 = sphi 0, %s61
    %s62 = sphi 0, %s59
    %s63 = sphi 0, %s62
    %s79 = sphi 0, %s63
    %s85 = sphi 0, %s87
    %s88 = sphi 0, %s85
    %s89 = sphi 0, %s88
    %s105 = sphi 0, %s89
    %s113 = sphi 0, %s115
    %s116 = sphi 0, %s113
    %s117 = sphi 0, %s116
    %s133 = sphi 0, %s117
  $region4: #{residual_inner_forward.3} parent=0 // loop_header_branch
    %12 = sbr.rel (%p10) target = $region8
  $region5: #{residual_inner_forward.3} parent=0 // loop_body
    %s14 = ssub.s32 %s9, 1
    %s15 = ssub.s32 %s9, 2
    %s22 = sadd.s32 1, %s17
    %p23 = scmp.ge.s32.totalorder %s22, 8
    %s24 = scalar_select %p23, 0, %s22
    %s25 = sadd.s32 1, %s16
    %s26 = scalar_select %p23, %s25, %s16
    %p27 = scmp.ge.s32.totalorder %s26, 2
    %s28 = scalar_select %p27, 0, %s26
    %s29 = ssub.s32 %s16, %s28
    %s30 = ssub.s32 %s17, %s24
    %s31 = sor.u32 %s29, %s30
    %p32 = scmp.eq.s32.totalorder %s31, 0
    %s34 = sadd.s32 %s33, 1
    %s35 = scalar_select %p32, %s33, %s34
    %p38 = pneg %p32
    %p39 = scmp.eq.s32.totalorder %s9, 15
    %p40 = por %p38, %p39
    %p41 = scmp.ne.s32.totalorder %s33, %s36
    %p42 = scmp.eq.s32.totalorder %s9, 0
    %p43 = por %p41, %p42
    %p44 = scmp.ne.s32.totalorder %s33, %s36
    %p45 = scmp.eq.s32.totalorder %s14, 15
    %p46 = por %p44, %p45
    %p47 = scmp.ne.s32.totalorder %s36, %s37
    %p48 = scmp.eq.s32.totalorder %s14, 0
    %p49 = por %p47, %p48
    %p50 = scmp.ne.s32.totalorder %s36, %s37
    %p51 = scmp.eq.s32.totalorder %s15, 15
    %p52 = por %p50, %p51
    %p54 = scmp.ne.s32.totalorder %s37, %s53
    %p55 = scmp.eq.s32.totalorder %s15, 0
    %p56 = por %p54, %p55
    %s57 = ssub.s32 %s16, %s28
    %p58 = scmp.eq.s32.totalorder %s57, 0
    %s60 = sadd.s32 %s59, 1
    %s61 = scalar_select %p58, %s59, %s60
    %p64 = pneg %p58
    %p65 = scmp.eq.s32.totalorder %s9, 15
    %p66 = por %p64, %p65
    %p67 = scmp.ne.s32.totalorder %s59, %s62
    %p68 = scmp.eq.s32.totalorder %s9, 0
    %p69 = por %p67, %p68
    %p70 = scmp.ne.s32.totalorder %s59, %s62
    %p71 = scmp.eq.s32.totalorder %s14, 15
    %p72 = por %p70, %p71
    %p73 = scmp.ne.s32.totalorder %s62, %s63
    %p74 = scmp.eq.s32.totalorder %s14, 0
    %p75 = por %p73, %p74
    %p76 = scmp.ne.s32.totalorder %s62, %s63
    %p77 = scmp.eq.s32.totalorder %s15, 15
    %p78 = por %p76, %p77
    %p80 = scmp.ne.s32.totalorder %s63, %s79
    %p81 = scmp.eq.s32.totalorder %s15, 0
    %p82 = por %p80, %p81
    %s83 = ssub.s32 %s16, %s28
    %p84 = scmp.eq.s32.totalorder %s83, 0
    %s86 = sadd.s32 %s85, 1
    %s87 = scalar_select %p84, %s85, %s86
    %p90 = pneg %p84
    %p91 = scmp.eq.s32.totalorder %s9, 15
    %p92 = por %p90, %p91
    %p93 = scmp.ne.s32.totalorder %s85, %s88
    %p94 = scmp.eq.s32.totalorder %s9, 0
    %p95 = por %p93, %p94
    %p96 = scmp.ne.s32.totalorder %s85, %s88
    %p97 = scmp.eq.s32.totalorder %s14, 15
    %p98 = por %p96, %p97
    %p99 = scmp.ne.s32.totalorder %s88, %s89
    %p100 = scmp.eq.s32.totalorder %s14, 0
    %p101 = por %p99, %p100
    %p102 = scmp.ne.s32.totalorder %s88, %s89
    %p103 = scmp.eq.s32.totalorder %s15, 15
    %p104 = por %p102, %p103
    %p106 = scmp.ne.s32.totalorder %s89, %s105
    %p107 = scmp.eq.s32.totalorder %s15, 0
    %p108 = por %p106, %p107
    %s109 = ssub.s32 %s16, %s28
    %s110 = ssub.s32 %s17, %s24
    %s111 = sor.u32 %s109, %s110
    %p112 = scmp.eq.s32.totalorder %s111, 0
    %s114 = sadd.s32 %s113, 1
    %s115 = scalar_select %p112, %s113, %s114
    %p118 = pneg %p112
    %p119 = scmp.eq.s32.totalorder %s9, 15
    %p120 = por %p118, %p119
    %p121 = scmp.ne.s32.totalorder %s113, %s116
    %p122 = scmp.eq.s32.totalorder %s9, 0
    %p123 = por %p121, %p122
    %p124 = scmp.ne.s32.totalorder %s113, %s116
    %p125 = scmp.eq.s32.totalorder %s14, 15
    %p126 = por %p124, %p125
    %p127 = scmp.ne.s32.totalorder %s116, %s117
    %p128 = scmp.eq.s32.totalorder %s14, 0
    %p129 = por %p127, %p128
    %p130 = scmp.ne.s32.totalorder %s116, %s117
    %p131 = scmp.eq.s32.totalorder %s15, 15
    %p132 = por %p130, %p131
    %p134 = scmp.ne.s32.totalorder %s117, %s133
    %p135 = scmp.eq.s32.totalorder %s15, 0
    %p136 = por %p134, %p135
    %p137 = scmp.le.s32.totalorder 1, %s9
    %p138 = scmp.lt.s32.totalorder %s9, 17
    %p139 = pnand %p137, %p138
    %p140 = pneg %p139
    // Predicated region
    $region9: #{residual_inner_forward.3} parent=5 // pred_check
      _
    $region10: #{residual_inner_forward.3} parent=5 // pred_check_branch
      %142 = sbr.rel (%p139) target = $region12
    $region11: #{residual_inner_forward.3} parent=5 // pred_region
      %s143 = ssub.s32 %s9, 1
    $region12: #{residual_inner_forward.3} parent=5 // pred_fallthru
      _
    %p144 = scmp.lt.s32.totalorder %s9, 16
    // Predicated region
    $region13: #{residual_inner_forward.3} parent=5 // pred_check
      %p145 = pneg %p144
    $region14: #{residual_inner_forward.3} parent=5 // pred_check_branch
      %147 = sbr.rel (%p145) target = $region16
    $region15: #{residual_inner_forward.3} parent=5 // pred_region
      // Predicated region
      $region17: #{residual_inner_forward.3} parent=15 // pred_check
        %p148 = pneg %p43
      $region18: #{residual_inner_forward.3} parent=15 // pred_check_branch
        %150 = sbr.rel (%p148) target = $region20
      $region19: #{residual_inner_forward.3} parent=15 // pred_region
        %p151 = scmp.lt.s32.totalorder %s16, 1
        %s152 = scalar_select %p151, %s16, 1
        %p153 = scmp.lt.s32.totalorder %s17, 7
        %s154 = scalar_select %p153, %s17, 7
        %s155 = smul.addr %s154, 8
        %s156 = smul.addr %s152, 64
        %s157 = sadd.s32 %s155, %s156
        %s158 = smul.addr %s157, 8
        %s159 = scalar_lea.vmem %s0, %s158
      $region20: #{residual_inner_forward.3} parent=15 // pred_fallthru
        _
      // Predicated region
      $region21: #{residual_inner_forward.3} parent=15 // pred_check
        %p160 = pneg %p69
      $region22: #{residual_inner_forward.3} parent=15 // pred_check_branch
        %162 = sbr.rel (%p160) target = $region24
      $region23: #{residual_inner_forward.3} parent=15 // pred_region
        %p163 = scmp.lt.s32.totalorder %s16, 1
        %s164 = scalar_select %p163, %s16, 1
        %s165 = scalar_lea.vmem %s1, %s164
      $region24: #{residual_inner_forward.3} parent=15 // pred_fallthru
        _
      // Predicated region
      $region25: #{residual_inner_forward.3} parent=15 // pred_check
        %p166 = pneg %p95
      $region26: #{residual_inner_forward.3} parent=15 // pred_check_branch
        %168 = sbr.rel (%p166) target = $region28
      $region27: #{residual_inner_forward.3} parent=15 // pred_region
        %p169 = scmp.lt.s32.totalorder %s16, 1
        %s170 = scalar_select %p169, %s16, 1
        %s171 = scalar_lea.vmem %s2, %s170
      $region28: #{residual_inner_forward.3} parent=15 // pred_fallthru
        _
    $region16: #{residual_inner_forward.3} parent=5 // pred_fallthru
      _
    %p172 = scmp.le.s32.totalorder 1, %s9
    %p173 = scmp.lt.s32.totalorder %s9, 17
    %p174 = pnand %p172, %p173
    %p175 = pneg %p174
    // Predicated region
    $region29: #{residual_inner_forward.3} parent=5 // pred_check
      _
    $region30: #{residual_inner_forward.3} parent=5 // pred_check_branch
      %177 = sbr.rel (%p174) target = $region32
    $region31: #{residual_inner_forward.3} parent=5 // pred_region
      %s178 = ssub.s32 %s9, 1
      %p179 = scmp.lt.s32.totalorder %s18, 1
      %s180 = scalar_select %p179, %s18, 1
      %p181 = scmp.lt.s32.totalorder %s19, 7
      %s182 = scalar_select %p181, %s19, 7
      %s183 = smul.addr %s182, 8
      %s184 = smul.addr %s180, 64
      %s185 = sadd.s32 %s183, %s184
      %s186 = smul.addr %s185, 8
      %s187 = scalar_lea.vmem %s0, %s186
      %p188 = pneg %p49
      %p189 = pneg %p46
      %p190 = scmp.lt.s32.totalorder %s18, 1
      %s191 = scalar_select %p190, %s18, 1
      %s192 = scalar_lea.vmem %s1, %s191
      %p193 = pneg %p75
      %p194 = pneg %p72
      %p195 = scmp.lt.s32.totalorder %s18, 1
      %s196 = scalar_select %p195, %s18, 1
      %s197 = scalar_lea.vmem %s2, %s196
      %p198 = pneg %p101
      %p199 = pneg %p98
      %p200 = pneg %p129
      %p201 = pneg %p126
      %p202 = scmp.lt.s32.totalorder %s18, 1
      %s203 = scalar_select %p202, %s18, 1
      %p204 = scmp.lt.s32.totalorder %s19, 7
      %s205 = scalar_select %p204, %s19, 7
      %s206 = smul.addr %s205, 8
      %s207 = smul.addr %s203, 64
      %s208 = sadd.s32 %s206, %s207
      %s209 = smul.addr %s208, 8
      %s210 = scalar_lea.vmem %s3, %s209
      %p211 = scmp.lt.s32.totalorder %s18, 1
      %s212 = scalar_select %p211, %s18, 1
      %p213 = scmp.lt.s32.totalorder %s19, 7
      %s214 = scalar_select %p213, %s19, 7
      %s215 = smul.addr %s214, 8
      %s216 = smul.addr %s212, 64
      %s217 = sadd.s32 %s215, %s216
      %s218 = smul.addr %s217, 8
      %s219 = scalar_lea.vmem %s0, %s218
      %p220 = scmp.lt.s32.totalorder %s18, 1
      %s221 = scalar_select %p220, %s18, 1
      %s222 = scalar_lea.vmem %s1, %s221
      %p223 = scmp.lt.s32.totalorder %s18, 1
      %s224 = scalar_select %p223, %s18, 1
      %s225 = scalar_lea.vmem %s2, %s224
      %p226 = scmp.lt.s32.totalorder %s18, 1
      %s227 = scalar_select %p226, %s18, 1
      %p228 = scmp.lt.s32.totalorder %s19, 7
      %s229 = scalar_select %p228, %s19, 7
      %s230 = smul.addr %s229, 8
      %s231 = smul.addr %s227, 64
      %s232 = sadd.s32 %s230, %s231
      %s233 = smul.addr %s232, 8
      %s234 = scalar_lea.vmem %s3, %s233
      %v235 = vld [vmem:[%s219] sm:$0xff]
      %v236 = vld [vmem:[%s219 + $0x8] sm:$0xff]
      %v237 = vld [vmem:[%s219 + $0x10] sm:$0xff]
      %v238 = vld [vmem:[%s219 + $0x18] sm:$0xff]
      %v239 = vld [vmem:[%s219 + $0x20] sm:$0xff]
      %v240 = vld [vmem:[%s219 + $0x28] sm:$0xff]
      %v241 = vld [vmem:[%s219 + $0x30] sm:$0xff]
      %v242 = vld [vmem:[%s219 + $0x38] sm:$0xff]
      %v243 = vld [vmem:[%s222] sm:$0x1]
      %v245 = vlaneseq
      %v246 = vshrl.u32 %v245, 7
      %v247 = vsub.s32 0, %v246
      %v248 = vrot.slane %v243, %v247
      %v250 = vmul.f32 %v235, %v248
      %v251 = vmul.f32 %v236, %v248
      %v252 = vmul.f32 %v237, %v248
      %v253 = vmul.f32 %v238, %v248
      %v254 = vmul.f32 %v239, %v248
      %v255 = vmul.f32 %v240, %v248
      %v256 = vmul.f32 %v241, %v248
      %v257 = vmul.f32 %v242, %v248
      %v258 = vld [vmem:[%s225] sm:$0x1]
      %v260 = vlaneseq
      %v261 = vshrl.u32 %v260, 7
      %v262 = vsub.s32 0, %v261
      %v263 = vrot.slane %v258, %v262
      %v265 = vadd.f32 %v250, %v263
      %v266 = vadd.f32 %v251, %v263
      %v267 = vadd.f32 %v252, %v263
      %v268 = vadd.f32 %v253, %v263
      %v269 = vadd.f32 %v254, %v263
      %v270 = vadd.f32 %v255, %v263
      %v271 = vadd.f32 %v256, %v263
      %v272 = vadd.f32 %v257, %v263
      %vm273 = vcmask 64512
      %274 = vst.msk [vmem:[%s234] sm:$0xff] %vm273, %v265
      %275 = vst.msk [vmem:[%s234 + $0x8] sm:$0xff] %vm273, %v266
      %276 = vst.msk [vmem:[%s234 + $0x10] sm:$0xff] %vm273, %v267
      %277 = vst.msk [vmem:[%s234 + $0x18] sm:$0xff] %vm273, %v268
      %278 = vst.msk [vmem:[%s234 + $0x20] sm:$0xff] %vm273, %v269
      %279 = vst.msk [vmem:[%s234 + $0x28] sm:$0xff] %vm273, %v270
      %280 = vst.msk [vmem:[%s234 + $0x30] sm:$0xff] %vm273, %v271
      %281 = vst.msk [vmem:[%s234 + $0x38] sm:$0xff] %vm273, %v272
      %p282 = scmp.lt.s32.totalorder %s18, 1
      %s283 = scalar_select %p282, %s18, 1
      %p284 = scmp.lt.s32.totalorder %s19, 7
      %s285 = scalar_select %p284, %s19, 7
      %s286 = smul.addr %s285, 8
      %s287 = smul.addr %s283, 64
      %s288 = sadd.s32 %s286, %s287
      %s289 = smul.addr %s288, 8
      %s290 = scalar_lea.vmem %s3, %s289
      // Predicated region
      $region33: #{residual_inner_forward.3} parent=31 // pred_check
        %p291 = pneg %p126
      $region34: #{residual_inner_forward.3} parent=31 // pred_check_branch
        %293 = sbr.rel (%p291) target = $region36
      $region35: #{residual_inner_forward.3} parent=31 // pred_region
        _
      $region36: #{residual_inner_forward.3} parent=31 // pred_fallthru
        _
    $region32: #{residual_inner_forward.3} parent=5 // pred_fallthru
      _
    %p294 = scmp.le.s32.totalorder 2, %s9
    // Predicated region
    $region37: #{residual_inner_forward.3} parent=5 // pred_check
      %p295 = pneg %p294
    $region38: #{residual_inner_forward.3} parent=5 // pred_check_branch
      %297 = sbr.rel (%p295) target = $region40
    $region39: #{residual_inner_forward.3} parent=5 // pred_region
      %s298 = ssub.s32 %s9, 2
      // Predicated region
      $region41: #{residual_inner_forward.3} parent=39 // pred_check
        %p299 = pneg %p132
      $region42: #{residual_inner_forward.3} parent=39 // pred_check_branch
        %301 = sbr.rel (%p299) target = $region44
      $region43: #{residual_inner_forward.3} parent=39 // pred_region
        %p302 = scmp.lt.s32.totalorder %s20, 1
        %s303 = scalar_select %p302, %s20, 1
        %p304 = scmp.lt.s32.totalorder %s21, 7
        %s305 = scalar_select %p304, %s21, 7
        %s306 = smul.addr %s305, 8
        %s307 = smul.addr %s303, 64
        %s308 = sadd.s32 %s306, %s307
        %s309 = smul.addr %s308, 8
        %s310 = scalar_lea.vmem %s3, %s309
      $region44: #{residual_inner_forward.3} parent=39 // pred_fallthru
        _
    $region40: #{residual_inner_forward.3} parent=5 // pred_fallthru
      _
  $region6: #{residual_inner_forward.3} parent=0 // loop_footer
    %s13 = sadd.s32 1, %s9
  $region7: #{residual_inner_forward.3} parent=0 // loop_footer_branch
    %8 = sbr.rel target = $region3
  $region8: #{residual_inner_forward.3} parent=0 // loop_exit
    _

// kernel: residual_inner_forward.2
$region0: #{residual_inner_forward.2}
  #allocation0 [shape = 'u32[]', space=smem, size = 0x4, offset = 0x4, fixed_abs, tag = 'smem constant byte address 0x4 - core index']
  #allocation1 [shape = 'u32[144,128]{1,0:T(1,128)}', space=vmem, size = 0x12000, scoped, tag = 'internal scratch']
  %s0 = inlined_call_operand.vmem [shape: bf16[2,10,10,10,8], index: 0, kind: input, shape index: {}, may-alias: {0,1,2}]
  %s1 = inlined_call_operand.vmem [shape: bf16[2,10,10,10,8], index: 1, kind: input, shape index: {}, may-alias: {0,1,2}]
  %s2 = inlined_call_operand.vmem [shape: bf16[2,10,10,10,8], index: 2, kind: input, shape index: {}, may-alias: {0,1,2}]
  %s3 = inlined_call_operand.vmem [shape: bf16[27,8,8], index: 3, kind: input, shape index: {}]
  %s4 = inlined_call_operand.vmem [shape: f32[2,8,64,8], index: 4, kind: output, shape index: {0}]
  %s5 = inlined_call_operand.vmem [shape: f32[2,1,8], index: 5, kind: output, shape index: {1}]
  %s6 = inlined_call_operand.vmem [shape: f32[2,1,8], index: 6, kind: output, shape index: {2}]
  %7 = xla_tuple %s4, %s5, %s6
  %s8 = sld [smem:[#allocation0]]
  $region69: #{residual_inner_forward.2} parent=0
    _
  %s10 = ssub.s32 1, %s8
  %s11 = scalar_select 0, %s10, %s8
  loop: start=0, step=1, limit=18
  $region2: #{residual_inner_forward.2} parent=0 // loop_pre_header
    _
  $region3: #{residual_inner_forward.2} parent=0 // loop_header
    %s13 = sphi 0, %s17
    %p14 = scmp.ge.s32.totalorder %s13, 18
    %s20 = sphi 0, %s32
    %s21 = sphi 0, %s28
    %s22 = sphi 0, %s20
    %s23 = sphi 0, %s21
    %s24 = sphi 0, %s22
    %s25 = sphi 0, %s23
    %s37 = sphi 0, %s39
    %s40 = sphi 0, %s37
    %s41 = sphi 0, %s40
    %s57 = sphi 0, %s41
    %s67 = sphi 0, %s69
    %s70 = sphi 0, %s67
    %s71 = sphi 0, %s70
    %s87 = sphi 0, %s71
    %s97 = sphi 0, %s99
    %s100 = sphi 0, %s97
    %s101 = sphi 0, %s100
    %s117 = sphi 0, %s101
    %s121 = sphi 0, %s121
    %s123 = sphi 0, %s121
    %s124 = sphi 0, %s123
    %s138 = sphi 0, %s124
    %s146 = sphi 0, %s148
    %s149 = sphi 0, %s146
    %s150 = sphi 0, %s149
    %s166 = sphi 0, %s150
    %s172 = sphi 0, %s174
    %s175 = sphi 0, %s172
    %s176 = sphi 0, %s175
    %s192 = sphi 0, %s176
    %s198 = sphi 0, %s200
    %s201 = sphi 0, %s198
    %s202 = sphi 0, %s201
    %s218 = sphi 0, %s202
  $region4: #{residual_inner_forward.2} parent=0 // loop_header_branch
    %16 = sbr.rel (%p14) target = $region8
  $region5: #{residual_inner_forward.2} parent=0 // loop_body
    %s18 = ssub.s32 %s13, 1
    %s19 = ssub.s32 %s13, 2
    %s26 = sadd.s32 1, %s21
    %p27 = scmp.ge.s32.totalorder %s26, 8
    %s28 = scalar_select %p27, 0, %s26
    %s29 = sadd.s32 1, %s20
    %s30 = scalar_select %p27, %s29, %s20
    %p31 = scmp.ge.s32.totalorder %s30, 2
    %s32 = scalar_select %p31, 0, %s30
    %s33 = ssub.s32 %s20, %s32
    %s34 = ssub.s32 %s21, %s28
    %s35 = sor.u32 %s33, %s34
    %p36 = scmp.eq.s32.totalorder %s35, 0
    %s38 = sadd.s32 %s37, 1
    %s39 = scalar_select %p36, %s37, %s38
    %p42 = pneg %p36
    %p43 = scmp.eq.s32.totalorder %s13, 15
    %p44 = por %p42, %p43
    %p45 = scmp.ne.s32.totalorder %s37, %s40
    %p46 = scmp.eq.s32.totalorder %s13, 0
    %p47 = por %p45, %p46
    %p48 = scmp.ne.s32.totalorder %s37, %s40
    %p49 = scmp.eq.s32.totalorder %s18, 15
    %p50 = por %p48, %p49
    %p51 = scmp.ne.s32.totalorder %s40, %s41
    %p52 = scmp.eq.s32.totalorder %s18, 0
    %p53 = por %p51, %p52
    %p54 = scmp.ne.s32.totalorder %s40, %s41
    %p55 = scmp.eq.s32.totalorder %s19, 15
    %p56 = por %p54, %p55
    %p58 = scmp.ne.s32.totalorder %s41, %s57
    %p59 = scmp.eq.s32.totalorder %s19, 0
    %p60 = por %p58, %p59
    %s61 = sadd.s32 %s21, 1
    %s62 = sadd.s32 %s28, 1
    %s63 = ssub.s32 %s20, %s32
    %s64 = ssub.s32 %s61, %s62
    %s65 = sor.u32 %s63, %s64
    %p66 = scmp.eq.s32.totalorder %s65, 0
    %s68 = sadd.s32 %s67, 1
    %s69 = scalar_select %p66, %s67, %s68
    %p72 = pneg %p66
    %p73 = scmp.eq.s32.totalorder %s13, 15
    %p74 = por %p72, %p73
    %p75 = scmp.ne.s32.totalorder %s67, %s70
    %p76 = scmp.eq.s32.totalorder %s13, 0
    %p77 = por %p75, %p76
    %p78 = scmp.ne.s32.totalorder %s67, %s70
    %p79 = scmp.eq.s32.totalorder %s18, 15
    %p80 = por %p78, %p79
    %p81 = scmp.ne.s32.totalorder %s70, %s71
    %p82 = scmp.eq.s32.totalorder %s18, 0
    %p83 = por %p81, %p82
    %p84 = scmp.ne.s32.totalorder %s70, %s71
    %p85 = scmp.eq.s32.totalorder %s19, 15
    %p86 = por %p84, %p85
    %p88 = scmp.ne.s32.totalorder %s71, %s87
    %p89 = scmp.eq.s32.totalorder %s19, 0
    %p90 = por %p88, %p89
    %s91 = sadd.s32 %s21, 2
    %s92 = sadd.s32 %s28, 2
    %s93 = ssub.s32 %s20, %s32
    %s94 = ssub.s32 %s91, %s92
    %s95 = sor.u32 %s93, %s94
    %p96 = scmp.eq.s32.totalorder %s95, 0
    %s98 = sadd.s32 %s97, 1
    %s99 = scalar_select %p96, %s97, %s98
    %p102 = pneg %p96
    %p103 = scmp.eq.s32.totalorder %s13, 15
    %p104 = por %p102, %p103
    %p105 = scmp.ne.s32.totalorder %s97, %s100
    %p106 = scmp.eq.s32.totalorder %s13, 0
    %p107 = por %p105, %p106
    %p108 = scmp.ne.s32.totalorder %s97, %s100
    %p109 = scmp.eq.s32.totalorder %s18, 15
    %p110 = por %p108, %p109
    %p111 = scmp.ne.s32.totalorder %s100, %s101
    %p112 = scmp.eq.s32.totalorder %s18, 0
    %p113 = por %p111, %p112
    %p114 = scmp.ne.s32.totalorder %s100, %s101
    %p115 = scmp.eq.s32.totalorder %s19, 15
    %p116 = por %p114, %p115
    %p118 = scmp.ne.s32.totalorder %s101, %s117
    %p119 = scmp.eq.s32.totalorder %s19, 0
    %p120 = por %p118, %p119
    %s122 = sadd.s32 %s121, 1
    %p125 = scmp.eq.s32.totalorder %s13, 15
    %p126 = scmp.ne.s32.totalorder %s121, %s123
    %p127 = scmp.eq.s32.totalorder %s13, 0
    %p128 = por %p126, %p127
    %p129 = scmp.ne.s32.totalorder %s121, %s123
    %p130 = scmp.eq.s32.totalorder %s18, 15
    %p131 = por %p129, %p130
    %p132 = scmp.ne.s32.totalorder %s123, %s124
    %p133 = scmp.eq.s32.totalorder %s18, 0
    %p134 = por %p132, %p133
    %p135 = scmp.ne.s32.totalorder %s123, %s124
    %p136 = scmp.eq.s32.totalorder %s19, 15
    %p137 = por %p135, %p136
    %p139 = scmp.ne.s32.totalorder %s124, %s138
    %p140 = scmp.eq.s32.totalorder %s19, 0
    %p141 = por %p139, %p140
    %s142 = ssub.s32 %s20, %s32
    %s143 = ssub.s32 %s21, %s28
    %s144 = sor.u32 %s142, %s143
    %p145 = scmp.eq.s32.totalorder %s144, 0
    %s147 = sadd.s32 %s146, 1
    %s148 = scalar_select %p145, %s146, %s147
    %p151 = pneg %p145
    %p152 = scmp.eq.s32.totalorder %s13, 15
    %p153 = por %p151, %p152
    %p154 = scmp.ne.s32.totalorder %s146, %s149
    %p155 = scmp.eq.s32.totalorder %s13, 0
    %p156 = por %p154, %p155
    %p157 = scmp.ne.s32.totalorder %s146, %s149
    %p158 = scmp.eq.s32.totalorder %s18, 15
    %p159 = por %p157, %p158
    %p160 = scmp.ne.s32.totalorder %s149, %s150
    %p161 = scmp.eq.s32.totalorder %s18, 0
    %p162 = por %p160, %p161
    %p163 = scmp.ne.s32.totalorder %s149, %s150
    %p164 = scmp.eq.s32.totalorder %s19, 15
    %p165 = por %p163, %p164
    %p167 = scmp.ne.s32.totalorder %s150, %s166
    %p168 = scmp.eq.s32.totalorder %s19, 0
    %p169 = por %p167, %p168
    %s170 = ssub.s32 %s20, %s32
    %p171 = scmp.eq.s32.totalorder %s170, 0
    %s173 = sadd.s32 %s172, 1
    %s174 = scalar_select %p171, %s172, %s173
    %p177 = pneg %p171
    %p178 = scmp.eq.s32.totalorder %s13, 15
    %p179 = por %p177, %p178
    %p180 = scmp.ne.s32.totalorder %s172, %s175
    %p181 = scmp.eq.s32.totalorder %s13, 0
    %p182 = por %p180, %p181
    %p183 = scmp.ne.s32.totalorder %s172, %s175
    %p184 = scmp.eq.s32.totalorder %s18, 15
    %p185 = por %p183, %p184
    %p186 = scmp.ne.s32.totalorder %s175, %s176
    %p187 = scmp.eq.s32.totalorder %s18, 0
    %p188 = por %p186, %p187
    %p189 = scmp.ne.s32.totalorder %s175, %s176
    %p190 = scmp.eq.s32.totalorder %s19, 15
    %p191 = por %p189, %p190
    %p193 = scmp.ne.s32.totalorder %s176, %s192
    %p194 = scmp.eq.s32.totalorder %s19, 0
    %p195 = por %p193, %p194
    %s196 = ssub.s32 %s20, %s32
    %p197 = scmp.eq.s32.totalorder %s196, 0
    %s199 = sadd.s32 %s198, 1
    %s200 = scalar_select %p197, %s198, %s199
    %p203 = pneg %p197
    %p204 = scmp.eq.s32.totalorder %s13, 15
    %p205 = por %p203, %p204
    %p206 = scmp.ne.s32.totalorder %s198, %s201
    %p207 = scmp.eq.s32.totalorder %s13, 0
    %p208 = por %p206, %p207
    %p209 = scmp.ne.s32.totalorder %s198, %s201
    %p210 = scmp.eq.s32.totalorder %s18, 15
    %p211 = por %p209, %p210
    %p212 = scmp.ne.s32.totalorder %s201, %s202
    %p213 = scmp.eq.s32.totalorder %s18, 0
    %p214 = por %p212, %p213
    %p215 = scmp.ne.s32.totalorder %s201, %s202
    %p216 = scmp.eq.s32.totalorder %s19, 15
    %p217 = por %p215, %p216
    %p219 = scmp.ne.s32.totalorder %s202, %s218
    %p220 = scmp.eq.s32.totalorder %s19, 0
    %p221 = por %p219, %p220
    %p222 = scmp.le.s32.totalorder 1, %s13
    %p223 = scmp.lt.s32.totalorder %s13, 17
    %p224 = pnand %p222, %p223
    %p225 = pneg %p224
    // Predicated region
    $region9: #{residual_inner_forward.2} parent=5 // pred_check
      _
    $region10: #{residual_inner_forward.2} parent=5 // pred_check_branch
      %227 = sbr.rel (%p224) target = $region12
    $region11: #{residual_inner_forward.2} parent=5 // pred_region
      %s228 = ssub.s32 %s13, 1
      // Predicated region
      $region13: #{residual_inner_forward.2} parent=11 // pred_check
        %p229 = pneg %p134
      $region14: #{residual_inner_forward.2} parent=11 // pred_check_branch
        %231 = sbr.rel (%p229) target = $region16
      $region15: #{residual_inner_forward.2} parent=11 // pred_region
        _
      $region16: #{residual_inner_forward.2} parent=11 // pred_fallthru
        _
    $region12: #{residual_inner_forward.2} parent=5 // pred_fallthru
      _
    %p232 = scmp.lt.s32.totalorder %s13, 16
    // Predicated region
    $region17: #{residual_inner_forward.2} parent=5 // pred_check
      %p233 = pneg %p232
    $region18: #{residual_inner_forward.2} parent=5 // pred_check_branch
      %235 = sbr.rel (%p233) target = $region20
    $region19: #{residual_inner_forward.2} parent=5 // pred_region
      // Predicated region
      $region21: #{residual_inner_forward.2} parent=19 // pred_check
        %p236 = pneg %p47
      $region22: #{residual_inner_forward.2} parent=19 // pred_check_branch
        %238 = sbr.rel (%p236) target = $region24
      $region23: #{residual_inner_forward.2} parent=19 // pred_region
        %p239 = scmp.lt.s32.totalorder %s20, 1
        %s240 = scalar_select %p239, %s20, 1
        %p241 = scmp.lt.s32.totalorder %s21, 9
        %s242 = scalar_select %p241, %s21, 9
        %s243 = smul.addr %s242, 20
        %s244 = smul.addr %s240, 200
        %s245 = sadd.s32 %s243, %s244
        %s246 = smul.addr %s245, 4
        %s247 = scalar_lea.vmem %s0, %s246
      $region24: #{residual_inner_forward.2} parent=19 // pred_fallthru
        _
      // Predicated region
      $region25: #{residual_inner_forward.2} parent=19 // pred_check
        %p248 = pneg %p77
      $region26: #{residual_inner_forward.2} parent=19 // pred_check_branch
        %250 = sbr.rel (%p248) target = $region28
      $region27: #{residual_inner_forward.2} parent=19 // pred_region
        %s251 = sadd.s32 %s21, 1
        %p252 = scmp.lt.s32.totalorder %s20, 1
        %s253 = scalar_select %p252, %s20, 1
        %p254 = scmp.lt.s32.totalorder %s251, 9
        %s255 = scalar_select %p254, %s251, 9
        %s256 = smul.addr %s255, 20
        %s257 = smul.addr %s253, 200
        %s258 = sadd.s32 %s256, %s257
        %s259 = smul.addr %s258, 4
        %s260 = scalar_lea.vmem %s1, %s259
        %s261 = sadd.s32 %s21, 1
      $region28: #{residual_inner_forward.2} parent=19 // pred_fallthru
        _
      // Predicated region
      $region29: #{residual_inner_forward.2} parent=19 // pred_check
        %p262 = pneg %p107
      $region30: #{residual_inner_forward.2} parent=19 // pred_check_branch
        %264 = sbr.rel (%p262) target = $region32
      $region31: #{residual_inner_forward.2} parent=19 // pred_region
        %s265 = sadd.s32 %s21, 2
        %p266 = scmp.lt.s32.totalorder %s20, 1
        %s267 = scalar_select %p266, %s20, 1
        %p268 = scmp.lt.s32.totalorder %s265, 9
        %s269 = scalar_select %p268, %s265, 9
        %s270 = smul.addr %s269, 20
        %s271 = smul.addr %s267, 200
        %s272 = sadd.s32 %s270, %s271
        %s273 = smul.addr %s272, 4
        %s274 = scalar_lea.vmem %s2, %s273
        %s275 = sadd.s32 %s21, 2
      $region32: #{residual_inner_forward.2} parent=19 // pred_fallthru
        _
    $region20: #{residual_inner_forward.2} parent=5 // pred_fallthru
      _
    %p276 = scmp.le.s32.totalorder 1, %s13
    %p277 = scmp.lt.s32.totalorder %s13, 17
    %p278 = pnand %p276, %p277
    %p279 = pneg %p278
    // Predicated region
    $region33: #{residual_inner_forward.2} parent=5 // pred_check
      _
    $region34: #{residual_inner_forward.2} parent=5 // pred_check_branch
      %281 = sbr.rel (%p278) target = $region36
    $region35: #{residual_inner_forward.2} parent=5 // pred_region
      %s282 = ssub.s32 %s13, 1
      %p283 = scmp.lt.s32.totalorder %s22, 1
      %s284 = scalar_select %p283, %s22, 1
      %p285 = scmp.lt.s32.totalorder %s23, 9
      %s286 = scalar_select %p285, %s23, 9
      %s287 = smul.addr %s286, 20
      %s288 = smul.addr %s284, 200
      %s289 = sadd.s32 %s287, %s288
      %s290 = smul.addr %s289, 4
      %s291 = scalar_lea.vmem %s0, %s290
      %p292 = pneg %p53
      %p293 = pneg %p50
      %s294 = sadd.s32 %s23, 1
      %p295 = scmp.lt.s32.totalorder %s22, 1
      %s296 = scalar_select %p295, %s22, 1
      %p297 = scmp.lt.s32.totalorder %s294, 9
      %s298 = scalar_select %p297, %s294, 9
      %s299 = smul.addr %s298, 20
      %s300 = smul.addr %s296, 200
      %s301 = sadd.s32 %s299, %s300
      %s302 = smul.addr %s301, 4
      %s303 = scalar_lea.vmem %s1, %s302
      %p304 = pneg %p83
      %p305 = pneg %p80
      %s306 = sadd.s32 %s23, 2
      %p307 = scmp.lt.s32.totalorder %s22, 1
      %s308 = scalar_select %p307, %s22, 1
      %p309 = scmp.lt.s32.totalorder %s306, 9
      %s310 = scalar_select %p309, %s306, 9
      %s311 = smul.addr %s310, 20
      %s312 = smul.addr %s308, 200
      %s313 = sadd.s32 %s311, %s312
      %s314 = smul.addr %s313, 4
      %s315 = scalar_lea.vmem %s2, %s314
      %p316 = pneg %p113
      %p317 = pneg %p110
      %p318 = pneg %p134
      %p319 = pneg %p131
      %p320 = pneg %p162
      %p321 = pneg %p159
      %p322 = scmp.lt.s32.totalorder %s22, 1
      %s323 = scalar_select %p322, %s22, 1
      %p324 = scmp.lt.s32.totalorder %s23, 7
      %s325 = scalar_select %p324, %s23, 7
      %s326 = smul.addr %s325, 8
      %s327 = smul.addr %s323, 64
      %s328 = sadd.s32 %s326, %s327
      %s329 = smul.addr %s328, 8
      %s330 = scalar_lea.vmem %s4, %s329
      %p331 = pneg %p188
      %p332 = pneg %p185
      %p333 = scmp.lt.s32.totalorder %s22, 1
      %s334 = scalar_select %p333, %s22, 1
      %s335 = scalar_lea.vmem %s5, %s334
      %p336 = pneg %p214
      %p337 = pneg %p211
      %p338 = scmp.lt.s32.totalorder %s22, 1
      %s339 = scalar_select %p338, %s22, 1
      %s340 = scalar_lea.vmem %s6, %s339
      %p341 = scmp.lt.s32.totalorder %s22, 1
      %s342 = scalar_select %p341, %s22, 1
      %p343 = scmp.lt.s32.totalorder %s23, 9
      %s344 = scalar_select %p343, %s23, 9
      %s345 = smul.addr %s344, 20
      %s346 = smul.addr %s342, 200
      %s347 = sadd.s32 %s345, %s346
      %s348 = smul.addr %s347, 4
      %s349 = scalar_lea.vmem %s0, %s348
      %s350 = sadd.s32 %s23, 1
      %p351 = scmp.lt.s32.totalorder %s22, 1
      %s352 = scalar_select %p351, %s22, 1
      %p353 = scmp.lt.s32.totalorder %s350, 9
      %s354 = scalar_select %p353, %s350, 9
      %s355 = smul.addr %s354, 20
      %s356 = smul.addr %s352, 200
      %s357 = sadd.s32 %s355, %s356
      %s358 = smul.addr %s357, 4
      %s359 = scalar_lea.vmem %s1, %s358
      %s360 = sadd.s32 %s23, 1
      %s361 = sadd.s32 %s23, 2
      %p362 = scmp.lt.s32.totalorder %s22, 1
      %s363 = scalar_select %p362, %s22, 1
      %p364 = scmp.lt.s32.totalorder %s361, 9
      %s365 = scalar_select %p364, %s361, 9
      %s366 = smul.addr %s365, 20
      %s367 = smul.addr %s363, 200
      %s368 = sadd.s32 %s366, %s367
      %s369 = smul.addr %s368, 4
      %s370 = scalar_lea.vmem %s2, %s369
      %s371 = sadd.s32 %s23, 2
      %p372 = scmp.lt.s32.totalorder %s22, 1
      %s373 = scalar_select %p372, %s22, 1
      %p374 = scmp.lt.s32.totalorder %s23, 7
      %s375 = scalar_select %p374, %s23, 7
      %s376 = smul.addr %s375, 8
      %s377 = smul.addr %s373, 64
      %s378 = sadd.s32 %s376, %s377
      %s379 = smul.addr %s378, 8
      %s380 = scalar_lea.vmem %s4, %s379
      %p381 = scmp.lt.s32.totalorder %s22, 1
      %s382 = scalar_select %p381, %s22, 1
      %s383 = scalar_lea.vmem %s5, %s382
      %p384 = scmp.lt.s32.totalorder %s22, 1
      %s385 = scalar_select %p384, %s22, 1
      %s386 = scalar_lea.vmem %s6, %s385
      %v388 = vld [vmem:[%s349] sm:$0xf]
      %v389 = vld [vmem:[%s349 + $0x4] sm:$0x1]
      %v390 = vld [vmem:[%s349 + $0x8] sm:$0xf]
      %v391 = vld [vmem:[%s349 + $0xc] sm:$0x1]
      %v392 = vld [vmem:[%s349 + $0x10] sm:$0xf]
      %v393 = vld [vmem:[%s349 + $0x14] sm:$0x1]
      %v394 = vld [vmem:[%s349 + $0x18] sm:$0xf]
      %v395 = vld [vmem:[%s349 + $0x1c] sm:$0x1]
      %v396 = vld [vmem:[%s349 + $0x20] sm:$0xf]
      %v397 = vld [vmem:[%s349 + $0x24] sm:$0x1]
      %v398 = vld [vmem:[%s349 + $0x28] sm:$0xf]
      %v399 = vld [vmem:[%s349 + $0x2c] sm:$0x1]
      %v400 = vld [vmem:[%s349 + $0x30] sm:$0xf]
      %v401 = vld [vmem:[%s349 + $0x34] sm:$0x1]
      %v402 = vld [vmem:[%s349 + $0x38] sm:$0xf]
      %v403 = vld [vmem:[%s349 + $0x3c] sm:$0x1]
      %v404 = vld [vmem:[%s349 + $0x40] sm:$0xf]
      %v405 = vld [vmem:[%s349 + $0x44] sm:$0x1]
      %v406 = vld [vmem:[%s349 + $0x48] sm:$0xf]
      %v407 = vld [vmem:[%s349 + $0x4c] sm:$0x1]
      %v408 = vld [vmem:[%s359] sm:$0xf]
      %v409 = vld [vmem:[%s359 + $0x4] sm:$0x1]
      %v410 = vld [vmem:[%s359 + $0x8] sm:$0xf]
      %v411 = vld [vmem:[%s359 + $0xc] sm:$0x1]
      %v412 = vld [vmem:[%s359 + $0x10] sm:$0xf]
      %v413 = vld [vmem:[%s359 + $0x14] sm:$0x1]
      %v414 = vld [vmem:[%s359 + $0x18] sm:$0xf]
      %v415 = vld [vmem:[%s359 + $0x1c] sm:$0x1]
      %v416 = vld [vmem:[%s359 + $0x20] sm:$0xf]
      %v417 = vld [vmem:[%s359 + $0x24] sm:$0x1]
      %v418 = vld [vmem:[%s359 + $0x28] sm:$0xf]
      %v419 = vld [vmem:[%s359 + $0x2c] sm:$0x1]
      %v420 = vld [vmem:[%s359 + $0x30] sm:$0xf]
      %v421 = vld [vmem:[%s359 + $0x34] sm:$0x1]
      %v422 = vld [vmem:[%s359 + $0x38] sm:$0xf]
      %v423 = vld [vmem:[%s359 + $0x3c] sm:$0x1]
      %v424 = vld [vmem:[%s359 + $0x40] sm:$0xf]
      %v425 = vld [vmem:[%s359 + $0x44] sm:$0x1]
      %v426 = vld [vmem:[%s359 + $0x48] sm:$0xf]
      %v427 = vld [vmem:[%s359 + $0x4c] sm:$0x1]
      %v428 = vld [vmem:[%s370] sm:$0xf]
      %v429 = vld [vmem:[%s370 + $0x4] sm:$0x1]
      %v430 = vld [vmem:[%s370 + $0x8] sm:$0xf]
      %v431 = vld [vmem:[%s370 + $0xc] sm:$0x1]
      %v432 = vld [vmem:[%s370 + $0x10] sm:$0xf]
      %v433 = vld [vmem:[%s370 + $0x14] sm:$0x1]
      %v434 = vld [vmem:[%s370 + $0x18] sm:$0xf]
      %v435 = vld [vmem:[%s370 + $0x1c] sm:$0x1]
      %v436 = vld [vmem:[%s370 + $0x20] sm:$0xf]
      %v437 = vld [vmem:[%s370 + $0x24] sm:$0x1]
      %v438 = vld [vmem:[%s370 + $0x28] sm:$0xf]
      %v439 = vld [vmem:[%s370 + $0x2c] sm:$0x1]
      %v440 = vld [vmem:[%s370 + $0x30] sm:$0xf]
      %v441 = vld [vmem:[%s370 + $0x34] sm:$0x1]
      %v442 = vld [vmem:[%s370 + $0x38] sm:$0xf]
      %v443 = vld [vmem:[%s370 + $0x3c] sm:$0x1]
      %v444 = vld [vmem:[%s370 + $0x40] sm:$0xf]
      %v445 = vld [vmem:[%s370 + $0x44] sm:$0x1]
      %v446 = vld [vmem:[%s370 + $0x48] sm:$0xf]
      %v447 = vld [vmem:[%s370 + $0x4c] sm:$0x1]
      %v448 = vunpack.c.l.bf16 %v388
      %v449 = vunpack.c.l.bf16 %v389
      %v450 = vunpack.c.l.bf16 %v390
      %v451 = vunpack.c.l.bf16 %v391
      %v452 = vunpack.c.l.bf16 %v392
      %v453 = vunpack.c.l.bf16 %v393
      %v454 = vunpack.c.l.bf16 %v394
      %v455 = vunpack.c.l.bf16 %v395
      %v456 = vunpack.c.l.bf16 %v396
      %v457 = vunpack.c.l.bf16 %v397
      %v458 = vunpack.c.l.bf16 %v398
      %v459 = vunpack.c.l.bf16 %v399
      %v460 = vunpack.c.l.bf16 %v400
      %v461 = vunpack.c.l.bf16 %v401
      %v462 = vunpack.c.l.bf16 %v402
      %v463 = vunpack.c.l.bf16 %v403
      %v464 = vunpack.c.l.bf16 %v404
      %v465 = vunpack.c.l.bf16 %v405
      %v466 = vunpack.c.l.bf16 %v406
      %v467 = vunpack.c.l.bf16 %v407
      %v468 = vpack.c.bf16 %v450, %v448
      %v469 = vpack.c.bf16 %v454, %v452
      %v470 = vpack.c.bf16 %v458, %v456
      %v471 = vpack.c.bf16 %v462, %v460
      %v472 = vld [vmem:[%s3] sm:$0xf]
      %vm489 = vcmask 1046528
      %v490 = vrot.slane %v448, 1
      %v491 = vrot.slane %v449, 1
      %v492 = vsel %vm489, %v490, %v491
      %v493 = vrot.slane %v450, 1
      %v494 = vrot.slane %v451, 1
      %v495 = vsel %vm489, %v493, %v494
      %v496 = vrot.slane %v452, 1
      %v497 = vrot.slane %v453, 1
      %v498 = vsel %vm489, %v496, %v497
      %v499 = vrot.slane %v454, 1
      %v500 = vrot.slane %v455, 1
      %v501 = vsel %vm489, %v499, %v500
      %v502 = vrot.slane %v456, 1
      %v503 = vrot.slane %v457, 1
      %v504 = vsel %vm489, %v502, %v503
      %v505 = vrot.slane %v458, 1
      %v506 = vrot.slane %v459, 1
      %v507 = vsel %vm489, %v505, %v506
      %v508 = vrot.slane %v460, 1
      %v509 = vrot.slane %v461, 1
      %v510 = vsel %vm489, %v508, %v509
      %v511 = vrot.slane %v462, 1
      %v512 = vrot.slane %v463, 1
      %v513 = vsel %vm489, %v511, %v512
      %v522 = vpack.c.bf16 %v495, %v492
      %v523 = vpack.c.bf16 %v501, %v498
      %v524 = vpack.c.bf16 %v507, %v504
      %v525 = vpack.c.bf16 %v513, %v510
      %s526 = scalar_lea.vmem %s3, 4
      %v527 = vld [vmem:[%s526] sm:$0xf]
      %vm528 = vcmask 64512
      %v530 = vsel %vm528, %v522, 0
      %v533 = vsel %vm528, %v523, 0
      %v536 = vsel %vm528, %v524, 0
      %v539 = vsel %vm528, %v525, 0
      %vm541 = vcmask 1043456
      %v543 = vsel %vm541, %v527, 0
      %545 = vmatprep.subr.bf16.mxu0 0
      %546 = vmatpush1.bf16.msra.mxu0 0
      %547 = vmatprep.subr.bf16.mxu0 0
      %548 = vmatpush1.bf16.msra.mxu0 0
      %549 = vmatprep.subr.bf16.mxu0 0
      %550 = vmatpush1.bf16.msra.mxu0 0
      %551 = vmatprep.subr.bf16.mxu0 0
      %552 = vmatpush1.bf16.msra.mxu0 0
      %553 = vmatprep.subr.bf16.mxu0 0
      %554 = vmatpush1.bf16.msra.mxu0 0
      %555 = vmatprep.subr.bf16.mxu0 0
      %556 = vmatpush1.bf16.msra.mxu0 0
      %557 = vmatprep.subr.bf16.mxu0 0
      %558 = vmatpush1.bf16.msra.mxu0 0
      %559 = vmatprep.subr.bf16.mxu0 0
      %560 = vmatpush1.bf16.msra.mxu0 %v543
      %561 = vmatprep.subr.bf16.mxu0 0
      %562 = vmatpush2.bf16.msra.mxu0 0
      %563 = vmatprep.subr.bf16.mxu0 0
      %564 = vmatpush2.bf16.msra.mxu0 0
      %565 = vmatprep.subr.bf16.mxu0 0
      %566 = vmatpush2.bf16.msra.mxu0 0
      %567 = vmatprep.subr.bf16.mxu0 0
      %568 = vmatpush2.bf16.msra.mxu0 0
      %569 = vmatprep.subr.bf16.mxu0 0
      %570 = vmatpush2.bf16.msra.mxu0 0
      %571 = vmatprep.subr.bf16.mxu0 0
      %572 = vmatpush2.bf16.msra.mxu0 0
      %573 = vmatprep.subr.bf16.mxu0 0
      %574 = vmatpush2.bf16.msra.mxu0 0
      %575 = vmatprep.subr.bf16.mxu0 0
      %576 = vmatpush2.bf16.msra.mxu0 0
      %577 = vmatprep.mubr.bf16.mxu0 0
      %578 = vmatmul.mubr.bf16.gmra.mxu0 %v530
      %v579 = vpop.f32.mrf.mxu0
      %v580 = vadd.f32 0.0, %v579
      %v581 = vpop.f32.mrf.mxu0
      %v582 = vpop.f32.mrf.mxu0
      %v583 = vadd.f32 0.0, %v582
      %v584 = vpop.f32.mrf.mxu0
      %585 = vmatprep.mubr.bf16.mxu0 0
      %586 = vmatmul.mubr.bf16.gmra.mxu0 %v533
      %v587 = vpop.f32.mrf.mxu0
      %v588 = vadd.f32 0.0, %v587
      %v589 = vpop.f32.mrf.mxu0
      %v590 = vpop.f32.mrf.mxu0
      %v591 = vadd.f32 0.0, %v590
      %v592 = vpop.f32.mrf.mxu0
      %593 = vmatprep.mubr.bf16.mxu0 0
      %594 = vmatmul.mubr.bf16.gmra.mxu0 %v536
      %v595 = vpop.f32.mrf.mxu0
      %v596 = vadd.f32 0.0, %v595
      %v597 = vpop.f32.mrf.mxu0
      %v598 = vpop.f32.mrf.mxu0
      %v599 = vadd.f32 0.0, %v598
      %v600 = vpop.f32.mrf.mxu0
      %601 = vmatprep.mubr.bf16.mxu0 0
      %602 = vmatmul.mubr.bf16.gmra.mxu0 %v539
      %v603 = vpop.f32.mrf.mxu0
      %v604 = vadd.f32 0.0, %v603
      %v605 = vpop.f32.mrf.mxu0
      %v606 = vpop.f32.mrf.mxu0
      %v607 = vadd.f32 0.0, %v606
      %v608 = vpop.f32.mrf.mxu0
      %609 = vdwg.mxu0
      %v611 = vsel %vm528, %v468, 0
      %v614 = vsel %vm528, %v469, 0
      %v617 = vsel %vm528, %v470, 0
      %v620 = vsel %vm528, %v471, 0
      %v623 = vsel %vm541, %v472, 0
      %625 = vmatprep.subr.bf16.mxu0 0
      %626 = vmatpush1.bf16.msra.mxu0 0
      %627 = vmatprep.subr.bf16.mxu0 0
      %628 = vmatpush1.bf16.msra.mxu0 0
      %629 = vmatprep.subr.bf16.mxu0 0
      %630 = vmatpush1.bf16.msra.mxu0 0
      %631 = vmatprep.subr.bf16.mxu0 0
      %632 = vmatpush1.bf16.msra.mxu0 0
      %633 = vmatprep.subr.bf16.mxu0 0
      %634 = vmatpush1.bf16.msra.mxu0 0
      %635 = vmatprep.subr.bf16.mxu0 0
      %636 = vmatpush1.bf16.msra.mxu0 0
      %637 = vmatprep.subr.bf16.mxu0 0
      %638 = vmatpush1.bf16.msra.mxu0 0
      %639 = vmatprep.subr.bf16.mxu0 0
      %640 = vmatpush1.bf16.msra.mxu0 %v623
      %641 = vmatprep.subr.bf16.mxu0 0
      %642 = vmatpush2.bf16.msra.mxu0 0
      %643 = vmatprep.subr.bf16.mxu0 0
      %644 = vmatpush2.bf16.msra.mxu0 0
      %645 = vmatprep.subr.bf16.mxu0 0
      %646 = vmatpush2.bf16.msra.mxu0 0
      %647 = vmatprep.subr.bf16.mxu0 0
      %648 = vmatpush2.bf16.msra.mxu0 0
      %649 = vmatprep.subr.bf16.mxu0 0
      %650 = vmatpush2.bf16.msra.mxu0 0
      %651 = vmatprep.subr.bf16.mxu0 0
      %652 = vmatpush2.bf16.msra.mxu0 0
      %653 = vmatprep.subr.bf16.mxu0 0
      %654 = vmatpush2.bf16.msra.mxu0 0
      %655 = vmatprep.subr.bf16.mxu0 0
      %656 = vmatpush2.bf16.msra.mxu0 0
      %657 = vmatprep.mubr.bf16.mxu0 0
      %658 = vmatmul.mubr.bf16.gmra.mxu0 %v611
      %v659 = vpop.f32.mrf.mxu0
      %v660 = vadd.f32 %v580, %v659
      %v661 = vpop.f32.mrf.mxu0
      %v662 = vpop.f32.mrf.mxu0
      %v663 = vadd.f32 %v583, %v662
      %v664 = vpop.f32.mrf.mxu0
      %665 = vmatprep.mubr.bf16.mxu0 0
      %666 = vmatmul.mubr.bf16.gmra.mxu0 %v614
      %v667 = vpop.f32.mrf.mxu0
      %v668 = vadd.f32 %v588, %v667
      %v669 = vpop.f32.mrf.mxu0
      %v670 = vpop.f32.mrf.mxu0
      %v671 = vadd.f32 %v591, %v670
      %v672 = vpop.f32.mrf.mxu0
      %673 = vmatprep.mubr.bf16.mxu0 0
      %674 = vmatmul.mubr.bf16.gmra.mxu0 %v617
      %v675 = vpop.f32.mrf.mxu0
      %v676 = vadd.f32 %v596, %v675
      %v677 = vpop.f32.mrf.mxu0
      %v678 = vpop.f32.mrf.mxu0
      %v679 = vadd.f32 %v599, %v678
      %v680 = vpop.f32.mrf.mxu0
      %681 = vmatprep.mubr.bf16.mxu0 0
      %682 = vmatmul.mubr.bf16.gmra.mxu0 %v620
      %v683 = vpop.f32.mrf.mxu0
      %v684 = vadd.f32 %v604, %v683
      %v685 = vpop.f32.mrf.mxu0
      %v686 = vpop.f32.mrf.mxu0
      %v687 = vadd.f32 %v607, %v686
      %v688 = vpop.f32.mrf.mxu0
      %689 = vdwg.mxu0
      %vm690 = vcmask 1045504
      %v691 = vrot.slane %v448, 2
      %v692 = vrot.slane %v449, 2
      %v693 = vsel %vm690, %v691, %v692
      %v694 = vrot.slane %v450, 2
      %v695 = vrot.slane %v451, 2
      %v696 = vsel %vm690, %v694, %v695
      %v697 = vrot.slane %v452, 2
      %v698 = vrot.slane %v453, 2
      %v699 = vsel %vm690, %v697, %v698
      %v700 = vrot.slane %v454, 2
      %v701 = vrot.slane %v455, 2
      %v702 = vsel %vm690, %v700, %v701
      %v703 = vrot.slane %v456, 2
      %v704 = vrot.slane %v457, 2
      %v705 = vsel %vm690, %v703, %v704
      %v706 = vrot.slane %v458, 2
      %v707 = vrot.slane %v459, 2
      %v708 = vsel %vm690, %v706, %v707
      %v709 = vrot.slane %v460, 2
      %v710 = vrot.slane %v461, 2
      %v711 = vsel %vm690, %v709, %v710
      %v712 = vrot.slane %v462, 2
      %v713 = vrot.slane %v463, 2
      %v714 = vsel %vm690, %v712, %v713
      %v723 = vpack.c.bf16 %v696, %v693
      %v724 = vpack.c.bf16 %v702, %v699
      %v725 = vpack.c.bf16 %v708, %v705
      %v726 = vpack.c.bf16 %v714, %v711
      %s727 = scalar_lea.vmem %s3, 8
      %v728 = vld [vmem:[%s727] sm:$0xf]
      %v730 = vsel %vm528, %v723, 0
      %v733 = vsel %vm528, %v724, 0
      %v736 = vsel %vm528, %v725, 0
      %v739 = vsel %vm528, %v726, 0
      %v742 = vsel %vm541, %v728, 0
      %744 = vmatprep.subr.bf16.mxu0 0
      %745 = vmatpush1.bf16.msra.mxu0 0
      %746 = vmatprep.subr.bf16.mxu0 0
      %747 = vmatpush1.bf16.msra.mxu0 0
      %748 = vmatprep.subr.bf16.mxu0 0
      %749 = vmatpush1.bf16.msra.mxu0 0
      %750 = vmatprep.subr.bf16.mxu0 0
      %751 = vmatpush1.bf16.msra.mxu0 0
      %752 = vmatprep.subr.bf16.mxu0 0
      %753 = vmatpush1.bf16.msra.mxu0 0
      %754 = vmatprep.subr.bf16.mxu0 0
      %755 = vmatpush1.bf16.msra.mxu0 0
      %756 = vmatprep.subr.bf16.mxu0 0
      %757 = vmatpush1.bf16.msra.mxu0 0
      %758 = vmatprep.subr.bf16.mxu0 0
      %759 = vmatpush1.bf16.msra.mxu0 %v742
      %760 = vmatprep.subr.bf16.mxu0 0
      %761 = vmatpush2.bf16.msra.mxu0 0
      %762 = vmatprep.subr.bf16.mxu0 0
      %763 = vmatpush2.bf16.msra.mxu0 0
      %764 = vmatprep.subr.bf16.mxu0 0
      %765 = vmatpush2.bf16.msra.mxu0 0
      %766 = vmatprep.subr.bf16.mxu0 0
      %767 = vmatpush2.bf16.msra.mxu0 0
      %768 = vmatprep.subr.bf16.mxu0 0
      %769 = vmatpush2.bf16.msra.mxu0 0
      %770 = vmatprep.subr.bf16.mxu0 0
      %771 = vmatpush2.bf16.msra.mxu0 0
      %772 = vmatprep.subr.bf16.mxu0 0
      %773 = vmatpush2.bf16.msra.mxu0 0
      %774 = vmatprep.subr.bf16.mxu0 0
      %775 = vmatpush2.bf16.msra.mxu0 0
      %776 = vmatprep.mubr.bf16.mxu0 0
      %777 = vmatmul.mubr.bf16.gmra.mxu0 %v730
      %v778 = vpop.f32.mrf.mxu0
      %v779 = vadd.f32 0.0, %v778
      %v780 = vpop.f32.mrf.mxu0
      %v781 = vpop.f32.mrf.mxu0
      %v782 = vadd.f32 0.0, %v781
      %v783 = vpop.f32.mrf.mxu0
      %784 = vmatprep.mubr.bf16.mxu0 0
      %785 = vmatmul.mubr.bf16.gmra.mxu0 %v733
      %v786 = vpop.f32.mrf.mxu0
      %v787 = vadd.f32 0.0, %v786
      %v788 = vpop.f32.mrf.mxu0
      %v789 = vpop.f32.mrf.mxu0
      %v790 = vadd.f32 0.0, %v789
      %v791 = vpop.f32.mrf.mxu0
      %792 = vmatprep.mubr.bf16.mxu0 0
      %793 = vmatmul.mubr.bf16.gmra.mxu0 %v736
      %v794 = vpop.f32.mrf.mxu0
      %v795 = vadd.f32 0.0, %v794
      %v796 = vpop.f32.mrf.mxu0
      %v797 = vpop.f32.mrf.mxu0
      %v798 = vadd.f32 0.0, %v797
      %v799 = vpop.f32.mrf.mxu0
      %800 = vmatprep.mubr.bf16.mxu0 0
      %801 = vmatmul.mubr.bf16.gmra.mxu0 %v739
      %v802 = vpop.f32.mrf.mxu0
      %v803 = vadd.f32 0.0, %v802
      %v804 = vpop.f32.mrf.mxu0
      %v805 = vpop.f32.mrf.mxu0
      %v806 = vadd.f32 0.0, %v805
      %v807 = vpop.f32.mrf.mxu0
      %808 = vdwg.mxu0
      %v809 = vadd.f32 %v660, %v779
      %v810 = vadd.f32 %v663, %v782
      %v811 = vadd.f32 %v668, %v787
      %v812 = vadd.f32 %v671, %v790
      %v813 = vadd.f32 %v676, %v795
      %v814 = vadd.f32 %v679, %v798
      %v815 = vadd.f32 %v684, %v803
      %v816 = vadd.f32 %v687, %v806
      %v817 = vpack.c.bf16 %v452, %v450
      %v818 = vpack.c.bf16 %v456, %v454
      %v819 = vpack.c.bf16 %v460, %v458
      %v820 = vpack.c.bf16 %v464, %v462
      %s821 = scalar_lea.vmem %s3, 12
      %v822 = vld [vmem:[%s821] sm:$0xf]
      %v824 = vsel %vm528, %v817, 0
      %v827 = vsel %vm528, %v818, 0
      %v830 = vsel %vm528, %v819, 0
      %v833 = vsel %vm528, %v820, 0
      %v836 = vsel %vm541, %v822, 0
      %838 = vmatprep.subr.bf16.mxu0 0
      %839 = vmatpush1.bf16.msra.mxu0 0
      %840 = vmatprep.subr.bf16.mxu0 0
      %841 = vmatpush1.bf16.msra.mxu0 0
      %842 = vmatprep.subr.bf16.mxu0 0
      %843 = vmatpush1.bf16.msra.mxu0 0
      %844 = vmatprep.subr.bf16.mxu0 0
      %845 = vmatpush1.bf16.msra.mxu0 0
      %846 = vmatprep.subr.bf16.mxu0 0
      %847 = vmatpush1.bf16.msra.mxu0 0
      %848 = vmatprep.subr.bf16.mxu0 0
      %849 = vmatpush1.bf16.msra.mxu0 0
      %850 = vmatprep.subr.bf16.mxu0 0
      %851 = vmatpush1.bf16.msra.mxu0 0
      %852 = vmatprep.subr.bf16.mxu0 0
      %853 = vmatpush1.bf16.msra.mxu0 %v836
      %854 = vmatprep.subr.bf16.mxu0 0
      %855 = vmatpush2.bf16.msra.mxu0 0
      %856 = vmatprep.subr.bf16.mxu0 0
      %857 = vmatpush2.bf16.msra.mxu0 0
      %858 = vmatprep.subr.bf16.mxu0 0
      %859 = vmatpush2.bf16.msra.mxu0 0
      %860 = vmatprep.subr.bf16.mxu0 0
      %861 = vmatpush2.bf16.msra.mxu0 0
      %862 = vmatprep.subr.bf16.mxu0 0
      %863 = vmatpush2.bf16.msra.mxu0 0
      %864 = vmatprep.subr.bf16.mxu0 0
      %865 = vmatpush2.bf16.msra.mxu0 0
      %866 = vmatprep.subr.bf16.mxu0 0
      %867 = vmatpush2.bf16.msra.mxu0 0
      %868 = vmatprep.subr.bf16.mxu0 0
      %869 = vmatpush2.bf16.msra.mxu0 0
      %870 = vmatprep.mubr.bf16.mxu0 0
      %871 = vmatmul.mubr.bf16.gmra.mxu0 %v824
      %v872 = vpop.f32.mrf.mxu0
      %v873 = vadd.f32 0.0, %v872
      %v874 = vpop.f32.mrf.mxu0
      %v875 = vpop.f32.mrf.mxu0
      %v876 = vadd.f32 0.0, %v875
      %v877 = vpop.f32.mrf.mxu0
      %878 = vmatprep.mubr.bf16.mxu0 0
      %879 = vmatmul.mubr.bf16.gmra.mxu0 %v827
      %v880 = vpop.f32.mrf.mxu0
      %v881 = vadd.f32 0.0, %v880
      %v882 = vpop.f32.mrf.mxu0
      %v883 = vpop.f32.mrf.mxu0
      %v884 = vadd.f32 0.0, %v883
      %v885 = vpop.f32.mrf.mxu0
      %886 = vmatprep.mubr.bf16.mxu0 0
      %887 = vmatmul.mubr.bf16.gmra.mxu0 %v830
      %v888 = vpop.f32.mrf.mxu0
      %v889 = vadd.f32 0.0, %v888
      %v890 = vpop.f32.mrf.mxu0
      %v891 = vpop.f32.mrf.mxu0
      %v892 = vadd.f32 0.0, %v891
      %v893 = vpop.f32.mrf.mxu0
      %894 = vmatprep.mubr.bf16.mxu0 0
      %895 = vmatmul.mubr.bf16.gmra.mxu0 %v833
      %v896 = vpop.f32.mrf.mxu0
      %v897 = vadd.f32 0.0, %v896
      %v898 = vpop.f32.mrf.mxu0
      %v899 = vpop.f32.mrf.mxu0
      %v900 = vadd.f32 0.0, %v899
      %v901 = vpop.f32.mrf.mxu0
      %902 = vdwg.mxu0
      %v903 = vadd.f32 %v809, %v873
      %v904 = vadd.f32 %v810, %v876
      %v905 = vadd.f32 %v811, %v881
      %v906 = vadd.f32 %v812, %v884
      %v907 = vadd.f32 %v813, %v889
      %v908 = vadd.f32 %v814, %v892
      %v909 = vadd.f32 %v815, %v897
      %v910 = vadd.f32 %v816, %v900
      %v913 = vrot.slane %v464, 1
      %v914 = vrot.slane %v465, 1
      %v915 = vsel %vm489, %v913, %v914
      %v917 = vpack.c.bf16 %v498, %v495
      %v918 = vpack.c.bf16 %v504, %v501
      %v919 = vpack.c.bf16 %v510, %v507
      %v920 = vpack.c.bf16 %v915, %v513
      %s921 = scalar_lea.vmem %s3, 16
      %v922 = vld [vmem:[%s921] sm:$0xf]
      %v924 = vsel %vm528, %v917, 0
      %v927 = vsel %vm528, %v918, 0
      %v930 = vsel %vm528, %v919, 0
      %v933 = vsel %vm528, %v920, 0
      %v936 = vsel %vm541, %v922, 0
      %938 = vmatprep.subr.bf16.mxu0 0
      %939 = vmatpush1.bf16.msra.mxu0 0
      %940 = vmatprep.subr.bf16.mxu0 0
      %941 = vmatpush1.bf16.msra.mxu0 0
      %942 = vmatprep.subr.bf16.mxu0 0
      %943 = vmatpush1.bf16.msra.mxu0 0
      %944 = vmatprep.subr.bf16.mxu0 0
      %945 = vmatpush1.bf16.msra.mxu0 0
      %946 = vmatprep.subr.bf16.mxu0 0
      %947 = vmatpush1.bf16.msra.mxu0 0
      %948 = vmatprep.subr.bf16.mxu0 0
      %949 = vmatpush1.bf16.msra.mxu0 0
      %950 = vmatprep.subr.bf16.mxu0 0
      %951 = vmatpush1.bf16.msra.mxu0 0
      %952 = vmatprep.subr.bf16.mxu0 0
      %953 = vmatpush1.bf16.msra.mxu0 %v936
      %954 = vmatprep.subr.bf16.mxu0 0
      %955 = vmatpush2.bf16.msra.mxu0 0
      %956 = vmatprep.subr.bf16.mxu0 0
      %957 = vmatpush2.bf16.msra.mxu0 0
      %958 = vmatprep.subr.bf16.mxu0 0
      %959 = vmatpush2.bf16.msra.mxu0 0
      %960 = vmatprep.subr.bf16.mxu0 0
      %961 = vmatpush2.bf16.msra.mxu0 0
      %962 = vmatprep.subr.bf16.mxu0 0
      %963 = vmatpush2.bf16.msra.mxu0 0
      %964 = vmatprep.subr.bf16.mxu0 0
      %965 = vmatpush2.bf16.msra.mxu0 0
      %966 = vmatprep.subr.bf16.mxu0 0
      %967 = vmatpush2.bf16.msra.mxu0 0
      %968 = vmatprep.subr.bf16.mxu0 0
      %969 = vmatpush2.bf16.msra.mxu0 0
      %970 = vmatprep.mubr.bf16.mxu0 0
      %971 = vmatmul.mubr.bf16.gmra.mxu0 %v924
      %v972 = vpop.f32.mrf.mxu0
      %v973 = vadd.f32 0.0, %v972
      %v974 = vpop.f32.mrf.mxu0
      %v975 = vpop.f32.mrf.mxu0
      %v976 = vadd.f32 0.0, %v975
      %v977 = vpop.f32.mrf.mxu0
      %978 = vmatprep.mubr.bf16.mxu0 0
      %979 = vmatmul.mubr.bf16.gmra.mxu0 %v927
      %v980 = vpop.f32.mrf.mxu0
      %v981 = vadd.f32 0.0, %v980
      %v982 = vpop.f32.mrf.mxu0
      %v983 = vpop.f32.mrf.mxu0
      %v984 = vadd.f32 0.0, %v983
      %v985 = vpop.f32.mrf.mxu0
      %986 = vmatprep.mubr.bf16.mxu0 0
      %987 = vmatmul.mubr.bf16.gmra.mxu0 %v930
      %v988 = vpop.f32.mrf.mxu0
      %v989 = vadd.f32 0.0, %v988
      %v990 = vpop.f32.mrf.mxu0
      %v991 = vpop.f32.mrf.mxu0
      %v992 = vadd.f32 0.0, %v991
      %v993 = vpop.f32.mrf.mxu0
      %994 = vmatprep.mubr.bf16.mxu0 0
      %995 = vmatmul.mubr.bf16.gmra.mxu0 %v933
      %v996 = vpop.f32.mrf.mxu0
      %v997 = vadd.f32 0.0, %v996
      %v998 = vpop.f32.mrf.mxu0
      %v999 = vpop.f32.mrf.mxu0
      %v1000 = vadd.f32 0.0, %v999
      %v1001 = vpop.f32.mrf.mxu0
      %1002 = vdwg.mxu0
      %v1003 = vadd.f32 %v903, %v973
      %v1004 = vadd.f32 %v904, %v976
      %v1005 = vadd.f32 %v905, %v981
      %v1006 = vadd.f32 %v906, %v984
      %v1007 = vadd.f32 %v907, %v989
      %v1008 = vadd.f32 %v908, %v992
      %v1009 = vadd.f32 %v909, %v997
      %v1010 = vadd.f32 %v910, %v1000
      %v1011 = vrot.slane %v464, 2
      %v1012 = vrot.slane %v465, 2
      %v1013 = vsel %vm690, %v1011, %v1012
      %v1015 = vpack.c.bf16 %v699, %v696
      %v1016 = vpack.c.bf16 %v705, %v702
      %v1017 = vpack.c.bf16 %v711, %v708
      %v1018 = vpack.c.bf16 %v1013, %v714
      %s1019 = scalar_lea.vmem %s3, 20
      %v1020 = vld [vmem:[%s1019] sm:$0xf]
      %v1022 = vsel %vm528, %v1015, 0
      %v1025 = vsel %vm528, %v1016, 0
      %v1028 = vsel %vm528, %v1017, 0
      %v1031 = vsel %vm528, %v1018, 0
      %v1034 = vsel %vm541, %v1020, 0
      %1036 = vmatprep.subr.bf16.mxu0 0
      %1037 = vmatpush1.bf16.msra.mxu0 0
      %1038 = vmatprep.subr.bf16.mxu0 0
      %1039 = vmatpush1.bf16.msra.mxu0 0
      %1040 = vmatprep.subr.bf16.mxu0 0
      %1041 = vmatpush1.bf16.msra.mxu0 0
      %1042 = vmatprep.subr.bf16.mxu0 0
      %1043 = vmatpush1.bf16.msra.mxu0 0
      %1044 = vmatprep.subr.bf16.mxu0 0
      %1045 = vmatpush1.bf16.msra.mxu0 0
      %1046 = vmatprep.subr.bf16.mxu0 0
      %1047 = vmatpush1.bf16.msra.mxu0 0
      %1048 = vmatprep.subr.bf16.mxu0 0
      %1049 = vmatpush1.bf16.msra.mxu0 0
      %1050 = vmatprep.subr.bf16.mxu0 0
      %1051 = vmatpush1.bf16.msra.mxu0 %v1034
      %1052 = vmatprep.subr.bf16.mxu0 0
      %1053 = vmatpush2.bf16.msra.mxu0 0
      %1054 = vmatprep.subr.bf16.mxu0 0
      %1055 = vmatpush2.bf16.msra.mxu0 0
      %1056 = vmatprep.subr.bf16.mxu0 0
      %1057 = vmatpush2.bf16.msra.mxu0 0
      %1058 = vmatprep.subr.bf16.mxu0 0
      %1059 = vmatpush2.bf16.msra.mxu0 0
      %1060 = vmatprep.subr.bf16.mxu0 0
      %1061 = vmatpush2.bf16.msra.mxu0 0
      %1062 = vmatprep.subr.bf16.mxu0 0
      %1063 = vmatpush2.bf16.msra.mxu0 0
      %1064 = vmatprep.subr.bf16.mxu0 0
      %1065 = vmatpush2.bf16.msra.mxu0 0
      %1066 = vmatprep.subr.bf16.mxu0 0
      %1067 = vmatpush2.bf16.msra.mxu0 0
      %1068 = vmatprep.mubr.bf16.mxu0 0
      %1069 = vmatmul.mubr.bf16.gmra.mxu0 %v1022
      %v1070 = vpop.f32.mrf.mxu0
      %v1071 = vadd.f32 0.0, %v1070
      %v1072 = vpop.f32.mrf.mxu0
      %v1073 = vpop.f32.mrf.mxu0
      %v1074 = vadd.f32 0.0, %v1073
      %v1075 = vpop.f32.mrf.mxu0
      %1076 = vmatprep.mubr.bf16.mxu0 0
      %1077 = vmatmul.mubr.bf16.gmra.mxu0 %v1025
      %v1078 = vpop.f32.mrf.mxu0
      %v1079 = vadd.f32 0.0, %v1078
      %v1080 = vpop.f32.mrf.mxu0
      %v1081 = vpop.f32.mrf.mxu0
      %v1082 = vadd.f32 0.0, %v1081
      %v1083 = vpop.f32.mrf.mxu0
      %1084 = vmatprep.mubr.bf16.mxu0 0
      %1085 = vmatmul.mubr.bf16.gmra.mxu0 %v1028
      %v1086 = vpop.f32.mrf.mxu0
      %v1087 = vadd.f32 0.0, %v1086
      %v1088 = vpop.f32.mrf.mxu0
      %v1089 = vpop.f32.mrf.mxu0
      %v1090 = vadd.f32 0.0, %v1089
      %v1091 = vpop.f32.mrf.mxu0
      %1092 = vmatprep.mubr.bf16.mxu0 0
      %1093 = vmatmul.mubr.bf16.gmra.mxu0 %v1031
      %v1094 = vpop.f32.mrf.mxu0
      %v1095 = vadd.f32 0.0, %v1094
      %v1096 = vpop.f32.mrf.mxu0
      %v1097 = vpop.f32.mrf.mxu0
      %v1098 = vadd.f32 0.0, %v1097
      %v1099 = vpop.f32.mrf.mxu0
      %1100 = vdwg.mxu0
      %v1101 = vadd.f32 %v1003, %v1071
      %v1102 = vadd.f32 %v1004, %v1074
      %v1103 = vadd.f32 %v1005, %v1079
      %v1104 = vadd.f32 %v1006, %v1082
      %v1105 = vadd.f32 %v1007, %v1087
      %v1106 = vadd.f32 %v1008, %v1090
      %v1107 = vadd.f32 %v1009, %v1095
      %v1108 = vadd.f32 %v1010, %v1098
      %v1109 = vpack.c.bf16 %v466, %v464
      %s1110 = scalar_lea.vmem %s3, 24
      %v1111 = vld [vmem:[%s1110] sm:$0xf]
      %v1113 = vsel %vm528, %v1109, 0
      %v1116 = vsel %vm541, %v1111, 0
      %1118 = vmatprep.subr.bf16.mxu0 0
      %1119 = vmatpush1.bf16.msra.mxu0 0
      %1120 = vmatprep.subr.bf16.mxu0 0
      %1121 = vmatpush1.bf16.msra.mxu0 0
      %1122 = vmatprep.subr.bf16.mxu0 0
      %1123 = vmatpush1.bf16.msra.mxu0 0
      %1124 = vmatprep.subr.bf16.mxu0 0
      %1125 = vmatpush1.bf16.msra.mxu0 0
      %1126 = vmatprep.subr.bf16.mxu0 0
      %1127 = vmatpush1.bf16.msra.mxu0 0
      %1128 = vmatprep.subr.bf16.mxu0 0
      %1129 = vmatpush1.bf16.msra.mxu0 0
      %1130 = vmatprep.subr.bf16.mxu0 0
      %1131 = vmatpush1.bf16.msra.mxu0 0
      %1132 = vmatprep.subr.bf16.mxu0 0
      %1133 = vmatpush1.bf16.msra.mxu0 %v1116
      %1134 = vmatprep.subr.bf16.mxu0 0
      %1135 = vmatpush2.bf16.msra.mxu0 0
      %1136 = vmatprep.subr.bf16.mxu0 0
      %1137 = vmatpush2.bf16.msra.mxu0 0
      %1138 = vmatprep.subr.bf16.mxu0 0
      %1139 = vmatpush2.bf16.msra.mxu0 0
      %1140 = vmatprep.subr.bf16.mxu0 0
      %1141 = vmatpush2.bf16.msra.mxu0 0
      %1142 = vmatprep.subr.bf16.mxu0 0
      %1143 = vmatpush2.bf16.msra.mxu0 0
      %1144 = vmatprep.subr.bf16.mxu0 0
      %1145 = vmatpush2.bf16.msra.mxu0 0
      %1146 = vmatprep.subr.bf16.mxu0 0
      %1147 = vmatpush2.bf16.msra.mxu0 0
      %1148 = vmatprep.subr.bf16.mxu0 0
      %1149 = vmatpush2.bf16.msra.mxu0 0
      %1150 = vmatprep.mubr.bf16.mxu0 0
      %1151 = vmatmul.mubr.bf16.gmra.mxu0 %v614
      %v1152 = vpop.f32.mrf.mxu0
      %v1153 = vadd.f32 0.0, %v1152
      %v1154 = vpop.f32.mrf.mxu0
      %v1155 = vpop.f32.mrf.mxu0
      %v1156 = vadd.f32 0.0, %v1155
      %v1157 = vpop.f32.mrf.mxu0
      %1158 = vmatprep.mubr.bf16.mxu0 0
      %1159 = vmatmul.mubr.bf16.gmra.mxu0 %v617
      %v1160 = vpop.f32.mrf.mxu0
      %v1161 = vadd.f32 0.0, %v1160
      %v1162 = vpop.f32.mrf.mxu0
      %v1163 = vpop.f32.mrf.mxu0
      %v1164 = vadd.f32 0.0, %v1163
      %v1165 = vpop.f32.mrf.mxu0
      %1166 = vmatprep.mubr.bf16.mxu0 0
      %1167 = vmatmul.mubr.bf16.gmra.mxu0 %v620
      %v1168 = vpop.f32.mrf.mxu0
      %v1169 = vadd.f32 0.0, %v1168
      %v1170 = vpop.f32.mrf.mxu0
      %v1171 = vpop.f32.mrf.mxu0
      %v1172 = vadd.f32 0.0, %v1171
      %v1173 = vpop.f32.mrf.mxu0
      %1174 = vmatprep.mubr.bf16.mxu0 0
      %1175 = vmatmul.mubr.bf16.gmra.mxu0 %v1113
      %v1176 = vpop.f32.mrf.mxu0
      %v1177 = vadd.f32 0.0, %v1176
      %v1178 = vpop.f32.mrf.mxu0
      %v1179 = vpop.f32.mrf.mxu0
      %v1180 = vadd.f32 0.0, %v1179
      %v1181 = vpop.f32.mrf.mxu0
      %1182 = vdwg.mxu0
      %v1183 = vadd.f32 %v1101, %v1153
      %v1184 = vadd.f32 %v1102, %v1156
      %v1185 = vadd.f32 %v1103, %v1161
      %v1186 = vadd.f32 %v1104, %v1164
      %v1187 = vadd.f32 %v1105, %v1169
      %v1188 = vadd.f32 %v1106, %v1172
      %v1189 = vadd.f32 %v1107, %v1177
      %v1190 = vadd.f32 %v1108, %v1180
      %v1193 = vrot.slane %v466, 1
      %v1194 = vrot.slane %v467, 1
      %v1195 = vsel %vm489, %v1193, %v1194
      %v1197 = vpack.c.bf16 %v1195, %v915
      %s1198 = scalar_lea.vmem %s3, 28
      %v1199 = vld [vmem:[%s1198] sm:$0xf]
      %v1201 = vsel %vm528, %v1197, 0
      %v1204 = vsel %vm541, %v1199, 0
      %1206 = vmatprep.subr.bf16.mxu0 0
      %1207 = vmatpush1.bf16.msra.mxu0 0
      %1208 = vmatprep.subr.bf16.mxu0 0
      %1209 = vmatpush1.bf16.msra.mxu0 0
      %1210 = vmatprep.subr.bf16.mxu0 0
      %1211 = vmatpush1.bf16.msra.mxu0 0
      %1212 = vmatprep.subr.bf16.mxu0 0
      %1213 = vmatpush1.bf16.msra.mxu0 0
      %1214 = vmatprep.subr.bf16.mxu0 0
      %1215 = vmatpush1.bf16.msra.mxu0 0
      %1216 = vmatprep.subr.bf16.mxu0 0
      %1217 = vmatpush1.bf16.msra.mxu0 0
      %1218 = vmatprep.subr.bf16.mxu0 0
      %1219 = vmatpush1.bf16.msra.mxu0 0
      %1220 = vmatprep.subr.bf16.mxu0 0
      %1221 = vmatpush1.bf16.msra.mxu0 %v1204
      %1222 = vmatprep.subr.bf16.mxu0 0
      %1223 = vmatpush2.bf16.msra.mxu0 0
      %1224 = vmatprep.subr.bf16.mxu0 0
      %1225 = vmatpush2.bf16.msra.mxu0 0
      %1226 = vmatprep.subr.bf16.mxu0 0
      %1227 = vmatpush2.bf16.msra.mxu0 0
      %1228 = vmatprep.subr.bf16.mxu0 0
      %1229 = vmatpush2.bf16.msra.mxu0 0
      %1230 = vmatprep.subr.bf16.mxu0 0
      %1231 = vmatpush2.bf16.msra.mxu0 0
      %1232 = vmatprep.subr.bf16.mxu0 0
      %1233 = vmatpush2.bf16.msra.mxu0 0
      %1234 = vmatprep.subr.bf16.mxu0 0
      %1235 = vmatpush2.bf16.msra.mxu0 0
      %1236 = vmatprep.subr.bf16.mxu0 0
      %1237 = vmatpush2.bf16.msra.mxu0 0
      %1238 = vmatprep.mubr.bf16.mxu0 0
      %1239 = vmatmul.mubr.bf16.gmra.mxu0 %v533
      %v1240 = vpop.f32.mrf.mxu0
      %v1241 = vadd.f32 0.0, %v1240
      %v1242 = vpop.f32.mrf.mxu0
      %v1243 = vpop.f32.mrf.mxu0
      %v1244 = vadd.f32 0.0, %v1243
      %v1245 = vpop.f32.mrf.mxu0
      %1246 = vmatprep.mubr.bf16.mxu0 0
      %1247 = vmatmul.mubr.bf16.gmra.mxu0 %v536
      %v1248 = vpop.f32.mrf.mxu0
      %v1249 = vadd.f32 0.0, %v1248
      %v1250 = vpop.f32.mrf.mxu0
      %v1251 = vpop.f32.mrf.mxu0
      %v1252 = vadd.f32 0.0, %v1251
      %v1253 = vpop.f32.mrf.mxu0
      %1254 = vmatprep.mubr.bf16.mxu0 0
      %1255 = vmatmul.mubr.bf16.gmra.mxu0 %v539
      %v1256 = vpop.f32.mrf.mxu0
      %v1257 = vadd.f32 0.0, %v1256
      %v1258 = vpop.f32.mrf.mxu0
      %v1259 = vpop.f32.mrf.mxu0
      %v1260 = vadd.f32 0.0, %v1259
      %v1261 = vpop.f32.mrf.mxu0
      %1262 = vmatprep.mubr.bf16.mxu0 0
      %1263 = vmatmul.mubr.bf16.gmra.mxu0 %v1201
      %v1264 = vpop.f32.mrf.mxu0
      %v1265 = vadd.f32 0.0, %v1264
      %v1266 = vpop.f32.mrf.mxu0
      %v1267 = vpop.f32.mrf.mxu0
      %v1268 = vadd.f32 0.0, %v1267
      %v1269 = vpop.f32.mrf.mxu0
      %1270 = vdwg.mxu0
      %v1271 = vadd.f32 %v1183, %v1241
      %v1272 = vadd.f32 %v1184, %v1244
      %v1273 = vadd.f32 %v1185, %v1249
      %v1274 = vadd.f32 %v1186, %v1252
      %v1275 = vadd.f32 %v1187, %v1257
      %v1276 = vadd.f32 %v1188, %v1260
      %v1277 = vadd.f32 %v1189, %v1265
      %v1278 = vadd.f32 %v1190, %v1268
      %v1279 = vrot.slane %v466, 2
      %v1280 = vrot.slane %v467, 2
      %v1281 = vsel %vm690, %v1279, %v1280
      %v1283 = vpack.c.bf16 %v1281, %v1013
      %s1284 = scalar_lea.vmem %s3, 32
      %v1285 = vld [vmem:[%s1284] sm:$0xf]
      %v1287 = vsel %vm528, %v1283, 0
      %v1290 = vsel %vm541, %v1285, 0
      %1292 = vmatprep.subr.bf16.mxu0 0
      %1293 = vmatpush1.bf16.msra.mxu0 0
      %1294 = vmatprep.subr.bf16.mxu0 0
      %1295 = vmatpush1.bf16.msra.mxu0 0
      %1296 = vmatprep.subr.bf16.mxu0 0
      %1297 = vmatpush1.bf16.msra.mxu0 0
      %1298 = vmatprep.subr.bf16.mxu0 0
      %1299 = vmatpush1.bf16.msra.mxu0 0
      %1300 = vmatprep.subr.bf16.mxu0 0
      %1301 = vmatpush1.bf16.msra.mxu0 0
      %1302 = vmatprep.subr.bf16.mxu0 0
      %1303 = vmatpush1.bf16.msra.mxu0 0
      %1304 = vmatprep.subr.bf16.mxu0 0
      %1305 = vmatpush1.bf16.msra.mxu0 0
      %1306 = vmatprep.subr.bf16.mxu0 0
      %1307 = vmatpush1.bf16.msra.mxu0 %v1290
      %1308 = vmatprep.subr.bf16.mxu0 0
      %1309 = vmatpush2.bf16.msra.mxu0 0
      %1310 = vmatprep.subr.bf16.mxu0 0
      %1311 = vmatpush2.bf16.msra.mxu0 0
      %1312 = vmatprep.subr.bf16.mxu0 0
      %1313 = vmatpush2.bf16.msra.mxu0 0
      %1314 = vmatprep.subr.bf16.mxu0 0
      %1315 = vmatpush2.bf16.msra.mxu0 0
      %1316 = vmatprep.subr.bf16.mxu0 0
      %1317 = vmatpush2.bf16.msra.mxu0 0
      %1318 = vmatprep.subr.bf16.mxu0 0
      %1319 = vmatpush2.bf16.msra.mxu0 0
      %1320 = vmatprep.subr.bf16.mxu0 0
      %1321 = vmatpush2.bf16.msra.mxu0 0
      %1322 = vmatprep.subr.bf16.mxu0 0
      %1323 = vmatpush2.bf16.msra.mxu0 0
      %1324 = vmatprep.mubr.bf16.mxu0 0
      %1325 = vmatmul.mubr.bf16.gmra.mxu0 %v733
      %v1326 = vpop.f32.mrf.mxu0
      %v1327 = vadd.f32 0.0, %v1326
      %v1328 = vpop.f32.mrf.mxu0
      %v1329 = vpop.f32.mrf.mxu0
      %v1330 = vadd.f32 0.0, %v1329
      %v1331 = vpop.f32.mrf.mxu0
      %1332 = vmatprep.mubr.bf16.mxu0 0
      %1333 = vmatmul.mubr.bf16.gmra.mxu0 %v736
      %v1334 = vpop.f32.mrf.mxu0
      %v1335 = vadd.f32 0.0, %v1334
      %v1336 = vpop.f32.mrf.mxu0
      %v1337 = vpop.f32.mrf.mxu0
      %v1338 = vadd.f32 0.0, %v1337
      %v1339 = vpop.f32.mrf.mxu0
      %1340 = vmatprep.mubr.bf16.mxu0 0
      %1341 = vmatmul.mubr.bf16.gmra.mxu0 %v739
      %v1342 = vpop.f32.mrf.mxu0
      %v1343 = vadd.f32 0.0, %v1342
      %v1344 = vpop.f32.mrf.mxu0
      %v1345 = vpop.f32.mrf.mxu0
      %v1346 = vadd.f32 0.0, %v1345
      %v1347 = vpop.f32.mrf.mxu0
      %1348 = vmatprep.mubr.bf16.mxu0 0
      %1349 = vmatmul.mubr.bf16.gmra.mxu0 %v1287
      %v1350 = vpop.f32.mrf.mxu0
      %v1351 = vadd.f32 0.0, %v1350
      %v1352 = vpop.f32.mrf.mxu0
      %v1353 = vpop.f32.mrf.mxu0
      %v1354 = vadd.f32 0.0, %v1353
      %v1355 = vpop.f32.mrf.mxu0
      %1356 = vdwg.mxu0
      %v1357 = vadd.f32 %v1271, %v1327
      %v1358 = vadd.f32 %v1272, %v1330
      %v1359 = vadd.f32 %v1273, %v1335
      %v1360 = vadd.f32 %v1274, %v1338
      %v1361 = vadd.f32 %v1275, %v1343
      %v1362 = vadd.f32 %v1276, %v1346
      %v1363 = vadd.f32 %v1277, %v1351
      %v1364 = vadd.f32 %v1278, %v1354
      %v1365 = vunpack.c.l.bf16 %v408
      %v1366 = vunpack.c.l.bf16 %v409
      %v1367 = vunpack.c.l.bf16 %v410
      %v1368 = vunpack.c.l.bf16 %v411
      %v1369 = vunpack.c.l.bf16 %v412
      %v1370 = vunpack.c.l.bf16 %v413
      %v1371 = vunpack.c.l.bf16 %v414
      %v1372 = vunpack.c.l.bf16 %v415
      %v1373 = vunpack.c.l.bf16 %v416
      %v1374 = vunpack.c.l.bf16 %v417
      %v1375 = vunpack.c.l.bf16 %v418
      %v1376 = vunpack.c.l.bf16 %v419
      %v1377 = vunpack.c.l.bf16 %v420
      %v1378 = vunpack.c.l.bf16 %v421
      %v1379 = vunpack.c.l.bf16 %v422
      %v1380 = vunpack.c.l.bf16 %v423
      %v1381 = vunpack.c.l.bf16 %v424
      %v1382 = vunpack.c.l.bf16 %v425
      %v1383 = vunpack.c.l.bf16 %v426
      %v1384 = vunpack.c.l.bf16 %v427
      %v1385 = vpack.c.bf16 %v1367, %v1365
      %v1386 = vpack.c.bf16 %v1371, %v1369
      %v1387 = vpack.c.bf16 %v1375, %v1373
      %v1388 = vpack.c.bf16 %v1379, %v1377
      %s1389 = scalar_lea.vmem %s3, 36
      %v1390 = vld [vmem:[%s1389] sm:$0xf]
      %v1392 = vsel %vm528, %v1385, 0
      %v1395 = vsel %vm528, %v1386, 0
      %v1398 = vsel %vm528, %v1387, 0
      %v1401 = vsel %vm528, %v1388, 0
      %v1404 = vsel %vm541, %v1390, 0
      %1406 = vmatprep.subr.bf16.mxu0 0
      %1407 = vmatpush1.bf16.msra.mxu0 0
      %1408 = vmatprep.subr.bf16.mxu0 0
      %1409 = vmatpush1.bf16.msra.mxu0 0
      %1410 = vmatprep.subr.bf16.mxu0 0
      %1411 = vmatpush1.bf16.msra.mxu0 0
      %1412 = vmatprep.subr.bf16.mxu0 0
      %1413 = vmatpush1.bf16.msra.mxu0 0
      %1414 = vmatprep.subr.bf16.mxu0 0
      %1415 = vmatpush1.bf16.msra.mxu0 0
      %1416 = vmatprep.subr.bf16.mxu0 0
      %1417 = vmatpush1.bf16.msra.mxu0 0
      %1418 = vmatprep.subr.bf16.mxu0 0
      %1419 = vmatpush1.bf16.msra.mxu0 0
      %1420 = vmatprep.subr.bf16.mxu0 0
      %1421 = vmatpush1.bf16.msra.mxu0 %v1404
      %1422 = vmatprep.subr.bf16.mxu0 0
      %1423 = vmatpush2.bf16.msra.mxu0 0
      %1424 = vmatprep.subr.bf16.mxu0 0
      %1425 = vmatpush2.bf16.msra.mxu0 0
      %1426 = vmatprep.subr.bf16.mxu0 0
      %1427 = vmatpush2.bf16.msra.mxu0 0
      %1428 = vmatprep.subr.bf16.mxu0 0
      %1429 = vmatpush2.bf16.msra.mxu0 0
      %1430 = vmatprep.subr.bf16.mxu0 0
      %1431 = vmatpush2.bf16.msra.mxu0 0
      %1432 = vmatprep.subr.bf16.mxu0 0
      %1433 = vmatpush2.bf16.msra.mxu0 0
      %1434 = vmatprep.subr.bf16.mxu0 0
      %1435 = vmatpush2.bf16.msra.mxu0 0
      %1436 = vmatprep.subr.bf16.mxu0 0
      %1437 = vmatpush2.bf16.msra.mxu0 0
      %1438 = vmatprep.mubr.bf16.mxu0 0
      %1439 = vmatmul.mubr.bf16.gmra.mxu0 %v1392
      %v1440 = vpop.f32.mrf.mxu0
      %v1441 = vadd.f32 0.0, %v1440
      %v1442 = vpop.f32.mrf.mxu0
      %v1443 = vpop.f32.mrf.mxu0
      %v1444 = vadd.f32 0.0, %v1443
      %v1445 = vpop.f32.mrf.mxu0
      %1446 = vmatprep.mubr.bf16.mxu0 0
      %1447 = vmatmul.mubr.bf16.gmra.mxu0 %v1395
      %v1448 = vpop.f32.mrf.mxu0
      %v1449 = vadd.f32 0.0, %v1448
      %v1450 = vpop.f32.mrf.mxu0
      %v1451 = vpop.f32.mrf.mxu0
      %v1452 = vadd.f32 0.0, %v1451
      %v1453 = vpop.f32.mrf.mxu0
      %1454 = vmatprep.mubr.bf16.mxu0 0
      %1455 = vmatmul.mubr.bf16.gmra.mxu0 %v1398
      %v1456 = vpop.f32.mrf.mxu0
      %v1457 = vadd.f32 0.0, %v1456
      %v1458 = vpop.f32.mrf.mxu0
      %v1459 = vpop.f32.mrf.mxu0
      %v1460 = vadd.f32 0.0, %v1459
      %v1461 = vpop.f32.mrf.mxu0
      %1462 = vmatprep.mubr.bf16.mxu0 0
      %1463 = vmatmul.mubr.bf16.gmra.mxu0 %v1401
      %v1464 = vpop.f32.mrf.mxu0
      %v1465 = vadd.f32 0.0, %v1464
      %v1466 = vpop.f32.mrf.mxu0
      %v1467 = vpop.f32.mrf.mxu0
      %v1468 = vadd.f32 0.0, %v1467
      %v1469 = vpop.f32.mrf.mxu0
      %1470 = vdwg.mxu0
      %v1471 = vadd.f32 %v1357, %v1441
      %v1472 = vadd.f32 %v1358, %v1444
      %v1473 = vadd.f32 %v1359, %v1449
      %v1474 = vadd.f32 %v1360, %v1452
      %v1475 = vadd.f32 %v1361, %v1457
      %v1476 = vadd.f32 %v1362, %v1460
      %v1477 = vadd.f32 %v1363, %v1465
      %v1478 = vadd.f32 %v1364, %v1468
      %v1495 = vrot.slane %v1365, 1
      %v1496 = vrot.slane %v1366, 1
      %v1497 = vsel %vm489, %v1495, %v1496
      %v1498 = vrot.slane %v1367, 1
      %v1499 = vrot.slane %v1368, 1
      %v1500 = vsel %vm489, %v1498, %v1499
      %v1501 = vrot.slane %v1369, 1
      %v1502 = vrot.slane %v1370, 1
      %v1503 = vsel %vm489, %v1501, %v1502
      %v1504 = vrot.slane %v1371, 1
      %v1505 = vrot.slane %v1372, 1
      %v1506 = vsel %vm489, %v1504, %v1505
      %v1507 = vrot.slane %v1373, 1
      %v1508 = vrot.slane %v1374, 1
      %v1509 = vsel %vm489, %v1507, %v1508
      %v1510 = vrot.slane %v1375, 1
      %v1511 = vrot.slane %v1376, 1
      %v1512 = vsel %vm489, %v1510, %v1511
      %v1513 = vrot.slane %v1377, 1
      %v1514 = vrot.slane %v1378, 1
      %v1515 = vsel %vm489, %v1513, %v1514
      %v1516 = vrot.slane %v1379, 1
      %v1517 = vrot.slane %v1380, 1
      %v1518 = vsel %vm489, %v1516, %v1517
      %v1527 = vpack.c.bf16 %v1500, %v1497
      %v1528 = vpack.c.bf16 %v1506, %v1503
      %v1529 = vpack.c.bf16 %v1512, %v1509
      %v1530 = vpack.c.bf16 %v1518, %v1515
      %s1531 = scalar_lea.vmem %s3, 40
      %v1532 = vld [vmem:[%s1531] sm:$0xf]
      %v1534 = vsel %vm528, %v1527, 0
      %v1537 = vsel %vm528, %v1528, 0
      %v1540 = vsel %vm528, %v1529, 0
      %v1543 = vsel %vm528, %v1530, 0
      %v1546 = vsel %vm541, %v1532, 0
      %1548 = vmatprep.subr.bf16.mxu0 0
      %1549 = vmatpush1.bf16.msra.mxu0 0
      %1550 = vmatprep.subr.bf16.mxu0 0
      %1551 = vmatpush1.bf16.msra.mxu0 0
      %1552 = vmatprep.subr.bf16.mxu0 0
      %1553 = vmatpush1.bf16.msra.mxu0 0
      %1554 = vmatprep.subr.bf16.mxu0 0
      %1555 = vmatpush1.bf16.msra.mxu0 0
      %1556 = vmatprep.subr.bf16.mxu0 0
      %1557 = vmatpush1.bf16.msra.mxu0 0
      %1558 = vmatprep.subr.bf16.mxu0 0
      %1559 = vmatpush1.bf16.msra.mxu0 0
      %1560 = vmatprep.subr.bf16.mxu0 0
      %1561 = vmatpush1.bf16.msra.mxu0 0
      %1562 = vmatprep.subr.bf16.mxu0 0
      %1563 = vmatpush1.bf16.msra.mxu0 %v1546
      %1564 = vmatprep.subr.bf16.mxu0 0
      %1565 = vmatpush2.bf16.msra.mxu0 0
      %1566 = vmatprep.subr.bf16.mxu0 0
      %1567 = vmatpush2.bf16.msra.mxu0 0
      %1568 = vmatprep.subr.bf16.mxu0 0
      %1569 = vmatpush2.bf16.msra.mxu0 0
      %1570 = vmatprep.subr.bf16.mxu0 0
      %1571 = vmatpush2.bf16.msra.mxu0 0
      %1572 = vmatprep.subr.bf16.mxu0 0
      %1573 = vmatpush2.bf16.msra.mxu0 0
      %1574 = vmatprep.subr.bf16.mxu0 0
      %1575 = vmatpush2.bf16.msra.mxu0 0
      %1576 = vmatprep.subr.bf16.mxu0 0
      %1577 = vmatpush2.bf16.msra.mxu0 0
      %1578 = vmatprep.subr.bf16.mxu0 0
      %1579 = vmatpush2.bf16.msra.mxu0 0
      %1580 = vmatprep.mubr.bf16.mxu0 0
      %1581 = vmatmul.mubr.bf16.gmra.mxu0 %v1534
      %v1582 = vpop.f32.mrf.mxu0
      %v1583 = vadd.f32 0.0, %v1582
      %v1584 = vpop.f32.mrf.mxu0
      %v1585 = vpop.f32.mrf.mxu0
      %v1586 = vadd.f32 0.0, %v1585
      %v1587 = vpop.f32.mrf.mxu0
      %1588 = vmatprep.mubr.bf16.mxu0 0
      %1589 = vmatmul.mubr.bf16.gmra.mxu0 %v1537
      %v1590 = vpop.f32.mrf.mxu0
      %v1591 = vadd.f32 0.0, %v1590
      %v1592 = vpop.f32.mrf.mxu0
      %v1593 = vpop.f32.mrf.mxu0
      %v1594 = vadd.f32 0.0, %v1593
      %v1595 = vpop.f32.mrf.mxu0
      %1596 = vmatprep.mubr.bf16.mxu0 0
      %1597 = vmatmul.mubr.bf16.gmra.mxu0 %v1540
      %v1598 = vpop.f32.mrf.mxu0
      %v1599 = vadd.f32 0.0, %v1598
      %v1600 = vpop.f32.mrf.mxu0
      %v1601 = vpop.f32.mrf.mxu0
      %v1602 = vadd.f32 0.0, %v1601
      %v1603 = vpop.f32.mrf.mxu0
      %1604 = vmatprep.mubr.bf16.mxu0 0
      %1605 = vmatmul.mubr.bf16.gmra.mxu0 %v1543
      %v1606 = vpop.f32.mrf.mxu0
      %v1607 = vadd.f32 0.0, %v1606
      %v1608 = vpop.f32.mrf.mxu0
      %v1609 = vpop.f32.mrf.mxu0
      %v1610 = vadd.f32 0.0, %v1609
      %v1611 = vpop.f32.mrf.mxu0
      %1612 = vdwg.mxu0
      %v1613 = vadd.f32 %v1471, %v1583
      %v1614 = vadd.f32 %v1472, %v1586
      %v1615 = vadd.f32 %v1473, %v1591
      %v1616 = vadd.f32 %v1474, %v1594
      %v1617 = vadd.f32 %v1475, %v1599
      %v1618 = vadd.f32 %v1476, %v1602
      %v1619 = vadd.f32 %v1477, %v1607
      %v1620 = vadd.f32 %v1478, %v1610
      %v1621 = vrot.slane %v1365, 2
      %v1622 = vrot.slane %v1366, 2
      %v1623 = vsel %vm690, %v1621, %v1622
      %v1624 = vrot.slane %v1367, 2
      %v1625 = vrot.slane %v1368, 2
      %v1626 = vsel %vm690, %v1624, %v1625
      %v1627 = vrot.slane %v1369, 2
      %v1628 = vrot.slane %v1370, 2
      %v1629 = vsel %vm690, %v1627, %v1628
      %v1630 = vrot.slane %v1371, 2
      %v1631 = vrot.slane %v1372, 2
      %v1632 = vsel %vm690, %v1630, %v1631
      %v1633 = vrot.slane %v1373, 2
      %v1634 = vrot.slane %v1374, 2
      %v1635 = vsel %vm690, %v1633, %v1634
      %v1636 = vrot.slane %v1375, 2
      %v1637 = vrot.slane %v1376, 2
      %v1638 = vsel %vm690, %v1636, %v1637
      %v1639 = vrot.slane %v1377, 2
      %v1640 = vrot.slane %v1378, 2
      %v1641 = vsel %vm690, %v1639, %v1640
      %v1642 = vrot.slane %v1379, 2
      %v1643 = vrot.slane %v1380, 2
      %v1644 = vsel %vm690, %v1642, %v1643
      %v1653 = vpack.c.bf16 %v1626, %v1623
      %v1654 = vpack.c.bf16 %v1632, %v1629
      %v1655 = vpack.c.bf16 %v1638, %v1635
      %v1656 = vpack.c.bf16 %v1644, %v1641
      %s1657 = scalar_lea.vmem %s3, 44
      %v1658 = vld [vmem:[%s1657] sm:$0xf]
      %v1660 = vsel %vm528, %v1653, 0
      %v1663 = vsel %vm528, %v1654, 0
      %v1666 = vsel %vm528, %v1655, 0
      %v1669 = vsel %vm528, %v1656, 0
      %v1672 = vsel %vm541, %v1658, 0
      %1674 = vmatprep.subr.bf16.mxu0 0
      %1675 = vmatpush1.bf16.msra.mxu0 0
      %1676 = vmatprep.subr.bf16.mxu0 0
      %1677 = vmatpush1.bf16.msra.mxu0 0
      %1678 = vmatprep.subr.bf16.mxu0 0
      %1679 = vmatpush1.bf16.msra.mxu0 0
      %1680 = vmatprep.subr.bf16.mxu0 0
      %1681 = vmatpush1.bf16.msra.mxu0 0
      %1682 = vmatprep.subr.bf16.mxu0 0
      %1683 = vmatpush1.bf16.msra.mxu0 0
      %1684 = vmatprep.subr.bf16.mxu0 0
      %1685 = vmatpush1.bf16.msra.mxu0 0
      %1686 = vmatprep.subr.bf16.mxu0 0
      %1687 = vmatpush1.bf16.msra.mxu0 0
      %1688 = vmatprep.subr.bf16.mxu0 0
      %1689 = vmatpush1.bf16.msra.mxu0 %v1672
      %1690 = vmatprep.subr.bf16.mxu0 0
      %1691 = vmatpush2.bf16.msra.mxu0 0
      %1692 = vmatprep.subr.bf16.mxu0 0
      %1693 = vmatpush2.bf16.msra.mxu0 0
      %1694 = vmatprep.subr.bf16.mxu0 0
      %1695 = vmatpush2.bf16.msra.mxu0 0
      %1696 = vmatprep.subr.bf16.mxu0 0
      %1697 = vmatpush2.bf16.msra.mxu0 0
      %1698 = vmatprep.subr.bf16.mxu0 0
      %1699 = vmatpush2.bf16.msra.mxu0 0
      %1700 = vmatprep.subr.bf16.mxu0 0
      %1701 = vmatpush2.bf16.msra.mxu0 0
      %1702 = vmatprep.subr.bf16.mxu0 0
      %1703 = vmatpush2.bf16.msra.mxu0 0
      %1704 = vmatprep.subr.bf16.mxu0 0
      %1705 = vmatpush2.bf16.msra.mxu0 0
      %1706 = vmatprep.mubr.bf16.mxu0 0
      %1707 = vmatmul.mubr.bf16.gmra.mxu0 %v1660
      %v1708 = vpop.f32.mrf.mxu0
      %v1709 = vadd.f32 0.0, %v1708
      %v1710 = vpop.f32.mrf.mxu0
      %v1711 = vpop.f32.mrf.mxu0
      %v1712 = vadd.f32 0.0, %v1711
      %v1713 = vpop.f32.mrf.mxu0
      %1714 = vmatprep.mubr.bf16.mxu0 0
      %1715 = vmatmul.mubr.bf16.gmra.mxu0 %v1663
      %v1716 = vpop.f32.mrf.mxu0
      %v1717 = vadd.f32 0.0, %v1716
      %v1718 = vpop.f32.mrf.mxu0
      %v1719 = vpop.f32.mrf.mxu0
      %v1720 = vadd.f32 0.0, %v1719
      %v1721 = vpop.f32.mrf.mxu0
      %1722 = vmatprep.mubr.bf16.mxu0 0
      %1723 = vmatmul.mubr.bf16.gmra.mxu0 %v1666
      %v1724 = vpop.f32.mrf.mxu0
      %v1725 = vadd.f32 0.0, %v1724
      %v1726 = vpop.f32.mrf.mxu0
      %v1727 = vpop.f32.mrf.mxu0
      %v1728 = vadd.f32 0.0, %v1727
      %v1729 = vpop.f32.mrf.mxu0
      %1730 = vmatprep.mubr.bf16.mxu0 0
      %1731 = vmatmul.mubr.bf16.gmra.mxu0 %v1669
      %v1732 = vpop.f32.mrf.mxu0
      %v1733 = vadd.f32 0.0, %v1732
      %v1734 = vpop.f32.mrf.mxu0
      %v1735 = vpop.f32.mrf.mxu0
      %v1736 = vadd.f32 0.0, %v1735
      %v1737 = vpop.f32.mrf.mxu0
      %1738 = vdwg.mxu0
      %v1739 = vadd.f32 %v1613, %v1709
      %v1740 = vadd.f32 %v1614, %v1712
      %v1741 = vadd.f32 %v1615, %v1717
      %v1742 = vadd.f32 %v1616, %v1720
      %v1743 = vadd.f32 %v1617, %v1725
      %v1744 = vadd.f32 %v1618, %v1728
      %v1745 = vadd.f32 %v1619, %v1733
      %v1746 = vadd.f32 %v1620, %v1736
      %v1747 = vpack.c.bf16 %v1369, %v1367
      %v1748 = vpack.c.bf16 %v1373, %v1371
      %v1749 = vpack.c.bf16 %v1377, %v1375
      %v1750 = vpack.c.bf16 %v1381, %v1379
      %s1751 = scalar_lea.vmem %s3, 48
      %v1752 = vld [vmem:[%s1751] sm:$0xf]
      %v1754 = vsel %vm528, %v1747, 0
      %v1757 = vsel %vm528, %v1748, 0
      %v1760 = vsel %vm528, %v1749, 0
      %v1763 = vsel %vm528, %v1750, 0
      %v1766 = vsel %vm541, %v1752, 0
      %1768 = vmatprep.subr.bf16.mxu0 0
      %1769 = vmatpush1.bf16.msra.mxu0 0
      %1770 = vmatprep.subr.bf16.mxu0 0
      %1771 = vmatpush1.bf16.msra.mxu0 0
      %1772 = vmatprep.subr.bf16.mxu0 0
      %1773 = vmatpush1.bf16.msra.mxu0 0
      %1774 = vmatprep.subr.bf16.mxu0 0
      %1775 = vmatpush1.bf16.msra.mxu0 0
      %1776 = vmatprep.subr.bf16.mxu0 0
      %1777 = vmatpush1.bf16.msra.mxu0 0
      %1778 = vmatprep.subr.bf16.mxu0 0
      %1779 = vmatpush1.bf16.msra.mxu0 0
      %1780 = vmatprep.subr.bf16.mxu0 0
      %1781 = vmatpush1.bf16.msra.mxu0 0
      %1782 = vmatprep.subr.bf16.mxu0 0
      %1783 = vmatpush1.bf16.msra.mxu0 %v1766
      %1784 = vmatprep.subr.bf16.mxu0 0
      %1785 = vmatpush2.bf16.msra.mxu0 0
      %1786 = vmatprep.subr.bf16.mxu0 0
      %1787 = vmatpush2.bf16.msra.mxu0 0
      %1788 = vmatprep.subr.bf16.mxu0 0
      %1789 = vmatpush2.bf16.msra.mxu0 0
      %1790 = vmatprep.subr.bf16.mxu0 0
      %1791 = vmatpush2.bf16.msra.mxu0 0
      %1792 = vmatprep.subr.bf16.mxu0 0
      %1793 = vmatpush2.bf16.msra.mxu0 0
      %1794 = vmatprep.subr.bf16.mxu0 0
      %1795 = vmatpush2.bf16.msra.mxu0 0
      %1796 = vmatprep.subr.bf16.mxu0 0
      %1797 = vmatpush2.bf16.msra.mxu0 0
      %1798 = vmatprep.subr.bf16.mxu0 0
      %1799 = vmatpush2.bf16.msra.mxu0 0
      %1800 = vmatprep.mubr.bf16.mxu0 0
      %1801 = vmatmul.mubr.bf16.gmra.mxu0 %v1754
      %v1802 = vpop.f32.mrf.mxu0
      %v1803 = vadd.f32 0.0, %v1802
      %v1804 = vpop.f32.mrf.mxu0
      %v1805 = vpop.f32.mrf.mxu0
      %v1806 = vadd.f32 0.0, %v1805
      %v1807 = vpop.f32.mrf.mxu0
      %1808 = vmatprep.mubr.bf16.mxu0 0
      %1809 = vmatmul.mubr.bf16.gmra.mxu0 %v1757
      %v1810 = vpop.f32.mrf.mxu0
      %v1811 = vadd.f32 0.0, %v1810
      %v1812 = vpop.f32.mrf.mxu0
      %v1813 = vpop.f32.mrf.mxu0
      %v1814 = vadd.f32 0.0, %v1813
      %v1815 = vpop.f32.mrf.mxu0
      %1816 = vmatprep.mubr.bf16.mxu0 0
      %1817 = vmatmul.mubr.bf16.gmra.mxu0 %v1760
      %v1818 = vpop.f32.mrf.mxu0
      %v1819 = vadd.f32 0.0, %v1818
      %v1820 = vpop.f32.mrf.mxu0
      %v1821 = vpop.f32.mrf.mxu0
      %v1822 = vadd.f32 0.0, %v1821
      %v1823 = vpop.f32.mrf.mxu0
      %1824 = vmatprep.mubr.bf16.mxu0 0
      %1825 = vmatmul.mubr.bf16.gmra.mxu0 %v1763
      %v1826 = vpop.f32.mrf.mxu0
      %v1827 = vadd.f32 0.0, %v1826
      %v1828 = vpop.f32.mrf.mxu0
      %v1829 = vpop.f32.mrf.mxu0
      %v1830 = vadd.f32 0.0, %v1829
      %v1831 = vpop.f32.mrf.mxu0
      %1832 = vdwg.mxu0
      %v1833 = vadd.f32 %v1739, %v1803
      %v1834 = vadd.f32 %v1740, %v1806
      %v1835 = vadd.f32 %v1741, %v1811
      %v1836 = vadd.f32 %v1742, %v1814
      %v1837 = vadd.f32 %v1743, %v1819
      %v1838 = vadd.f32 %v1744, %v1822
      %v1839 = vadd.f32 %v1745, %v1827
      %v1840 = vadd.f32 %v1746, %v1830
      %v1843 = vrot.slane %v1381, 1
      %v1844 = vrot.slane %v1382, 1
      %v1845 = vsel %vm489, %v1843, %v1844
      %v1847 = vpack.c.bf16 %v1503, %v1500
      %v1848 = vpack.c.bf16 %v1509, %v1506
      %v1849 = vpack.c.bf16 %v1515, %v1512
      %v1850 = vpack.c.bf16 %v1845, %v1518
      %s1851 = scalar_lea.vmem %s3, 52
      %v1852 = vld [vmem:[%s1851] sm:$0xf]
      %v1854 = vsel %vm528, %v1847, 0
      %v1857 = vsel %vm528, %v1848, 0
      %v1860 = vsel %vm528, %v1849, 0
      %v1863 = vsel %vm528, %v1850, 0
      %v1866 = vsel %vm541, %v1852, 0
      %1868 = vmatprep.subr.bf16.mxu0 0
      %1869 = vmatpush1.bf16.msra.mxu0 0
      %1870 = vmatprep.subr.bf16.mxu0 0
      %1871 = vmatpush1.bf16.msra.mxu0 0
      %1872 = vmatprep.subr.bf16.mxu0 0
      %1873 = vmatpush1.bf16.msra.mxu0 0
      %1874 = vmatprep.subr.bf16.mxu0 0
      %1875 = vmatpush1.bf16.msra.mxu0 0
      %1876 = vmatprep.subr.bf16.mxu0 0
      %1877 = vmatpush1.bf16.msra.mxu0 0
      %1878 = vmatprep.subr.bf16.mxu0 0
      %1879 = vmatpush1.bf16.msra.mxu0 0
      %1880 = vmatprep.subr.bf16.mxu0 0
      %1881 = vmatpush1.bf16.msra.mxu0 0
      %1882 = vmatprep.subr.bf16.mxu0 0
      %1883 = vmatpush1.bf16.msra.mxu0 %v1866
      %1884 = vmatprep.subr.bf16.mxu0 0
      %1885 = vmatpush2.bf16.msra.mxu0 0
      %1886 = vmatprep.subr.bf16.mxu0 0
      %1887 = vmatpush2.bf16.msra.mxu0 0
      %1888 = vmatprep.subr.bf16.mxu0 0
      %1889 = vmatpush2.bf16.msra.mxu0 0
      %1890 = vmatprep.subr.bf16.mxu0 0
      %1891 = vmatpush2.bf16.msra.mxu0 0
      %1892 = vmatprep.subr.bf16.mxu0 0
      %1893 = vmatpush2.bf16.msra.mxu0 0
      %1894 = vmatprep.subr.bf16.mxu0 0
      %1895 = vmatpush2.bf16.msra.mxu0 0
      %1896 = vmatprep.subr.bf16.mxu0 0
      %1897 = vmatpush2.bf16.msra.mxu0 0
      %1898 = vmatprep.subr.bf16.mxu0 0
      %1899 = vmatpush2.bf16.msra.mxu0 0
      %1900 = vmatprep.mubr.bf16.mxu0 0
      %1901 = vmatmul.mubr.bf16.gmra.mxu0 %v1854
      %v1902 = vpop.f32.mrf.mxu0
      %v1903 = vadd.f32 0.0, %v1902
      %v1904 = vpop.f32.mrf.mxu0
      %v1905 = vpop.f32.mrf.mxu0
      %v1906 = vadd.f32 0.0, %v1905
      %v1907 = vpop.f32.mrf.mxu0
      %1908 = vmatprep.mubr.bf16.mxu0 0
      %1909 = vmatmul.mubr.bf16.gmra.mxu0 %v1857
      %v1910 = vpop.f32.mrf.mxu0
      %v1911 = vadd.f32 0.0, %v1910
      %v1912 = vpop.f32.mrf.mxu0
      %v1913 = vpop.f32.mrf.mxu0
      %v1914 = vadd.f32 0.0, %v1913
      %v1915 = vpop.f32.mrf.mxu0
      %1916 = vmatprep.mubr.bf16.mxu0 0
      %1917 = vmatmul.mubr.bf16.gmra.mxu0 %v1860
      %v1918 = vpop.f32.mrf.mxu0
      %v1919 = vadd.f32 0.0, %v1918
      %v1920 = vpop.f32.mrf.mxu0
      %v1921 = vpop.f32.mrf.mxu0
      %v1922 = vadd.f32 0.0, %v1921
      %v1923 = vpop.f32.mrf.mxu0
      %1924 = vmatprep.mubr.bf16.mxu0 0
      %1925 = vmatmul.mubr.bf16.gmra.mxu0 %v1863
      %v1926 = vpop.f32.mrf.mxu0
      %v1927 = vadd.f32 0.0, %v1926
      %v1928 = vpop.f32.mrf.mxu0
      %v1929 = vpop.f32.mrf.mxu0
      %v1930 = vadd.f32 0.0, %v1929
      %v1931 = vpop.f32.mrf.mxu0
      %1932 = vdwg.mxu0
      %v1933 = vadd.f32 %v1833, %v1903
      %v1934 = vadd.f32 %v1834, %v1906
      %v1935 = vadd.f32 %v1835, %v1911
      %v1936 = vadd.f32 %v1836, %v1914
      %v1937 = vadd.f32 %v1837, %v1919
      %v1938 = vadd.f32 %v1838, %v1922
      %v1939 = vadd.f32 %v1839, %v1927
      %v1940 = vadd.f32 %v1840, %v1930
      %v1941 = vrot.slane %v1381, 2
      %v1942 = vrot.slane %v1382, 2
      %v1943 = vsel %vm690, %v1941, %v1942
      %v1945 = vpack.c.bf16 %v1629, %v1626
      %v1946 = vpack.c.bf16 %v1635, %v1632
      %v1947 = vpack.c.bf16 %v1641, %v1638
      %v1948 = vpack.c.bf16 %v1943, %v1644
      %s1949 = scalar_lea.vmem %s3, 56
      %v1950 = vld [vmem:[%s1949] sm:$0xf]
      %v1952 = vsel %vm528, %v1945, 0
      %v1955 = vsel %vm528, %v1946, 0
      %v1958 = vsel %vm528, %v1947, 0
      %v1961 = vsel %vm528, %v1948, 0
      %v1964 = vsel %vm541, %v1950, 0
      %1966 = vmatprep.subr.bf16.mxu0 0
      %1967 = vmatpush1.bf16.msra.mxu0 0
      %1968 = vmatprep.subr.bf16.mxu0 0
      %1969 = vmatpush1.bf16.msra.mxu0 0
      %1970 = vmatprep.subr.bf16.mxu0 0
      %1971 = vmatpush1.bf16.msra.mxu0 0
      %1972 = vmatprep.subr.bf16.mxu0 0
      %1973 = vmatpush1.bf16.msra.mxu0 0
      %1974 = vmatprep.subr.bf16.mxu0 0
      %1975 = vmatpush1.bf16.msra.mxu0 0
      %1976 = vmatprep.subr.bf16.mxu0 0
      %1977 = vmatpush1.bf16.msra.mxu0 0
      %1978 = vmatprep.subr.bf16.mxu0 0
      %1979 = vmatpush1.bf16.msra.mxu0 0
      %1980 = vmatprep.subr.bf16.mxu0 0
      %1981 = vmatpush1.bf16.msra.mxu0 %v1964
      %1982 = vmatprep.subr.bf16.mxu0 0
      %1983 = vmatpush2.bf16.msra.mxu0 0
      %1984 = vmatprep.subr.bf16.mxu0 0
      %1985 = vmatpush2.bf16.msra.mxu0 0
      %1986 = vmatprep.subr.bf16.mxu0 0
      %1987 = vmatpush2.bf16.msra.mxu0 0
      %1988 = vmatprep.subr.bf16.mxu0 0
      %1989 = vmatpush2.bf16.msra.mxu0 0
      %1990 = vmatprep.subr.bf16.mxu0 0
      %1991 = vmatpush2.bf16.msra.mxu0 0
      %1992 = vmatprep.subr.bf16.mxu0 0
      %1993 = vmatpush2.bf16.msra.mxu0 0
      %1994 = vmatprep.subr.bf16.mxu0 0
      %1995 = vmatpush2.bf16.msra.mxu0 0
      %1996 = vmatprep.subr.bf16.mxu0 0
      %1997 = vmatpush2.bf16.msra.mxu0 0
      %1998 = vmatprep.mubr.bf16.mxu0 0
      %1999 = vmatmul.mubr.bf16.gmra.mxu0 %v1952
      %v2000 = vpop.f32.mrf.mxu0
      %v2001 = vadd.f32 0.0, %v2000
      %v2002 = vpop.f32.mrf.mxu0
      %v2003 = vpop.f32.mrf.mxu0
      %v2004 = vadd.f32 0.0, %v2003
      %v2005 = vpop.f32.mrf.mxu0
      %2006 = vmatprep.mubr.bf16.mxu0 0
      %2007 = vmatmul.mubr.bf16.gmra.mxu0 %v1955
      %v2008 = vpop.f32.mrf.mxu0
      %v2009 = vadd.f32 0.0, %v2008
      %v2010 = vpop.f32.mrf.mxu0
      %v2011 = vpop.f32.mrf.mxu0
      %v2012 = vadd.f32 0.0, %v2011
      %v2013 = vpop.f32.mrf.mxu0
      %2014 = vmatprep.mubr.bf16.mxu0 0
      %2015 = vmatmul.mubr.bf16.gmra.mxu0 %v1958
      %v2016 = vpop.f32.mrf.mxu0
      %v2017 = vadd.f32 0.0, %v2016
      %v2018 = vpop.f32.mrf.mxu0
      %v2019 = vpop.f32.mrf.mxu0
      %v2020 = vadd.f32 0.0, %v2019
      %v2021 = vpop.f32.mrf.mxu0
      %2022 = vmatprep.mubr.bf16.mxu0 0
      %2023 = vmatmul.mubr.bf16.gmra.mxu0 %v1961
      %v2024 = vpop.f32.mrf.mxu0
      %v2025 = vadd.f32 0.0, %v2024
      %v2026 = vpop.f32.mrf.mxu0
      %v2027 = vpop.f32.mrf.mxu0
      %v2028 = vadd.f32 0.0, %v2027
      %v2029 = vpop.f32.mrf.mxu0
      %2030 = vdwg.mxu0
      %v2031 = vadd.f32 %v1933, %v2001
      %v2032 = vadd.f32 %v1934, %v2004
      %v2033 = vadd.f32 %v1935, %v2009
      %v2034 = vadd.f32 %v1936, %v2012
      %v2035 = vadd.f32 %v1937, %v2017
      %v2036 = vadd.f32 %v1938, %v2020
      %v2037 = vadd.f32 %v1939, %v2025
      %v2038 = vadd.f32 %v1940, %v2028
      %v2039 = vpack.c.bf16 %v1383, %v1381
      %s2040 = scalar_lea.vmem %s3, 60
      %v2041 = vld [vmem:[%s2040] sm:$0xf]
      %v2043 = vsel %vm528, %v2039, 0
      %v2046 = vsel %vm541, %v2041, 0
      %2048 = vmatprep.subr.bf16.mxu0 0
      %2049 = vmatpush1.bf16.msra.mxu0 0
      %2050 = vmatprep.subr.bf16.mxu0 0
      %2051 = vmatpush1.bf16.msra.mxu0 0
      %2052 = vmatprep.subr.bf16.mxu0 0
      %2053 = vmatpush1.bf16.msra.mxu0 0
      %2054 = vmatprep.subr.bf16.mxu0 0
      %2055 = vmatpush1.bf16.msra.mxu0 0
      %2056 = vmatprep.subr.bf16.mxu0 0
      %2057 = vmatpush1.bf16.msra.mxu0 0
      %2058 = vmatprep.subr.bf16.mxu0 0
      %2059 = vmatpush1.bf16.msra.mxu0 0
      %2060 = vmatprep.subr.bf16.mxu0 0
      %2061 = vmatpush1.bf16.msra.mxu0 0
      %2062 = vmatprep.subr.bf16.mxu0 0
      %2063 = vmatpush1.bf16.msra.mxu0 %v2046
      %2064 = vmatprep.subr.bf16.mxu0 0
      %2065 = vmatpush2.bf16.msra.mxu0 0
      %2066 = vmatprep.subr.bf16.mxu0 0
      %2067 = vmatpush2.bf16.msra.mxu0 0
      %2068 = vmatprep.subr.bf16.mxu0 0
      %2069 = vmatpush2.bf16.msra.mxu0 0
      %2070 = vmatprep.subr.bf16.mxu0 0
      %2071 = vmatpush2.bf16.msra.mxu0 0
      %2072 = vmatprep.subr.bf16.mxu0 0
      %2073 = vmatpush2.bf16.msra.mxu0 0
      %2074 = vmatprep.subr.bf16.mxu0 0
      %2075 = vmatpush2.bf16.msra.mxu0 0
      %2076 = vmatprep.subr.bf16.mxu0 0
      %2077 = vmatpush2.bf16.msra.mxu0 0
      %2078 = vmatprep.subr.bf16.mxu0 0
      %2079 = vmatpush2.bf16.msra.mxu0 0
      %2080 = vmatprep.mubr.bf16.mxu0 0
      %2081 = vmatmul.mubr.bf16.gmra.mxu0 %v1395
      %v2082 = vpop.f32.mrf.mxu0
      %v2083 = vadd.f32 0.0, %v2082
      %v2084 = vpop.f32.mrf.mxu0
      %v2085 = vpop.f32.mrf.mxu0
      %v2086 = vadd.f32 0.0, %v2085
      %v2087 = vpop.f32.mrf.mxu0
      %2088 = vmatprep.mubr.bf16.mxu0 0
      %2089 = vmatmul.mubr.bf16.gmra.mxu0 %v1398
      %v2090 = vpop.f32.mrf.mxu0
      %v2091 = vadd.f32 0.0, %v2090
      %v2092 = vpop.f32.mrf.mxu0
      %v2093 = vpop.f32.mrf.mxu0
      %v2094 = vadd.f32 0.0, %v2093
      %v2095 = vpop.f32.mrf.mxu0
      %2096 = vmatprep.mubr.bf16.mxu0 0
      %2097 = vmatmul.mubr.bf16.gmra.mxu0 %v1401
      %v2098 = vpop.f32.mrf.mxu0
      %v2099 = vadd.f32 0.0, %v2098
      %v2100 = vpop.f32.mrf.mxu0
      %v2101 = vpop.f32.mrf.mxu0
      %v2102 = vadd.f32 0.0, %v2101
      %v2103 = vpop.f32.mrf.mxu0
      %2104 = vmatprep.mubr.bf16.mxu0 0
      %2105 = vmatmul.mubr.bf16.gmra.mxu0 %v2043
      %v2106 = vpop.f32.mrf.mxu0
      %v2107 = vadd.f32 0.0, %v2106
      %v2108 = vpop.f32.mrf.mxu0
      %v2109 = vpop.f32.mrf.mxu0
      %v2110 = vadd.f32 0.0, %v2109
      %v2111 = vpop.f32.mrf.mxu0
      %2112 = vdwg.mxu0
      %v2113 = vadd.f32 %v2031, %v2083
      %v2114 = vadd.f32 %v2032, %v2086
      %v2115 = vadd.f32 %v2033, %v2091
      %v2116 = vadd.f32 %v2034, %v2094
      %v2117 = vadd.f32 %v2035, %v2099
      %v2118 = vadd.f32 %v2036, %v2102
      %v2119 = vadd.f32 %v2037, %v2107
      %v2120 = vadd.f32 %v2038, %v2110
      %v2123 = vrot.slane %v1383, 1
      %v2124 = vrot.slane %v1384, 1
      %v2125 = vsel %vm489, %v2123, %v2124
      %v2127 = vpack.c.bf16 %v2125, %v1845
      %s2128 = scalar_lea.vmem %s3, 64
      %v2129 = vld [vmem:[%s2128] sm:$0xf]
      %v2131 = vsel %vm528, %v2127, 0
      %v2134 = vsel %vm541, %v2129, 0
      %2136 = vmatprep.subr.bf16.mxu0 0
      %2137 = vmatpush1.bf16.msra.mxu0 0
      %2138 = vmatprep.subr.bf16.mxu0 0
      %2139 = vmatpush1.bf16.msra.mxu0 0
      %2140 = vmatprep.subr.bf16.mxu0 0
      %2141 = vmatpush1.bf16.msra.mxu0 0
      %2142 = vmatprep.subr.bf16.mxu0 0
      %2143 = vmatpush1.bf16.msra.mxu0 0
      %2144 = vmatprep.subr.bf16.mxu0 0
      %2145 = vmatpush1.bf16.msra.mxu0 0
      %2146 = vmatprep.subr.bf16.mxu0 0
      %2147 = vmatpush1.bf16.msra.mxu0 0
      %2148 = vmatprep.subr.bf16.mxu0 0
      %2149 = vmatpush1.bf16.msra.mxu0 0
      %2150 = vmatprep.subr.bf16.mxu0 0
      %2151 = vmatpush1.bf16.msra.mxu0 %v2134
      %2152 = vmatprep.subr.bf16.mxu0 0
      %2153 = vmatpush2.bf16.msra.mxu0 0
      %2154 = vmatprep.subr.bf16.mxu0 0
      %2155 = vmatpush2.bf16.msra.mxu0 0
      %2156 = vmatprep.subr.bf16.mxu0 0
      %2157 = vmatpush2.bf16.msra.mxu0 0
      %2158 = vmatprep.subr.bf16.mxu0 0
      %2159 = vmatpush2.bf16.msra.mxu0 0
      %2160 = vmatprep.subr.bf16.mxu0 0
      %2161 = vmatpush2.bf16.msra.mxu0 0
      %2162 = vmatprep.subr.bf16.mxu0 0
      %2163 = vmatpush2.bf16.msra.mxu0 0
      %2164 = vmatprep.subr.bf16.mxu0 0
      %2165 = vmatpush2.bf16.msra.mxu0 0
      %2166 = vmatprep.subr.bf16.mxu0 0
      %2167 = vmatpush2.bf16.msra.mxu0 0
      %2168 = vmatprep.mubr.bf16.mxu0 0
      %2169 = vmatmul.mubr.bf16.gmra.mxu0 %v1537
      %v2170 = vpop.f32.mrf.mxu0
      %v2171 = vadd.f32 0.0, %v2170
      %v2172 = vpop.f32.mrf.mxu0
      %v2173 = vpop.f32.mrf.mxu0
      %v2174 = vadd.f32 0.0, %v2173
      %v2175 = vpop.f32.mrf.mxu0
      %2176 = vmatprep.mubr.bf16.mxu0 0
      %2177 = vmatmul.mubr.bf16.gmra.mxu0 %v1540
      %v2178 = vpop.f32.mrf.mxu0
      %v2179 = vadd.f32 0.0, %v2178
      %v2180 = vpop.f32.mrf.mxu0
      %v2181 = vpop.f32.mrf.mxu0
      %v2182 = vadd.f32 0.0, %v2181
      %v2183 = vpop.f32.mrf.mxu0
      %2184 = vmatprep.mubr.bf16.mxu0 0
      %2185 = vmatmul.mubr.bf16.gmra.mxu0 %v1543
      %v2186 = vpop.f32.mrf.mxu0
      %v2187 = vadd.f32 0.0, %v2186
      %v2188 = vpop.f32.mrf.mxu0
      %v2189 = vpop.f32.mrf.mxu0
      %v2190 = vadd.f32 0.0, %v2189
      %v2191 = vpop.f32.mrf.mxu0
      %2192 = vmatprep.mubr.bf16.mxu0 0
      %2193 = vmatmul.mubr.bf16.gmra.mxu0 %v2131
      %v2194 = vpop.f32.mrf.mxu0
      %v2195 = vadd.f32 0.0, %v2194
      %v2196 = vpop.f32.mrf.mxu0
      %v2197 = vpop.f32.mrf.mxu0
      %v2198 = vadd.f32 0.0, %v2197
      %v2199 = vpop.f32.mrf.mxu0
      %2200 = vdwg.mxu0
      %v2201 = vadd.f32 %v2113, %v2171
      %v2202 = vadd.f32 %v2114, %v2174
      %v2203 = vadd.f32 %v2115, %v2179
      %v2204 = vadd.f32 %v2116, %v2182
      %v2205 = vadd.f32 %v2117, %v2187
      %v2206 = vadd.f32 %v2118, %v2190
      %v2207 = vadd.f32 %v2119, %v2195
      %v2208 = vadd.f32 %v2120, %v2198
      %v2209 = vrot.slane %v1383, 2
      %v2210 = vrot.slane %v1384, 2
      %v2211 = vsel %vm690, %v2209, %v2210
      %v2213 = vpack.c.bf16 %v2211, %v1943
      %s2214 = scalar_lea.vmem %s3, 68
      %v2215 = vld [vmem:[%s2214] sm:$0xf]
      %v2217 = vsel %vm528, %v2213, 0
      %v2220 = vsel %vm541, %v2215, 0
      %2222 = vmatprep.subr.bf16.mxu0 0
      %2223 = vmatpush1.bf16.msra.mxu0 0
      %2224 = vmatprep.subr.bf16.mxu0 0
      %2225 = vmatpush1.bf16.msra.mxu0 0
      %2226 = vmatprep.subr.bf16.mxu0 0
      %2227 = vmatpush1.bf16.msra.mxu0 0
      %2228 = vmatprep.subr.bf16.mxu0 0
      %2229 = vmatpush1.bf16.msra.mxu0 0
      %2230 = vmatprep.subr.bf16.mxu0 0
      %2231 = vmatpush1.bf16.msra.mxu0 0
      %2232 = vmatprep.subr.bf16.mxu0 0
      %2233 = vmatpush1.bf16.msra.mxu0 0
      %2234 = vmatprep.subr.bf16.mxu0 0
      %2235 = vmatpush1.bf16.msra.mxu0 0
      %2236 = vmatprep.subr.bf16.mxu0 0
      %2237 = vmatpush1.bf16.msra.mxu0 %v2220
      %2238 = vmatprep.subr.bf16.mxu0 0
      %2239 = vmatpush2.bf16.msra.mxu0 0
      %2240 = vmatprep.subr.bf16.mxu0 0
      %2241 = vmatpush2.bf16.msra.mxu0 0
      %2242 = vmatprep.subr.bf16.mxu0 0
      %2243 = vmatpush2.bf16.msra.mxu0 0
      %2244 = vmatprep.subr.bf16.mxu0 0
      %2245 = vmatpush2.bf16.msra.mxu0 0
      %2246 = vmatprep.subr.bf16.mxu0 0
      %2247 = vmatpush2.bf16.msra.mxu0 0
      %2248 = vmatprep.subr.bf16.mxu0 0
      %2249 = vmatpush2.bf16.msra.mxu0 0
      %2250 = vmatprep.subr.bf16.mxu0 0
      %2251 = vmatpush2.bf16.msra.mxu0 0
      %2252 = vmatprep.subr.bf16.mxu0 0
      %2253 = vmatpush2.bf16.msra.mxu0 0
      %2254 = vmatprep.mubr.bf16.mxu0 0
      %2255 = vmatmul.mubr.bf16.gmra.mxu0 %v1663
      %v2256 = vpop.f32.mrf.mxu0
      %v2257 = vadd.f32 0.0, %v2256
      %v2258 = vpop.f32.mrf.mxu0
      %v2259 = vpop.f32.mrf.mxu0
      %v2260 = vadd.f32 0.0, %v2259
      %v2261 = vpop.f32.mrf.mxu0
      %2262 = vmatprep.mubr.bf16.mxu0 0
      %2263 = vmatmul.mubr.bf16.gmra.mxu0 %v1666
      %v2264 = vpop.f32.mrf.mxu0
      %v2265 = vadd.f32 0.0, %v2264
      %v2266 = vpop.f32.mrf.mxu0
      %v2267 = vpop.f32.mrf.mxu0
      %v2268 = vadd.f32 0.0, %v2267
      %v2269 = vpop.f32.mrf.mxu0
      %2270 = vmatprep.mubr.bf16.mxu0 0
      %2271 = vmatmul.mubr.bf16.gmra.mxu0 %v1669
      %v2272 = vpop.f32.mrf.mxu0
      %v2273 = vadd.f32 0.0, %v2272
      %v2274 = vpop.f32.mrf.mxu0
      %v2275 = vpop.f32.mrf.mxu0
      %v2276 = vadd.f32 0.0, %v2275
      %v2277 = vpop.f32.mrf.mxu0
      %2278 = vmatprep.mubr.bf16.mxu0 0
      %2279 = vmatmul.mubr.bf16.gmra.mxu0 %v2217
      %v2280 = vpop.f32.mrf.mxu0
      %v2281 = vadd.f32 0.0, %v2280
      %v2282 = vpop.f32.mrf.mxu0
      %v2283 = vpop.f32.mrf.mxu0
      %v2284 = vadd.f32 0.0, %v2283
      %v2285 = vpop.f32.mrf.mxu0
      %2286 = vdwg.mxu0
      %v2287 = vadd.f32 %v2201, %v2257
      %v2288 = vadd.f32 %v2202, %v2260
      %v2289 = vadd.f32 %v2203, %v2265
      %v2290 = vadd.f32 %v2204, %v2268
      %v2291 = vadd.f32 %v2205, %v2273
      %v2292 = vadd.f32 %v2206, %v2276
      %v2293 = vadd.f32 %v2207, %v2281
      %v2294 = vadd.f32 %v2208, %v2284
      %v2295 = vunpack.c.l.bf16 %v428
      %v2296 = vunpack.c.l.bf16 %v429
      %v2297 = vunpack.c.l.bf16 %v430
      %v2298 = vunpack.c.l.bf16 %v431
      %v2299 = vunpack.c.l.bf16 %v432
      %v2300 = vunpack.c.l.bf16 %v433
      %v2301 = vunpack.c.l.bf16 %v434
      %v2302 = vunpack.c.l.bf16 %v435
      %v2303 = vunpack.c.l.bf16 %v436
      %v2304 = vunpack.c.l.bf16 %v437
      %v2305 = vunpack.c.l.bf16 %v438
      %v2306 = vunpack.c.l.bf16 %v439
      %v2307 = vunpack.c.l.bf16 %v440
      %v2308 = vunpack.c.l.bf16 %v441
      %v2309 = vunpack.c.l.bf16 %v442
      %v2310 = vunpack.c.l.bf16 %v443
      %v2311 = vunpack.c.l.bf16 %v444
      %v2312 = vunpack.c.l.bf16 %v445
      %v2313 = vunpack.c.l.bf16 %v446
      %v2314 = vunpack.c.l.bf16 %v447
      %v2315 = vpack.c.bf16 %v2297, %v2295
      %v2316 = vpack.c.bf16 %v2301, %v2299
      %v2317 = vpack.c.bf16 %v2305, %v2303
      %v2318 = vpack.c.bf16 %v2309, %v2307
      %s2319 = scalar_lea.vmem %s3, 72
      %v2320 = vld [vmem:[%s2319] sm:$0xf]
      %v2322 = vsel %vm528, %v2315, 0
      %v2325 = vsel %vm528, %v2316, 0
      %v2328 = vsel %vm528, %v2317, 0
      %v2331 = vsel %vm528, %v2318, 0
      %v2334 = vsel %vm541, %v2320, 0
      %2336 = vmatprep.subr.bf16.mxu0 0
      %2337 = vmatpush1.bf16.msra.mxu0 0
      %2338 = vmatprep.subr.bf16.mxu0 0
      %2339 = vmatpush1.bf16.msra.mxu0 0
      %2340 = vmatprep.subr.bf16.mxu0 0
      %2341 = vmatpush1.bf16.msra.mxu0 0
      %2342 = vmatprep.subr.bf16.mxu0 0
      %2343 = vmatpush1.bf16.msra.mxu0 0
      %2344 = vmatprep.subr.bf16.mxu0 0
      %2345 = vmatpush1.bf16.msra.mxu0 0
      %2346 = vmatprep.subr.bf16.mxu0 0
      %2347 = vmatpush1.bf16.msra.mxu0 0
      %2348 = vmatprep.subr.bf16.mxu0 0
      %2349 = vmatpush1.bf16.msra.mxu0 0
      %2350 = vmatprep.subr.bf16.mxu0 0
      %2351 = vmatpush1.bf16.msra.mxu0 %v2334
      %2352 = vmatprep.subr.bf16.mxu0 0
      %2353 = vmatpush2.bf16.msra.mxu0 0
      %2354 = vmatprep.subr.bf16.mxu0 0
      %2355 = vmatpush2.bf16.msra.mxu0 0
      %2356 = vmatprep.subr.bf16.mxu0 0
      %2357 = vmatpush2.bf16.msra.mxu0 0
      %2358 = vmatprep.subr.bf16.mxu0 0
      %2359 = vmatpush2.bf16.msra.mxu0 0
      %2360 = vmatprep.subr.bf16.mxu0 0
      %2361 = vmatpush2.bf16.msra.mxu0 0
      %2362 = vmatprep.subr.bf16.mxu0 0
      %2363 = vmatpush2.bf16.msra.mxu0 0
      %2364 = vmatprep.subr.bf16.mxu0 0
      %2365 = vmatpush2.bf16.msra.mxu0 0
      %2366 = vmatprep.subr.bf16.mxu0 0
      %2367 = vmatpush2.bf16.msra.mxu0 0
      %2368 = vmatprep.mubr.bf16.mxu0 0
      %2369 = vmatmul.mubr.bf16.gmra.mxu0 %v2322
      %v2370 = vpop.f32.mrf.mxu0
      %v2371 = vadd.f32 0.0, %v2370
      %v2372 = vpop.f32.mrf.mxu0
      %v2373 = vpop.f32.mrf.mxu0
      %v2374 = vadd.f32 0.0, %v2373
      %v2375 = vpop.f32.mrf.mxu0
      %2376 = vmatprep.mubr.bf16.mxu0 0
      %2377 = vmatmul.mubr.bf16.gmra.mxu0 %v2325
      %v2378 = vpop.f32.mrf.mxu0
      %v2379 = vadd.f32 0.0, %v2378
      %v2380 = vpop.f32.mrf.mxu0
      %v2381 = vpop.f32.mrf.mxu0
      %v2382 = vadd.f32 0.0, %v2381
      %v2383 = vpop.f32.mrf.mxu0
      %2384 = vmatprep.mubr.bf16.mxu0 0
      %2385 = vmatmul.mubr.bf16.gmra.mxu0 %v2328
      %v2386 = vpop.f32.mrf.mxu0
      %v2387 = vadd.f32 0.0, %v2386
      %v2388 = vpop.f32.mrf.mxu0
      %v2389 = vpop.f32.mrf.mxu0
      %v2390 = vadd.f32 0.0, %v2389
      %v2391 = vpop.f32.mrf.mxu0
      %2392 = vmatprep.mubr.bf16.mxu0 0
      %2393 = vmatmul.mubr.bf16.gmra.mxu0 %v2331
      %v2394 = vpop.f32.mrf.mxu0
      %v2395 = vadd.f32 0.0, %v2394
      %v2396 = vpop.f32.mrf.mxu0
      %v2397 = vpop.f32.mrf.mxu0
      %v2398 = vadd.f32 0.0, %v2397
      %v2399 = vpop.f32.mrf.mxu0
      %2400 = vdwg.mxu0
      %v2401 = vadd.f32 %v2287, %v2371
      %v2402 = vadd.f32 %v2288, %v2374
      %v2403 = vadd.f32 %v2289, %v2379
      %v2404 = vadd.f32 %v2290, %v2382
      %v2405 = vadd.f32 %v2291, %v2387
      %v2406 = vadd.f32 %v2292, %v2390
      %v2407 = vadd.f32 %v2293, %v2395
      %v2408 = vadd.f32 %v2294, %v2398
      %v2425 = vrot.slane %v2295, 1
      %v2426 = vrot.slane %v2296, 1
      %v2427 = vsel %vm489, %v2425, %v2426
      %v2428 = vrot.slane %v2297, 1
      %v2429 = vrot.slane %v2298, 1
      %v2430 = vsel %vm489, %v2428, %v2429
      %v2431 = vrot.slane %v2299, 1
      %v2432 = vrot.slane %v2300, 1
      %v2433 = vsel %vm489, %v2431, %v2432
      %v2434 = vrot.slane %v2301, 1
      %v2435 = vrot.slane %v2302, 1
      %v2436 = vsel %vm489, %v2434, %v2435
      %v2437 = vrot.slane %v2303, 1
      %v2438 = vrot.slane %v2304, 1
      %v2439 = vsel %vm489, %v2437, %v2438
      %v2440 = vrot.slane %v2305, 1
      %v2441 = vrot.slane %v2306, 1
      %v2442 = vsel %vm489, %v2440, %v2441
      %v2443 = vrot.slane %v2307, 1
      %v2444 = vrot.slane %v2308, 1
      %v2445 = vsel %vm489, %v2443, %v2444
      %v2446 = vrot.slane %v2309, 1
      %v2447 = vrot.slane %v2310, 1
      %v2448 = vsel %vm489, %v2446, %v2447
      %v2457 = vpack.c.bf16 %v2430, %v2427
      %v2458 = vpack.c.bf16 %v2436, %v2433
      %v2459 = vpack.c.bf16 %v2442, %v2439
      %v2460 = vpack.c.bf16 %v2448, %v2445
      %s2461 = scalar_lea.vmem %s3, 76
      %v2462 = vld [vmem:[%s2461] sm:$0xf]
      %v2464 = vsel %vm528, %v2457, 0
      %v2467 = vsel %vm528, %v2458, 0
      %v2470 = vsel %vm528, %v2459, 0
      %v2473 = vsel %vm528, %v2460, 0
      %v2476 = vsel %vm541, %v2462, 0
      %2478 = vmatprep.subr.bf16.mxu0 0
      %2479 = vmatpush1.bf16.msra.mxu0 0
      %2480 = vmatprep.subr.bf16.mxu0 0
      %2481 = vmatpush1.bf16.msra.mxu0 0
      %2482 = vmatprep.subr.bf16.mxu0 0
      %2483 = vmatpush1.bf16.msra.mxu0 0
      %2484 = vmatprep.subr.bf16.mxu0 0
      %2485 = vmatpush1.bf16.msra.mxu0 0
      %2486 = vmatprep.subr.bf16.mxu0 0
      %2487 = vmatpush1.bf16.msra.mxu0 0
      %2488 = vmatprep.subr.bf16.mxu0 0
      %2489 = vmatpush1.bf16.msra.mxu0 0
      %2490 = vmatprep.subr.bf16.mxu0 0
      %2491 = vmatpush1.bf16.msra.mxu0 0
      %2492 = vmatprep.subr.bf16.mxu0 0
      %2493 = vmatpush1.bf16.msra.mxu0 %v2476
      %2494 = vmatprep.subr.bf16.mxu0 0
      %2495 = vmatpush2.bf16.msra.mxu0 0
      %2496 = vmatprep.subr.bf16.mxu0 0
      %2497 = vmatpush2.bf16.msra.mxu0 0
      %2498 = vmatprep.subr.bf16.mxu0 0
      %2499 = vmatpush2.bf16.msra.mxu0 0
      %2500 = vmatprep.subr.bf16.mxu0 0
      %2501 = vmatpush2.bf16.msra.mxu0 0
      %2502 = vmatprep.subr.bf16.mxu0 0
      %2503 = vmatpush2.bf16.msra.mxu0 0
      %2504 = vmatprep.subr.bf16.mxu0 0
      %2505 = vmatpush2.bf16.msra.mxu0 0
      %2506 = vmatprep.subr.bf16.mxu0 0
      %2507 = vmatpush2.bf16.msra.mxu0 0
      %2508 = vmatprep.subr.bf16.mxu0 0
      %2509 = vmatpush2.bf16.msra.mxu0 0
      %2510 = vmatprep.mubr.bf16.mxu0 0
      %2511 = vmatmul.mubr.bf16.gmra.mxu0 %v2464
      %v2512 = vpop.f32.mrf.mxu0
      %v2513 = vadd.f32 0.0, %v2512
      %v2514 = vpop.f32.mrf.mxu0
      %v2515 = vpop.f32.mrf.mxu0
      %v2516 = vadd.f32 0.0, %v2515
      %v2517 = vpop.f32.mrf.mxu0
      %2518 = vmatprep.mubr.bf16.mxu0 0
      %2519 = vmatmul.mubr.bf16.gmra.mxu0 %v2467
      %v2520 = vpop.f32.mrf.mxu0
      %v2521 = vadd.f32 0.0, %v2520
      %v2522 = vpop.f32.mrf.mxu0
      %v2523 = vpop.f32.mrf.mxu0
      %v2524 = vadd.f32 0.0, %v2523
      %v2525 = vpop.f32.mrf.mxu0
      %2526 = vmatprep.mubr.bf16.mxu0 0
      %2527 = vmatmul.mubr.bf16.gmra.mxu0 %v2470
      %v2528 = vpop.f32.mrf.mxu0
      %v2529 = vadd.f32 0.0, %v2528
      %v2530 = vpop.f32.mrf.mxu0
      %v2531 = vpop.f32.mrf.mxu0
      %v2532 = vadd.f32 0.0, %v2531
      %v2533 = vpop.f32.mrf.mxu0
      %2534 = vmatprep.mubr.bf16.mxu0 0
      %2535 = vmatmul.mubr.bf16.gmra.mxu0 %v2473
      %v2536 = vpop.f32.mrf.mxu0
      %v2537 = vadd.f32 0.0, %v2536
      %v2538 = vpop.f32.mrf.mxu0
      %v2539 = vpop.f32.mrf.mxu0
      %v2540 = vadd.f32 0.0, %v2539
      %v2541 = vpop.f32.mrf.mxu0
      %2542 = vdwg.mxu0
      %v2543 = vadd.f32 %v2401, %v2513
      %v2544 = vadd.f32 %v2402, %v2516
      %v2545 = vadd.f32 %v2403, %v2521
      %v2546 = vadd.f32 %v2404, %v2524
      %v2547 = vadd.f32 %v2405, %v2529
      %v2548 = vadd.f32 %v2406, %v2532
      %v2549 = vadd.f32 %v2407, %v2537
      %v2550 = vadd.f32 %v2408, %v2540
      %v2551 = vrot.slane %v2295, 2
      %v2552 = vrot.slane %v2296, 2
      %v2553 = vsel %vm690, %v2551, %v2552
      %v2554 = vrot.slane %v2297, 2
      %v2555 = vrot.slane %v2298, 2
      %v2556 = vsel %vm690, %v2554, %v2555
      %v2557 = vrot.slane %v2299, 2
      %v2558 = vrot.slane %v2300, 2
      %v2559 = vsel %vm690, %v2557, %v2558
      %v2560 = vrot.slane %v2301, 2
      %v2561 = vrot.slane %v2302, 2
      %v2562 = vsel %vm690, %v2560, %v2561
      %v2563 = vrot.slane %v2303, 2
      %v2564 = vrot.slane %v2304, 2
      %v2565 = vsel %vm690, %v2563, %v2564
      %v2566 = vrot.slane %v2305, 2
      %v2567 = vrot.slane %v2306, 2
      %v2568 = vsel %vm690, %v2566, %v2567
      %v2569 = vrot.slane %v2307, 2
      %v2570 = vrot.slane %v2308, 2
      %v2571 = vsel %vm690, %v2569, %v2570
      %v2572 = vrot.slane %v2309, 2
      %v2573 = vrot.slane %v2310, 2
      %v2574 = vsel %vm690, %v2572, %v2573
      %v2583 = vpack.c.bf16 %v2556, %v2553
      %v2584 = vpack.c.bf16 %v2562, %v2559
      %v2585 = vpack.c.bf16 %v2568, %v2565
      %v2586 = vpack.c.bf16 %v2574, %v2571
      %s2587 = scalar_lea.vmem %s3, 80
      %v2588 = vld [vmem:[%s2587] sm:$0xf]
      %v2590 = vsel %vm528, %v2583, 0
      %v2593 = vsel %vm528, %v2584, 0
      %v2596 = vsel %vm528, %v2585, 0
      %v2599 = vsel %vm528, %v2586, 0
      %v2602 = vsel %vm541, %v2588, 0
      %2604 = vmatprep.subr.bf16.mxu0 0
      %2605 = vmatpush1.bf16.msra.mxu0 0
      %2606 = vmatprep.subr.bf16.mxu0 0
      %2607 = vmatpush1.bf16.msra.mxu0 0
      %2608 = vmatprep.subr.bf16.mxu0 0
      %2609 = vmatpush1.bf16.msra.mxu0 0
      %2610 = vmatprep.subr.bf16.mxu0 0
      %2611 = vmatpush1.bf16.msra.mxu0 0
      %2612 = vmatprep.subr.bf16.mxu0 0
      %2613 = vmatpush1.bf16.msra.mxu0 0
      %2614 = vmatprep.subr.bf16.mxu0 0
      %2615 = vmatpush1.bf16.msra.mxu0 0
      %2616 = vmatprep.subr.bf16.mxu0 0
      %2617 = vmatpush1.bf16.msra.mxu0 0
      %2618 = vmatprep.subr.bf16.mxu0 0
      %2619 = vmatpush1.bf16.msra.mxu0 %v2602
      %2620 = vmatprep.subr.bf16.mxu0 0
      %2621 = vmatpush2.bf16.msra.mxu0 0
      %2622 = vmatprep.subr.bf16.mxu0 0
      %2623 = vmatpush2.bf16.msra.mxu0 0
      %2624 = vmatprep.subr.bf16.mxu0 0
      %2625 = vmatpush2.bf16.msra.mxu0 0
      %2626 = vmatprep.subr.bf16.mxu0 0
      %2627 = vmatpush2.bf16.msra.mxu0 0
      %2628 = vmatprep.subr.bf16.mxu0 0
      %2629 = vmatpush2.bf16.msra.mxu0 0
      %2630 = vmatprep.subr.bf16.mxu0 0
      %2631 = vmatpush2.bf16.msra.mxu0 0
      %2632 = vmatprep.subr.bf16.mxu0 0
      %2633 = vmatpush2.bf16.msra.mxu0 0
      %2634 = vmatprep.subr.bf16.mxu0 0
      %2635 = vmatpush2.bf16.msra.mxu0 0
      %2636 = vmatprep.mubr.bf16.mxu0 0
      %2637 = vmatmul.mubr.bf16.gmra.mxu0 %v2590
      %v2638 = vpop.f32.mrf.mxu0
      %v2639 = vadd.f32 0.0, %v2638
      %v2640 = vpop.f32.mrf.mxu0
      %v2641 = vpop.f32.mrf.mxu0
      %v2642 = vadd.f32 0.0, %v2641
      %v2643 = vpop.f32.mrf.mxu0
      %2644 = vmatprep.mubr.bf16.mxu0 0
      %2645 = vmatmul.mubr.bf16.gmra.mxu0 %v2593
      %v2646 = vpop.f32.mrf.mxu0
      %v2647 = vadd.f32 0.0, %v2646
      %v2648 = vpop.f32.mrf.mxu0
      %v2649 = vpop.f32.mrf.mxu0
      %v2650 = vadd.f32 0.0, %v2649
      %v2651 = vpop.f32.mrf.mxu0
      %2652 = vmatprep.mubr.bf16.mxu0 0
      %2653 = vmatmul.mubr.bf16.gmra.mxu0 %v2596
      %v2654 = vpop.f32.mrf.mxu0
      %v2655 = vadd.f32 0.0, %v2654
      %v2656 = vpop.f32.mrf.mxu0
      %v2657 = vpop.f32.mrf.mxu0
      %v2658 = vadd.f32 0.0, %v2657
      %v2659 = vpop.f32.mrf.mxu0
      %2660 = vmatprep.mubr.bf16.mxu0 0
      %2661 = vmatmul.mubr.bf16.gmra.mxu0 %v2599
      %v2662 = vpop.f32.mrf.mxu0
      %v2663 = vadd.f32 0.0, %v2662
      %v2664 = vpop.f32.mrf.mxu0
      %v2665 = vpop.f32.mrf.mxu0
      %v2666 = vadd.f32 0.0, %v2665
      %v2667 = vpop.f32.mrf.mxu0
      %2668 = vdwg.mxu0
      %v2669 = vadd.f32 %v2543, %v2639
      %v2670 = vadd.f32 %v2544, %v2642
      %v2671 = vadd.f32 %v2545, %v2647
      %v2672 = vadd.f32 %v2546, %v2650
      %v2673 = vadd.f32 %v2547, %v2655
      %v2674 = vadd.f32 %v2548, %v2658
      %v2675 = vadd.f32 %v2549, %v2663
      %v2676 = vadd.f32 %v2550, %v2666
      %v2677 = vpack.c.bf16 %v2299, %v2297
      %v2678 = vpack.c.bf16 %v2303, %v2301
      %v2679 = vpack.c.bf16 %v2307, %v2305
      %v2680 = vpack.c.bf16 %v2311, %v2309
      %s2681 = scalar_lea.vmem %s3, 84
      %v2682 = vld [vmem:[%s2681] sm:$0xf]
      %v2684 = vsel %vm528, %v2677, 0
      %v2687 = vsel %vm528, %v2678, 0
      %v2690 = vsel %vm528, %v2679, 0
      %v2693 = vsel %vm528, %v2680, 0
      %v2696 = vsel %vm541, %v2682, 0
      %2698 = vmatprep.subr.bf16.mxu0 0
      %2699 = vmatpush1.bf16.msra.mxu0 0
      %2700 = vmatprep.subr.bf16.mxu0 0
      %2701 = vmatpush1.bf16.msra.mxu0 0
      %2702 = vmatprep.subr.bf16.mxu0 0
      %2703 = vmatpush1.bf16.msra.mxu0 0
      %2704 = vmatprep.subr.bf16.mxu0 0
      %2705 = vmatpush1.bf16.msra.mxu0 0
      %2706 = vmatprep.subr.bf16.mxu0 0
      %2707 = vmatpush1.bf16.msra.mxu0 0
      %2708 = vmatprep.subr.bf16.mxu0 0
      %2709 = vmatpush1.bf16.msra.mxu0 0
      %2710 = vmatprep.subr.bf16.mxu0 0
      %2711 = vmatpush1.bf16.msra.mxu0 0
      %2712 = vmatprep.subr.bf16.mxu0 0
      %2713 = vmatpush1.bf16.msra.mxu0 %v2696
      %2714 = vmatprep.subr.bf16.mxu0 0
      %2715 = vmatpush2.bf16.msra.mxu0 0
      %2716 = vmatprep.subr.bf16.mxu0 0
      %2717 = vmatpush2.bf16.msra.mxu0 0
      %2718 = vmatprep.subr.bf16.mxu0 0
      %2719 = vmatpush2.bf16.msra.mxu0 0
      %2720 = vmatprep.subr.bf16.mxu0 0
      %2721 = vmatpush2.bf16.msra.mxu0 0
      %2722 = vmatprep.subr.bf16.mxu0 0
      %2723 = vmatpush2.bf16.msra.mxu0 0
      %2724 = vmatprep.subr.bf16.mxu0 0
      %2725 = vmatpush2.bf16.msra.mxu0 0
      %2726 = vmatprep.subr.bf16.mxu0 0
      %2727 = vmatpush2.bf16.msra.mxu0 0
      %2728 = vmatprep.subr.bf16.mxu0 0
      %2729 = vmatpush2.bf16.msra.mxu0 0
      %2730 = vmatprep.mubr.bf16.mxu0 0
      %2731 = vmatmul.mubr.bf16.gmra.mxu0 %v2684
      %v2732 = vpop.f32.mrf.mxu0
      %v2733 = vadd.f32 0.0, %v2732
      %v2734 = vpop.f32.mrf.mxu0
      %v2735 = vpop.f32.mrf.mxu0
      %v2736 = vadd.f32 0.0, %v2735
      %v2737 = vpop.f32.mrf.mxu0
      %2738 = vmatprep.mubr.bf16.mxu0 0
      %2739 = vmatmul.mubr.bf16.gmra.mxu0 %v2687
      %v2740 = vpop.f32.mrf.mxu0
      %v2741 = vadd.f32 0.0, %v2740
      %v2742 = vpop.f32.mrf.mxu0
      %v2743 = vpop.f32.mrf.mxu0
      %v2744 = vadd.f32 0.0, %v2743
      %v2745 = vpop.f32.mrf.mxu0
      %2746 = vmatprep.mubr.bf16.mxu0 0
      %2747 = vmatmul.mubr.bf16.gmra.mxu0 %v2690
      %v2748 = vpop.f32.mrf.mxu0
      %v2749 = vadd.f32 0.0, %v2748
      %v2750 = vpop.f32.mrf.mxu0
      %v2751 = vpop.f32.mrf.mxu0
      %v2752 = vadd.f32 0.0, %v2751
      %v2753 = vpop.f32.mrf.mxu0
      %2754 = vmatprep.mubr.bf16.mxu0 0
      %2755 = vmatmul.mubr.bf16.gmra.mxu0 %v2693
      %v2756 = vpop.f32.mrf.mxu0
      %v2757 = vadd.f32 0.0, %v2756
      %v2758 = vpop.f32.mrf.mxu0
      %v2759 = vpop.f32.mrf.mxu0
      %v2760 = vadd.f32 0.0, %v2759
      %v2761 = vpop.f32.mrf.mxu0
      %2762 = vdwg.mxu0
      %v2763 = vadd.f32 %v2669, %v2733
      %v2764 = vadd.f32 %v2670, %v2736
      %v2765 = vadd.f32 %v2671, %v2741
      %v2766 = vadd.f32 %v2672, %v2744
      %v2767 = vadd.f32 %v2673, %v2749
      %v2768 = vadd.f32 %v2674, %v2752
      %v2769 = vadd.f32 %v2675, %v2757
      %v2770 = vadd.f32 %v2676, %v2760
      %v2773 = vrot.slane %v2311, 1
      %v2774 = vrot.slane %v2312, 1
      %v2775 = vsel %vm489, %v2773, %v2774
      %v2777 = vpack.c.bf16 %v2433, %v2430
      %v2778 = vpack.c.bf16 %v2439, %v2436
      %v2779 = vpack.c.bf16 %v2445, %v2442
      %v2780 = vpack.c.bf16 %v2775, %v2448
      %s2781 = scalar_lea.vmem %s3, 88
      %v2782 = vld [vmem:[%s2781] sm:$0xf]
      %v2784 = vsel %vm528, %v2777, 0
      %v2787 = vsel %vm528, %v2778, 0
      %v2790 = vsel %vm528, %v2779, 0
      %v2793 = vsel %vm528, %v2780, 0
      %v2796 = vsel %vm541, %v2782, 0
      %2798 = vmatprep.subr.bf16.mxu0 0
      %2799 = vmatpush1.bf16.msra.mxu0 0
      %2800 = vmatprep.subr.bf16.mxu0 0
      %2801 = vmatpush1.bf16.msra.mxu0 0
      %2802 = vmatprep.subr.bf16.mxu0 0
      %2803 = vmatpush1.bf16.msra.mxu0 0
      %2804 = vmatprep.subr.bf16.mxu0 0
      %2805 = vmatpush1.bf16.msra.mxu0 0
      %2806 = vmatprep.subr.bf16.mxu0 0
      %2807 = vmatpush1.bf16.msra.mxu0 0
      %2808 = vmatprep.subr.bf16.mxu0 0
      %2809 = vmatpush1.bf16.msra.mxu0 0
      %2810 = vmatprep.subr.bf16.mxu0 0
      %2811 = vmatpush1.bf16.msra.mxu0 0
      %2812 = vmatprep.subr.bf16.mxu0 0
      %2813 = vmatpush1.bf16.msra.mxu0 %v2796
      %2814 = vmatprep.subr.bf16.mxu0 0
      %2815 = vmatpush2.bf16.msra.mxu0 0
      %2816 = vmatprep.subr.bf16.mxu0 0
      %2817 = vmatpush2.bf16.msra.mxu0 0
      %2818 = vmatprep.subr.bf16.mxu0 0
      %2819 = vmatpush2.bf16.msra.mxu0 0
      %2820 = vmatprep.subr.bf16.mxu0 0
      %2821 = vmatpush2.bf16.msra.mxu0 0
      %2822 = vmatprep.subr.bf16.mxu0 0
      %2823 = vmatpush2.bf16.msra.mxu0 0
      %2824 = vmatprep.subr.bf16.mxu0 0
      %2825 = vmatpush2.bf16.msra.mxu0 0
      %2826 = vmatprep.subr.bf16.mxu0 0
      %2827 = vmatpush2.bf16.msra.mxu0 0
      %2828 = vmatprep.subr.bf16.mxu0 0
      %2829 = vmatpush2.bf16.msra.mxu0 0
      %2830 = vmatprep.mubr.bf16.mxu0 0
      %2831 = vmatmul.mubr.bf16.gmra.mxu0 %v2784
      %v2832 = vpop.f32.mrf.mxu0
      %v2833 = vadd.f32 0.0, %v2832
      %v2834 = vpop.f32.mrf.mxu0
      %v2835 = vpop.f32.mrf.mxu0
      %v2836 = vadd.f32 0.0, %v2835
      %v2837 = vpop.f32.mrf.mxu0
      %2838 = vmatprep.mubr.bf16.mxu0 0
      %2839 = vmatmul.mubr.bf16.gmra.mxu0 %v2787
      %v2840 = vpop.f32.mrf.mxu0
      %v2841 = vadd.f32 0.0, %v2840
      %v2842 = vpop.f32.mrf.mxu0
      %v2843 = vpop.f32.mrf.mxu0
      %v2844 = vadd.f32 0.0, %v2843
      %v2845 = vpop.f32.mrf.mxu0
      %2846 = vmatprep.mubr.bf16.mxu0 0
      %2847 = vmatmul.mubr.bf16.gmra.mxu0 %v2790
      %v2848 = vpop.f32.mrf.mxu0
      %v2849 = vadd.f32 0.0, %v2848
      %v2850 = vpop.f32.mrf.mxu0
      %v2851 = vpop.f32.mrf.mxu0
      %v2852 = vadd.f32 0.0, %v2851
      %v2853 = vpop.f32.mrf.mxu0
      %2854 = vmatprep.mubr.bf16.mxu0 0
      %2855 = vmatmul.mubr.bf16.gmra.mxu0 %v2793
      %v2856 = vpop.f32.mrf.mxu0
      %v2857 = vadd.f32 0.0, %v2856
      %v2858 = vpop.f32.mrf.mxu0
      %v2859 = vpop.f32.mrf.mxu0
      %v2860 = vadd.f32 0.0, %v2859
      %v2861 = vpop.f32.mrf.mxu0
      %2862 = vdwg.mxu0
      %v2863 = vadd.f32 %v2763, %v2833
      %v2864 = vadd.f32 %v2764, %v2836
      %v2865 = vadd.f32 %v2765, %v2841
      %v2866 = vadd.f32 %v2766, %v2844
      %v2867 = vadd.f32 %v2767, %v2849
      %v2868 = vadd.f32 %v2768, %v2852
      %v2869 = vadd.f32 %v2769, %v2857
      %v2870 = vadd.f32 %v2770, %v2860
      %v2871 = vrot.slane %v2311, 2
      %v2872 = vrot.slane %v2312, 2
      %v2873 = vsel %vm690, %v2871, %v2872
      %v2875 = vpack.c.bf16 %v2559, %v2556
      %v2876 = vpack.c.bf16 %v2565, %v2562
      %v2877 = vpack.c.bf16 %v2571, %v2568
      %v2878 = vpack.c.bf16 %v2873, %v2574
      %s2879 = scalar_lea.vmem %s3, 92
      %v2880 = vld [vmem:[%s2879] sm:$0xf]
      %v2882 = vsel %vm528, %v2875, 0
      %v2885 = vsel %vm528, %v2876, 0
      %v2888 = vsel %vm528, %v2877, 0
      %v2891 = vsel %vm528, %v2878, 0
      %v2894 = vsel %vm541, %v2880, 0
      %2896 = vmatprep.subr.bf16.mxu0 0
      %2897 = vmatpush1.bf16.msra.mxu0 0
      %2898 = vmatprep.subr.bf16.mxu0 0
      %2899 = vmatpush1.bf16.msra.mxu0 0
      %2900 = vmatprep.subr.bf16.mxu0 0
      %2901 = vmatpush1.bf16.msra.mxu0 0
      %2902 = vmatprep.subr.bf16.mxu0 0
      %2903 = vmatpush1.bf16.msra.mxu0 0
      %2904 = vmatprep.subr.bf16.mxu0 0
      %2905 = vmatpush1.bf16.msra.mxu0 0
      %2906 = vmatprep.subr.bf16.mxu0 0
      %2907 = vmatpush1.bf16.msra.mxu0 0
      %2908 = vmatprep.subr.bf16.mxu0 0
      %2909 = vmatpush1.bf16.msra.mxu0 0
      %2910 = vmatprep.subr.bf16.mxu0 0
      %2911 = vmatpush1.bf16.msra.mxu0 %v2894
      %2912 = vmatprep.subr.bf16.mxu0 0
      %2913 = vmatpush2.bf16.msra.mxu0 0
      %2914 = vmatprep.subr.bf16.mxu0 0
      %2915 = vmatpush2.bf16.msra.mxu0 0
      %2916 = vmatprep.subr.bf16.mxu0 0
      %2917 = vmatpush2.bf16.msra.mxu0 0
      %2918 = vmatprep.subr.bf16.mxu0 0
      %2919 = vmatpush2.bf16.msra.mxu0 0
      %2920 = vmatprep.subr.bf16.mxu0 0
      %2921 = vmatpush2.bf16.msra.mxu0 0
      %2922 = vmatprep.subr.bf16.mxu0 0
      %2923 = vmatpush2.bf16.msra.mxu0 0
      %2924 = vmatprep.subr.bf16.mxu0 0
      %2925 = vmatpush2.bf16.msra.mxu0 0
      %2926 = vmatprep.subr.bf16.mxu0 0
      %2927 = vmatpush2.bf16.msra.mxu0 0
      %2928 = vmatprep.mubr.bf16.mxu0 0
      %2929 = vmatmul.mubr.bf16.gmra.mxu0 %v2882
      %v2930 = vpop.f32.mrf.mxu0
      %v2931 = vadd.f32 0.0, %v2930
      %v2932 = vpop.f32.mrf.mxu0
      %v2933 = vpop.f32.mrf.mxu0
      %v2934 = vadd.f32 0.0, %v2933
      %v2935 = vpop.f32.mrf.mxu0
      %2936 = vmatprep.mubr.bf16.mxu0 0
      %2937 = vmatmul.mubr.bf16.gmra.mxu0 %v2885
      %v2938 = vpop.f32.mrf.mxu0
      %v2939 = vadd.f32 0.0, %v2938
      %v2940 = vpop.f32.mrf.mxu0
      %v2941 = vpop.f32.mrf.mxu0
      %v2942 = vadd.f32 0.0, %v2941
      %v2943 = vpop.f32.mrf.mxu0
      %2944 = vmatprep.mubr.bf16.mxu0 0
      %2945 = vmatmul.mubr.bf16.gmra.mxu0 %v2888
      %v2946 = vpop.f32.mrf.mxu0
      %v2947 = vadd.f32 0.0, %v2946
      %v2948 = vpop.f32.mrf.mxu0
      %v2949 = vpop.f32.mrf.mxu0
      %v2950 = vadd.f32 0.0, %v2949
      %v2951 = vpop.f32.mrf.mxu0
      %2952 = vmatprep.mubr.bf16.mxu0 0
      %2953 = vmatmul.mubr.bf16.gmra.mxu0 %v2891
      %v2954 = vpop.f32.mrf.mxu0
      %v2955 = vadd.f32 0.0, %v2954
      %v2956 = vpop.f32.mrf.mxu0
      %v2957 = vpop.f32.mrf.mxu0
      %v2958 = vadd.f32 0.0, %v2957
      %v2959 = vpop.f32.mrf.mxu0
      %2960 = vdwg.mxu0
      %v2961 = vadd.f32 %v2863, %v2931
      %v2962 = vadd.f32 %v2864, %v2934
      %v2963 = vadd.f32 %v2865, %v2939
      %v2964 = vadd.f32 %v2866, %v2942
      %v2965 = vadd.f32 %v2867, %v2947
      %v2966 = vadd.f32 %v2868, %v2950
      %v2967 = vadd.f32 %v2869, %v2955
      %v2968 = vadd.f32 %v2870, %v2958
      %v2969 = vpack.c.bf16 %v2313, %v2311
      %s2970 = scalar_lea.vmem %s3, 96
      %v2971 = vld [vmem:[%s2970] sm:$0xf]
      %v2973 = vsel %vm528, %v2969, 0
      %v2976 = vsel %vm541, %v2971, 0
      %2978 = vmatprep.subr.bf16.mxu0 0
      %2979 = vmatpush1.bf16.msra.mxu0 0
      %2980 = vmatprep.subr.bf16.mxu0 0
      %2981 = vmatpush1.bf16.msra.mxu0 0
      %2982 = vmatprep.subr.bf16.mxu0 0
      %2983 = vmatpush1.bf16.msra.mxu0 0
      %2984 = vmatprep.subr.bf16.mxu0 0
      %2985 = vmatpush1.bf16.msra.mxu0 0
      %2986 = vmatprep.subr.bf16.mxu0 0
      %2987 = vmatpush1.bf16.msra.mxu0 0
      %2988 = vmatprep.subr.bf16.mxu0 0
      %2989 = vmatpush1.bf16.msra.mxu0 0
      %2990 = vmatprep.subr.bf16.mxu0 0
      %2991 = vmatpush1.bf16.msra.mxu0 0
      %2992 = vmatprep.subr.bf16.mxu0 0
      %2993 = vmatpush1.bf16.msra.mxu0 %v2976
      %2994 = vmatprep.subr.bf16.mxu0 0
      %2995 = vmatpush2.bf16.msra.mxu0 0
      %2996 = vmatprep.subr.bf16.mxu0 0
      %2997 = vmatpush2.bf16.msra.mxu0 0
      %2998 = vmatprep.subr.bf16.mxu0 0
      %2999 = vmatpush2.bf16.msra.mxu0 0
      %3000 = vmatprep.subr.bf16.mxu0 0
      %3001 = vmatpush2.bf16.msra.mxu0 0
      %3002 = vmatprep.subr.bf16.mxu0 0
      %3003 = vmatpush2.bf16.msra.mxu0 0
      %3004 = vmatprep.subr.bf16.mxu0 0
      %3005 = vmatpush2.bf16.msra.mxu0 0
      %3006 = vmatprep.subr.bf16.mxu0 0
      %3007 = vmatpush2.bf16.msra.mxu0 0
      %3008 = vmatprep.subr.bf16.mxu0 0
      %3009 = vmatpush2.bf16.msra.mxu0 0
      %3010 = vmatprep.mubr.bf16.mxu0 0
      %3011 = vmatmul.mubr.bf16.gmra.mxu0 %v2325
      %v3012 = vpop.f32.mrf.mxu0
      %v3013 = vadd.f32 0.0, %v3012
      %v3014 = vpop.f32.mrf.mxu0
      %v3015 = vpop.f32.mrf.mxu0
      %v3016 = vadd.f32 0.0, %v3015
      %v3017 = vpop.f32.mrf.mxu0
      %3018 = vmatprep.mubr.bf16.mxu0 0
      %3019 = vmatmul.mubr.bf16.gmra.mxu0 %v2328
      %v3020 = vpop.f32.mrf.mxu0
      %v3021 = vadd.f32 0.0, %v3020
      %v3022 = vpop.f32.mrf.mxu0
      %v3023 = vpop.f32.mrf.mxu0
      %v3024 = vadd.f32 0.0, %v3023
      %v3025 = vpop.f32.mrf.mxu0
      %3026 = vmatprep.mubr.bf16.mxu0 0
      %3027 = vmatmul.mubr.bf16.gmra.mxu0 %v2331
      %v3028 = vpop.f32.mrf.mxu0
      %v3029 = vadd.f32 0.0, %v3028
      %v3030 = vpop.f32.mrf.mxu0
      %v3031 = vpop.f32.mrf.mxu0
      %v3032 = vadd.f32 0.0, %v3031
      %v3033 = vpop.f32.mrf.mxu0
      %3034 = vmatprep.mubr.bf16.mxu0 0
      %3035 = vmatmul.mubr.bf16.gmra.mxu0 %v2973
      %v3036 = vpop.f32.mrf.mxu0
      %v3037 = vadd.f32 0.0, %v3036
      %v3038 = vpop.f32.mrf.mxu0
      %v3039 = vpop.f32.mrf.mxu0
      %v3040 = vadd.f32 0.0, %v3039
      %v3041 = vpop.f32.mrf.mxu0
      %3042 = vdwg.mxu0
      %v3043 = vadd.f32 %v2961, %v3013
      %v3044 = vadd.f32 %v2962, %v3016
      %v3045 = vadd.f32 %v2963, %v3021
      %v3046 = vadd.f32 %v2964, %v3024
      %v3047 = vadd.f32 %v2965, %v3029
      %v3048 = vadd.f32 %v2966, %v3032
      %v3049 = vadd.f32 %v2967, %v3037
      %v3050 = vadd.f32 %v2968, %v3040
      %v3053 = vrot.slane %v2313, 1
      %v3054 = vrot.slane %v2314, 1
      %v3055 = vsel %vm489, %v3053, %v3054
      %v3057 = vpack.c.bf16 %v3055, %v2775
      %s3058 = scalar_lea.vmem %s3, 100
      %v3059 = vld [vmem:[%s3058] sm:$0xf]
      %v3061 = vsel %vm528, %v3057, 0
      %v3064 = vsel %vm541, %v3059, 0
      %3066 = vmatprep.subr.bf16.mxu0 0
      %3067 = vmatpush1.bf16.msra.mxu0 0
      %3068 = vmatprep.subr.bf16.mxu0 0
      %3069 = vmatpush1.bf16.msra.mxu0 0
      %3070 = vmatprep.subr.bf16.mxu0 0
      %3071 = vmatpush1.bf16.msra.mxu0 0
      %3072 = vmatprep.subr.bf16.mxu0 0
      %3073 = vmatpush1.bf16.msra.mxu0 0
      %3074 = vmatprep.subr.bf16.mxu0 0
      %3075 = vmatpush1.bf16.msra.mxu0 0
      %3076 = vmatprep.subr.bf16.mxu0 0
      %3077 = vmatpush1.bf16.msra.mxu0 0
      %3078 = vmatprep.subr.bf16.mxu0 0
      %3079 = vmatpush1.bf16.msra.mxu0 0
      %3080 = vmatprep.subr.bf16.mxu0 0
      %3081 = vmatpush1.bf16.msra.mxu0 %v3064
      %3082 = vmatprep.subr.bf16.mxu0 0
      %3083 = vmatpush2.bf16.msra.mxu0 0
      %3084 = vmatprep.subr.bf16.mxu0 0
      %3085 = vmatpush2.bf16.msra.mxu0 0
      %3086 = vmatprep.subr.bf16.mxu0 0
      %3087 = vmatpush2.bf16.msra.mxu0 0
      %3088 = vmatprep.subr.bf16.mxu0 0
      %3089 = vmatpush2.bf16.msra.mxu0 0
      %3090 = vmatprep.subr.bf16.mxu0 0
      %3091 = vmatpush2.bf16.msra.mxu0 0
      %3092 = vmatprep.subr.bf16.mxu0 0
      %3093 = vmatpush2.bf16.msra.mxu0 0
      %3094 = vmatprep.subr.bf16.mxu0 0
      %3095 = vmatpush2.bf16.msra.mxu0 0
      %3096 = vmatprep.subr.bf16.mxu0 0
      %3097 = vmatpush2.bf16.msra.mxu0 0
      %3098 = vmatprep.mubr.bf16.mxu0 0
      %3099 = vmatmul.mubr.bf16.gmra.mxu0 %v2467
      %v3100 = vpop.f32.mrf.mxu0
      %v3101 = vadd.f32 0.0, %v3100
      %v3102 = vpop.f32.mrf.mxu0
      %v3103 = vpop.f32.mrf.mxu0
      %v3104 = vadd.f32 0.0, %v3103
      %v3105 = vpop.f32.mrf.mxu0
      %3106 = vmatprep.mubr.bf16.mxu0 0
      %3107 = vmatmul.mubr.bf16.gmra.mxu0 %v2470
      %v3108 = vpop.f32.mrf.mxu0
      %v3109 = vadd.f32 0.0, %v3108
      %v3110 = vpop.f32.mrf.mxu0
      %v3111 = vpop.f32.mrf.mxu0
      %v3112 = vadd.f32 0.0, %v3111
      %v3113 = vpop.f32.mrf.mxu0
      %3114 = vmatprep.mubr.bf16.mxu0 0
      %3115 = vmatmul.mubr.bf16.gmra.mxu0 %v2473
      %v3116 = vpop.f32.mrf.mxu0
      %v3117 = vadd.f32 0.0, %v3116
      %v3118 = vpop.f32.mrf.mxu0
      %v3119 = vpop.f32.mrf.mxu0
      %v3120 = vadd.f32 0.0, %v3119
      %v3121 = vpop.f32.mrf.mxu0
      %3122 = vmatprep.mubr.bf16.mxu0 0
      %3123 = vmatmul.mubr.bf16.gmra.mxu0 %v3061
      %v3124 = vpop.f32.mrf.mxu0
      %v3125 = vadd.f32 0.0, %v3124
      %v3126 = vpop.f32.mrf.mxu0
      %v3127 = vpop.f32.mrf.mxu0
      %v3128 = vadd.f32 0.0, %v3127
      %v3129 = vpop.f32.mrf.mxu0
      %3130 = vdwg.mxu0
      %v3131 = vadd.f32 %v3043, %v3101
      %v3132 = vadd.f32 %v3044, %v3104
      %v3133 = vadd.f32 %v3045, %v3109
      %v3134 = vadd.f32 %v3046, %v3112
      %v3135 = vadd.f32 %v3047, %v3117
      %v3136 = vadd.f32 %v3048, %v3120
      %v3137 = vadd.f32 %v3049, %v3125
      %v3138 = vadd.f32 %v3050, %v3128
      %v3139 = vrot.slane %v2313, 2
      %v3140 = vrot.slane %v2314, 2
      %v3141 = vsel %vm690, %v3139, %v3140
      %v3143 = vpack.c.bf16 %v3141, %v2873
      %s3144 = scalar_lea.vmem %s3, 104
      %v3145 = vld [vmem:[%s3144] sm:$0xf]
      %v3147 = vsel %vm528, %v3143, 0
      %v3150 = vsel %vm541, %v3145, 0
      %3152 = vmatprep.subr.bf16.mxu0 0
      %3153 = vmatpush1.bf16.msra.mxu0 0
      %3154 = vmatprep.subr.bf16.mxu0 0
      %3155 = vmatpush1.bf16.msra.mxu0 0
      %3156 = vmatprep.subr.bf16.mxu0 0
      %3157 = vmatpush1.bf16.msra.mxu0 0
      %3158 = vmatprep.subr.bf16.mxu0 0
      %3159 = vmatpush1.bf16.msra.mxu0 0
      %3160 = vmatprep.subr.bf16.mxu0 0
      %3161 = vmatpush1.bf16.msra.mxu0 0
      %3162 = vmatprep.subr.bf16.mxu0 0
      %3163 = vmatpush1.bf16.msra.mxu0 0
      %3164 = vmatprep.subr.bf16.mxu0 0
      %3165 = vmatpush1.bf16.msra.mxu0 0
      %3166 = vmatprep.subr.bf16.mxu0 0
      %3167 = vmatpush1.bf16.msra.mxu0 %v3150
      %3168 = vmatprep.subr.bf16.mxu0 0
      %3169 = vmatpush2.bf16.msra.mxu0 0
      %3170 = vmatprep.subr.bf16.mxu0 0
      %3171 = vmatpush2.bf16.msra.mxu0 0
      %3172 = vmatprep.subr.bf16.mxu0 0
      %3173 = vmatpush2.bf16.msra.mxu0 0
      %3174 = vmatprep.subr.bf16.mxu0 0
      %3175 = vmatpush2.bf16.msra.mxu0 0
      %3176 = vmatprep.subr.bf16.mxu0 0
      %3177 = vmatpush2.bf16.msra.mxu0 0
      %3178 = vmatprep.subr.bf16.mxu0 0
      %3179 = vmatpush2.bf16.msra.mxu0 0
      %3180 = vmatprep.subr.bf16.mxu0 0
      %3181 = vmatpush2.bf16.msra.mxu0 0
      %3182 = vmatprep.subr.bf16.mxu0 0
      %3183 = vmatpush2.bf16.msra.mxu0 0
      %3184 = vmatprep.mubr.bf16.mxu0 0
      %3185 = vmatmul.mubr.bf16.gmra.mxu0 %v2593
      %v3186 = vpop.f32.mrf.mxu0
      %v3187 = vadd.f32 0.0, %v3186
      %v3188 = vpop.f32.mrf.mxu0
      %v3189 = vpop.f32.mrf.mxu0
      %v3190 = vadd.f32 0.0, %v3189
      %v3191 = vpop.f32.mrf.mxu0
      %3192 = vmatprep.mubr.bf16.mxu0 0
      %3193 = vmatmul.mubr.bf16.gmra.mxu0 %v2596
      %v3194 = vpop.f32.mrf.mxu0
      %v3195 = vadd.f32 0.0, %v3194
      %v3196 = vpop.f32.mrf.mxu0
      %v3197 = vpop.f32.mrf.mxu0
      %v3198 = vadd.f32 0.0, %v3197
      %v3199 = vpop.f32.mrf.mxu0
      %3200 = vmatprep.mubr.bf16.mxu0 0
      %3201 = vmatmul.mubr.bf16.gmra.mxu0 %v2599
      %v3202 = vpop.f32.mrf.mxu0
      %v3203 = vadd.f32 0.0, %v3202
      %v3204 = vpop.f32.mrf.mxu0
      %v3205 = vpop.f32.mrf.mxu0
      %v3206 = vadd.f32 0.0, %v3205
      %v3207 = vpop.f32.mrf.mxu0
      %3208 = vmatprep.mubr.bf16.mxu0 0
      %3209 = vmatmul.mubr.bf16.gmra.mxu0 %v3147
      %v3210 = vpop.f32.mrf.mxu0
      %v3211 = vadd.f32 0.0, %v3210
      %v3212 = vpop.f32.mrf.mxu0
      %v3213 = vpop.f32.mrf.mxu0
      %v3214 = vadd.f32 0.0, %v3213
      %v3215 = vpop.f32.mrf.mxu0
      %3216 = vdwg.mxu0
      %v3217 = vadd.f32 %v3131, %v3187
      %v3218 = vadd.f32 %v3132, %v3190
      %v3219 = vadd.f32 %v3133, %v3195
      %v3220 = vadd.f32 %v3134, %v3198
      %v3221 = vadd.f32 %v3135, %v3203
      %v3222 = vadd.f32 %v3136, %v3206
      %v3223 = vadd.f32 %v3137, %v3211
      %v3224 = vadd.f32 %v3138, %v3214
      %vm3225 = vcmp.gt.f32.partialorder %v3217, 0.0
      %vm3226 = vcmp.gt.f32.partialorder %v3218, 0.0
      %vm3227 = vcmp.gt.f32.partialorder %v3219, 0.0
      %vm3228 = vcmp.gt.f32.partialorder %v3220, 0.0
      %vm3229 = vcmp.gt.f32.partialorder %v3221, 0.0
      %vm3230 = vcmp.gt.f32.partialorder %v3222, 0.0
      %vm3231 = vcmp.gt.f32.partialorder %v3223, 0.0
      %vm3232 = vcmp.gt.f32.partialorder %v3224, 0.0
      %v3233 = vmul.f32 %v3217, 0.01
      %v3234 = vmul.f32 %v3218, 0.01
      %v3235 = vmul.f32 %v3219, 0.01
      %v3236 = vmul.f32 %v3220, 0.01
      %v3237 = vmul.f32 %v3221, 0.01
      %v3238 = vmul.f32 %v3222, 0.01
      %v3239 = vmul.f32 %v3223, 0.01
      %v3240 = vmul.f32 %v3224, 0.01
      %v3241 = vsel %vm3225, %v3217, %v3233
      %v3242 = vsel %vm3226, %v3218, %v3234
      %v3243 = vsel %vm3227, %v3219, %v3235
      %v3244 = vsel %vm3228, %v3220, %v3236
      %v3245 = vsel %vm3229, %v3221, %v3237
      %v3246 = vsel %vm3230, %v3222, %v3238
      %v3247 = vsel %vm3231, %v3223, %v3239
      %v3248 = vsel %vm3232, %v3224, %v3240
      %3249 = vst.msk [vmem:[%s380] sm:$0xff] %vm528, %v3241
      %3250 = vst.msk [vmem:[%s380 + $0x8] sm:$0xff] %vm528, %v3242
      %3251 = vst.msk [vmem:[%s380 + $0x10] sm:$0xff] %vm528, %v3243
      %3252 = vst.msk [vmem:[%s380 + $0x18] sm:$0xff] %vm528, %v3244
      %3253 = vst.msk [vmem:[%s380 + $0x20] sm:$0xff] %vm528, %v3245
      %3254 = vst.msk [vmem:[%s380 + $0x28] sm:$0xff] %vm528, %v3246
      %3255 = vst.msk [vmem:[%s380 + $0x30] sm:$0xff] %vm528, %v3247
      %3256 = vst.msk [vmem:[%s380 + $0x38] sm:$0xff] %vm528, %v3248
      %p3257 = scmp.eq.s32.totalorder %s23, 0
      // Predicated region
      $region37: #{residual_inner_forward.2} parent=35 // pred_check
        %p3258 = pneg %p3257
      $region38: #{residual_inner_forward.2} parent=35 // pred_check_branch
        %3260 = sbr.rel (%p3258) target = $region40
      $region39: #{residual_inner_forward.2} parent=35 // pred_region
        %vm3261 = vcmask 57344
        %3262 = vst.msk [vmem:[%s383] sm:$0x1] %vm3261, 0.0
        %3263 = vst.msk [vmem:[%s386] sm:$0x1] %vm3261, 0.0
      $region40: #{residual_inner_forward.2} parent=35 // pred_fallthru
        _
      %v3264 = vld [vmem:[%s383] sm:$0x1]
      %v3265 = vsel %vm528, %v3241, 0.0
      %v3266 = vsel %vm528, %v3242, 0.0
      %v3267 = vadd.f32 %v3265, %v3266
      %v3268 = vsel %vm528, %v3243, 0.0
      %v3269 = vadd.f32 %v3267, %v3268
      %v3270 = vsel %vm528, %v3244, 0.0
      %v3271 = vadd.f32 %v3269, %v3270
      %v3272 = vsel %vm528, %v3245, 0.0
      %v3273 = vadd.f32 %v3271, %v3272
      %v3274 = vsel %vm528, %v3246, 0.0
      %v3275 = vadd.f32 %v3273, %v3274
      %v3276 = vsel %vm528, %v3247, 0.0
      %v3277 = vadd.f32 %v3275, %v3276
      %v3278 = vsel %vm528, %v3248, 0.0
      %v3279 = vadd.f32 %v3277, %v3278
      %v3280 = vrot.slane %v3279, 4
      %v3281 = vadd.f32 %v3279, %v3280
      %v3282 = vrot.slane %v3281, 2
      %v3283 = vadd.f32 %v3281, %v3282
      %v3284 = vrot.slane %v3283, 1
      %v3285 = vadd.f32 %v3283, %v3284
      %v3286 = vadd.f32 %v3264, %v3285
      %vm3287 = vcmask 57344
      %3288 = vst.msk [vmem:[%s383] sm:$0x1] %vm3287, %v3286
      %v3289 = vld [vmem:[%s386] sm:$0x1]
      %v3290 = vmul.f32 %v3241, %v3241
      %v3291 = vmul.f32 %v3242, %v3242
      %v3292 = vmul.f32 %v3243, %v3243
      %v3293 = vmul.f32 %v3244, %v3244
      %v3294 = vmul.f32 %v3245, %v3245
      %v3295 = vmul.f32 %v3246, %v3246
      %v3296 = vmul.f32 %v3247, %v3247
      %v3297 = vmul.f32 %v3248, %v3248
      %v3298 = vsel %vm528, %v3290, 0.0
      %v3299 = vsel %vm528, %v3291, 0.0
      %v3300 = vadd.f32 %v3298, %v3299
      %v3301 = vsel %vm528, %v3292, 0.0
      %v3302 = vadd.f32 %v3300, %v3301
      %v3303 = vsel %vm528, %v3293, 0.0
      %v3304 = vadd.f32 %v3302, %v3303
      %v3305 = vsel %vm528, %v3294, 0.0
      %v3306 = vadd.f32 %v3304, %v3305
      %v3307 = vsel %vm528, %v3295, 0.0
      %v3308 = vadd.f32 %v3306, %v3307
      %v3309 = vsel %vm528, %v3296, 0.0
      %v3310 = vadd.f32 %v3308, %v3309
      %v3311 = vsel %vm528, %v3297, 0.0
      %v3312 = vadd.f32 %v3310, %v3311
      %v3313 = vrot.slane %v3312, 4
      %v3314 = vadd.f32 %v3312, %v3313
      %v3315 = vrot.slane %v3314, 2
      %v3316 = vadd.f32 %v3314, %v3315
      %v3317 = vrot.slane %v3316, 1
      %v3318 = vadd.f32 %v3316, %v3317
      %v3319 = vadd.f32 %v3289, %v3318
      %3320 = vst.msk [vmem:[%s386] sm:$0x1] %vm3287, %v3319
      %p3321 = scmp.lt.s32.totalorder %s22, 1
      %s3322 = scalar_select %p3321, %s22, 1
      %p3323 = scmp.lt.s32.totalorder %s23, 7
      %s3324 = scalar_select %p3323, %s23, 7
      %s3325 = smul.addr %s3324, 8
      %s3326 = smul.addr %s3322, 64
      %s3327 = sadd.s32 %s3325, %s3326
      %s3328 = smul.addr %s3327, 8
      %s3329 = scalar_lea.vmem %s4, %s3328
      %p3330 = scmp.lt.s32.totalorder %s22, 1
      %s3331 = scalar_select %p3330, %s22, 1
      %s3332 = scalar_lea.vmem %s5, %s3331
      %p3333 = scmp.lt.s32.totalorder %s22, 1
      %s3334 = scalar_select %p3333, %s22, 1
      %s3335 = scalar_lea.vmem %s6, %s3334
      // Predicated region
      $region41: #{residual_inner_forward.2} parent=35 // pred_check
        %p3336 = pneg %p159
      $region42: #{residual_inner_forward.2} parent=35 // pred_check_branch
        %3338 = sbr.rel (%p3336) target = $region44
      $region43: #{residual_inner_forward.2} parent=35 // pred_region
        _
      $region44: #{residual_inner_forward.2} parent=35 // pred_fallthru
        _
      // Predicated region
      $region45: #{residual_inner_forward.2} parent=35 // pred_check
        %p3339 = pneg %p185
      $region46: #{residual_inner_forward.2} parent=35 // pred_check_branch
        %3341 = sbr.rel (%p3339) target = $region48
      $region47: #{residual_inner_forward.2} parent=35 // pred_region
        _
      $region48: #{residual_inner_forward.2} parent=35 // pred_fallthru
        _
      // Predicated region
      $region49: #{residual_inner_forward.2} parent=35 // pred_check
        %p3342 = pneg %p211
      $region50: #{residual_inner_forward.2} parent=35 // pred_check_branch
        %3344 = sbr.rel (%p3342) target = $region52
      $region51: #{residual_inner_forward.2} parent=35 // pred_region
        _
      $region52: #{residual_inner_forward.2} parent=35 // pred_fallthru
        _
    $region36: #{residual_inner_forward.2} parent=5 // pred_fallthru
      _
    %p3345 = scmp.le.s32.totalorder 2, %s13
    // Predicated region
    $region53: #{residual_inner_forward.2} parent=5 // pred_check
      %p3346 = pneg %p3345
    $region54: #{residual_inner_forward.2} parent=5 // pred_check_branch
      %3348 = sbr.rel (%p3346) target = $region56
    $region55: #{residual_inner_forward.2} parent=5 // pred_region
      %s3349 = ssub.s32 %s13, 2
      // Predicated region
      $region57: #{residual_inner_forward.2} parent=55 // pred_check
        %p3350 = pneg %p165
      $region58: #{residual_inner_forward.2} parent=55 // pred_check_branch
        %3352 = sbr.rel (%p3350) target = $region60
      $region59: #{residual_inner_forward.2} parent=55 // pred_region
        %p3353 = scmp.lt.s32.totalorder %s24, 1
        %s3354 = scalar_select %p3353, %s24, 1
        %p3355 = scmp.lt.s32.totalorder %s25, 7
        %s3356 = scalar_select %p3355, %s25, 7
        %s3357 = smul.addr %s3356, 8
        %s3358 = smul.addr %s3354, 64
        %s3359 = sadd.s32 %s3357, %s3358
        %s3360 = smul.addr %s3359, 8
        %s3361 = scalar_lea.vmem %s4, %s3360
      $region60: #{residual_inner_forward.2} parent=55 // pred_fallthru
        _
      // Predicated region
      $region61: #{residual_inner_forward.2} parent=55 // pred_check
        %p3362 = pneg %p191
      $region62: #{residual_inner_forward.2} parent=55 // pred_check_branch
        %3364 = sbr.rel (%p3362) target = $region64
      $region63: #{residual_inner_forward.2} parent=55 // pred_region
        %p3365 = scmp.lt.s32.totalorder %s24, 1
        %s3366 = scalar_select %p3365, %s24, 1
        %s3367 = scalar_lea.vmem %s5, %s3366
      $region64: #{residual_inner_forward.2} parent=55 // pred_fallthru
        _
      // Predicated region
      $region65: #{residual_inner_forward.2} parent=55 // pred_check
        %p3368 = pneg %p217
      $region66: #{residual_inner_forward.2} parent=55 // pred_check_branch
        %3370 = sbr.rel (%p3368) target = $region68
      $region67: #{residual_inner_forward.2} parent=55 // pred_region
        %p3371 = scmp.lt.s32.totalorder %s24, 1
        %s3372 = scalar_select %p3371, %s24, 1
        %s3373 = scalar_lea.vmem %s6, %s3372
      $region68: #{residual_inner_forward.2} parent=55 // pred_fallthru
        _
    $region56: #{residual_inner_forward.2} parent=5 // pred_fallthru
      _
  $region6: #{residual_inner_forward.2} parent=0 // loop_footer
    %s17 = sadd.s32 1, %s13
  $region7: #{residual_inner_forward.2} parent=0 // loop_footer_branch
    %12 = sbr.rel target = $region3
  $region8: #{residual_inner_forward.2} parent=0 // loop_exit
    _

</llo_original>
